<compile_context>
chip_gen: v5e
topology: v5e:2x2
jax: 0.10.0
libtpu: 0.0.40
codegen_flags: <defaults>
</compile_context>

<pallas_src>
import functools

import jax
import jax.numpy as jnp
from jax import lax
from jax.experimental import pallas as pl
from jax.experimental.pallas import tpu as pltpu

EPS = 1e-5  # PyTorch InstanceNorm2d default


# --------------------------------------------------------------------------
# Fused kernel: 3x3 conv (both branches via one concatenated weight) +
# per-channel sum / sum-of-squares accumulation + (at the last tile)
# instance-norm finalize + affine + LeakyReLU + branch sum.
# --------------------------------------------------------------------------
def _resblock_kernel(xf_ref, w_ref, g_ref, b_ref, o_ref,
                     y_sc, sum_sc, sq_sc, *,
                     stride, hp, tr, wo, n_tiles, cout, inv_n, eps, lr):
    """One grid step handles `tr` output rows of one image.

    xf_ref : (1, s*s*hp, Cin, Wp)      phase-decomposed padded input (bf16)
    w_ref  : (9, 2*Cout, Cin)          per-tap concatenated weights (bf16)
    g_ref, b_ref : (2*Cout, 1)         affine params (f32)
    o_ref  : (1, Cout, Ho*Wo)          final output (f32), resident across t
    y_sc   : (n_tiles, 2*Cout, tr*wo)  raw conv output (f32 VMEM scratch)
    sum_sc, sq_sc : (2*Cout, 1)        f32 stat accumulators (VMEM scratch)
    """
    t = pl.program_id(1)
    c2 = w_ref.shape[1]

    @pl.when(t == 0)
    def _init():
        sum_sc[...] = jnp.zeros_like(sum_sc)
        sq_sc[...] = jnp.zeros_like(sq_sc)

    # Hoist the 9 tap weights (each (2*Cout, Cin), bf16): loaded once per step,
    # not once per output row.
    w_taps = [w_ref[k] for k in range(9)]

    s_loc = jnp.zeros((c2, 1), jnp.float32)
    q_loc = jnp.zeros((c2, 1), jnp.float32)

    for rr in range(tr):                      # static unroll over rows in tile
        acc = jnp.zeros((c2, wo), jnp.float32)
        for kh in range(3):                   # 9 taps -> 9 MXU matmuls, f32 acc
            for kw in range(3):
                phase = (kh % stride) * stride + (kw % stride)
                ridx = phase * hp + t * tr + rr + kh // stride
                tap = xf_ref[0, ridx, :, pl.ds(kw // stride, wo)]  # (Cin, wo)
                acc = acc + jnp.dot(w_taps[kh * 3 + kw], tap,
                                    preferred_element_type=jnp.float32)
        s_loc = s_loc + jnp.sum(acc, axis=1, keepdims=True)
        q_loc = q_loc + jnp.sum(acc * acc, axis=1, keepdims=True)
        y_sc[t, :, pl.ds(rr * wo, wo)] = acc  # dynamic leading idx, static lanes

    sum_sc[...] += s_loc
    sq_sc[...] += q_loc

    @pl.when(t == n_tiles - 1)
    def _finalize():
        mean = sum_sc[...] * inv_n                    # (2*Cout, 1)
        var = sq_sc[...] * inv_n - mean * mean        # biased variance (f32)
        scale = g_ref[...] * lax.rsqrt(var + eps)
        shift = b_ref[...] - mean * scale
        trwo = tr * wo
        for tt in range(n_tiles):                     # chunked finalize (bounded vregs)
            z = y_sc[tt] * scale + shift              # fused scale/shift
            z = jnp.maximum(z, lr * z)                # LeakyReLU (0 < lr < 1)
            o_ref[0, :, pl.ds(tt * trwo, trwo)] = z[:cout, :] + z[cout:, :]


# --------------------------------------------------------------------------
# Row-tile picker: keep tiles lane-friendly (tr*wo multiple of 128 or full) and
# the static unroll / per-step latency bounded.
# --------------------------------------------------------------------------
def _pick_row_tile(ho, wo, max_lanes=1024, max_rows=16):
    best = None
    for tr in range(1, ho + 1):
        if ho % tr:
            continue
        lanes = tr * wo
        legal = (lanes % 128 == 0) or (tr == ho)
        if legal and lanes <= max_lanes and tr <= max_rows:
            best = tr
    return best if best is not None else ho


# --------------------------------------------------------------------------
# Wrapper
# --------------------------------------------------------------------------
def resblock_forward(x, params, lr=0.2):
    """x: (N, Cin, H, W) float32. Returns NCHW float32 (free reshape, no transpose)."""
    w_res, g_res, b_res = params["w_res"], params["g_res"], params["b_res"]
    w_sc, g_sc, b_sc = params["w_sc"], params["g_sc"], params["b_sc"]

    N, Cin, H, W = x.shape
    Cout = w_res.shape[0]
    C2 = 2 * Cout
    s = 2 if Cin != Cout else 1                 # ResBlock.down logic
    Ho = (H + 2 - 3) // s + 1
    Wo = (W + 2 - 3) // s + 1
    P = Ho * Wo

    # ---- input-sized layout prep in bf16 (fused im2col; no patch buffer) ----
    Hs = -(-(H + 2) // s) * s                   # pad (H+2) up to multiple of s
    Ws = -(-(W + 2) // s) * s
    Hp, Wp = Hs // s, Ws // s

    xb = x.astype(jnp.bfloat16)
    xp = jnp.pad(xb, ((0, 0), (0, 0), (1, Hs - (H + 1)), (1, Ws - (W + 1))))
    # phase-decompose the stride: (N,Cin,Hp,s,Wp,s) -> (N,s,s,Hp,Cin,Wp)
    xf = jnp.transpose(xp.reshape(N, Cin, Hp, s, Wp, s), (0, 3, 5, 2, 1, 4))
    xf = xf.reshape(N, s * s * Hp, Cin, Wp)     # (N, s*s*Hp, Cin, Wp), bf16

    # both branches' weights concatenated along the output-channel axis
    wr = jnp.transpose(w_res, (2, 3, 0, 1)).reshape(9, Cout, Cin)
    wsc = jnp.transpose(w_sc, (2, 3, 0, 1)).reshape(9, Cout, Cin)
    wcat = jnp.concatenate([wr, wsc], axis=1).astype(jnp.bfloat16)  # (9, 2*Cout, Cin)

    gcat = jnp.concatenate([g_res, g_sc]).reshape(C2, 1).astype(jnp.float32)
    bcat = jnp.concatenate([b_res, b_sc]).reshape(C2, 1).astype(jnp.float32)

    TR = _pick_row_tile(Ho, Wo)
    nT = Ho // TR

    kernel = functools.partial(
        _resblock_kernel, stride=s, hp=Hp, tr=TR, wo=Wo, n_tiles=nT,
        cout=Cout, inv_n=1.0 / float(P), eps=EPS, lr=lr)

    # TODO(synk): for very large images the whole padded image and the (2*Cout, P)
    # conv scratch are resident in VMEM per batch element; a halo-tiled input
    # BlockSpec + two-pass norm would bound that.
    out = pl.pallas_call(
        kernel,
        out_shape=jax.ShapeDtypeStruct((N, Cout, P), jnp.float32),
        grid=(N, nT),
        in_specs=[
            pl.BlockSpec((1, s * s * Hp, Cin, Wp), lambda n, t: (n, 0, 0, 0)),
            pl.BlockSpec((9, C2, Cin), lambda n, t: (0, 0, 0)),
            pl.BlockSpec((C2, 1), lambda n, t: (0, 0)),
            pl.BlockSpec((C2, 1), lambda n, t: (0, 0)),
        ],
        out_specs=pl.BlockSpec((1, Cout, P), lambda n, t: (n, 0, 0)),
        scratch_shapes=[
            pltpu.VMEM((nT, C2, TR * Wo), jnp.float32),   # raw conv output
            pltpu.VMEM((C2, 1), jnp.float32),             # per-channel sum
            pltpu.VMEM((C2, 1), jnp.float32),             # per-channel sum^2
        ],
        compiler_params=pltpu.CompilerParams(
            dimension_semantics=("parallel", "arbitrary")),
    )(xf, wcat, gcat, bcat)

    # (N, Cout, P) -> NCHW via a contiguous (free) reshape.
    return out.reshape(N, Cout, Ho, Wo)


# ---- pure-JAX f32 reference (mirrors the PyTorch module) ----
def resblock_reference(x, params, lr=0.2):
    Cin = x.shape[1]
    Cout = params["w_res"].shape[0]
    stride = 2 if Cin != Cout else 1

    def branch(w, g, b):
        y = lax.conv_general_dilated(
            x, w, window_strides=(stride, stride), padding=((1, 1), (1, 1)),
            dimension_numbers=("NCHW", "OIHW", "NCHW"))
        mean = jnp.mean(y, axis=(2, 3), keepdims=True)
        var = jnp.mean((y - mean) ** 2, axis=(2, 3), keepdims=True)
        yn = (y - mean) / jnp.sqrt(var + EPS)
        yn = yn * g.reshape(1, -1, 1, 1) + b.reshape(1, -1, 1, 1)
        return jnp.where(yn >= 0, yn, lr * yn)

    return (branch(params["w_res"], params["g_res"], params["b_res"]) +
            branch(params["w_sc"], params["g_sc"], params["b_sc"]))


def make_params(key, in_channels, out_channels):
    ks = jax.random.split(key, 6)
    return {
        "w_res": 0.1 * jax.random.normal(ks[0], (out_channels, in_channels, 3, 3), jnp.float32),
        "g_res": 1.0 + 0.1 * jax.random.normal(ks[1], (out_channels,), jnp.float32),
        "b_res": 0.1 * jax.random.normal(ks[2], (out_channels,), jnp.float32),
        "w_sc": 0.1 * jax.random.normal(ks[3], (out_channels, in_channels, 3, 3), jnp.float32),
        "g_sc": 1.0 + 0.1 * jax.random.normal(ks[4], (out_channels,), jnp.float32),
        "b_sc": 0.1 * jax.random.normal(ks[5], (out_channels,), jnp.float32),
    }


def _check(out, ref, atol=0.05, rtol=0.05):
    # bf16 matmul inputs vs f32 reference.
    err = float(jnp.max(jnp.abs(out - ref)))
    assert jnp.allclose(out, ref, atol=atol, rtol=rtol), f"max abs err {err}"


if __name__ == "__main__":
    key = jax.random.PRNGKey(0)
    k_x, k_p1, k_p2, k_x3, k_p3 = jax.random.split(key, 5)

    # Case 1: downsampling block (in != out -> stride 2)
    x = jax.random.normal(k_x, (2, 4, 16, 16), jnp.float32)
    params_down = make_params(k_p1, 4, 8)
    out_down = jax.block_until_ready(resblock_forward(x, params_down, lr=0.2))
    ref_down = resblock_reference(x, params_down, lr=0.2)
    assert out_down.shape == (2, 8, 8, 8), out_down.shape
    _check(out_down, ref_down)

    # Case 2: identity-stride block (in == out -> stride 1)
    params_same = make_params(k_p2, 4, 4)
    out_same = jax.block_until_ready(resblock_forward(x, params_same, lr=0.2))
    ref_same = resblock_reference(x, params_same, lr=0.2)
    assert out_same.shape == (2, 4, 16, 16), out_same.shape
    _check(out_same, ref_same)

    # Case 3: larger stride-1 block (exercises multi-tile accumulation + finalize)
    x3 = jax.random.normal(k_x3, (1, 4, 64, 64), jnp.float32)
    params3 = make_params(k_p3, 4, 4)
    out3 = jax.block_until_ready(resblock_forward(x3, params3, lr=0.2))
    ref3 = resblock_reference(x3, params3, lr=0.2)
    assert out3.shape == (1, 4, 64, 64), out3.shape
    _check(out3, ref3)

    print("KERNEL_OK")
</pallas_src>

<mosaic_0001>
module attributes {stable_mosaic.version = 11 : i64} {
  func.func @_resblock_kernel(%arg0: i32, %arg1: i32, %arg2: memref<1x36x4x9xbf16, #tpu.memory_space<vmem>>, %arg3: memref<9x16x4xbf16, #tpu.memory_space<vmem>>, %arg4: memref<16x1xf32, #tpu.memory_space<vmem>>, %arg5: memref<16x1xf32, #tpu.memory_space<vmem>>, %arg6: memref<1x8x64xf32, #tpu.memory_space<vmem>>, %arg7: memref<1x16x64xf32, #tpu.memory_space<vmem>>, %arg8: memref<16x1xf32, #tpu.memory_space<vmem>>, %arg9: memref<16x1xf32, #tpu.memory_space<vmem>>) attributes {dimension_semantics = [#tpu.dimension_semantics<parallel>, #tpu.dimension_semantics<arbitrary>], iteration_bounds = array<i64: 2, 1>, scalar_prefetch = 0 : i64, scratch_operands = 3 : i64, tpu.core_type = #tpu.core_type<tc>, window_params = [{transform_indices = @transform_0, window_bounds = array<i64: 1, 36, 4, 9>}, {pipeline_mode = #tpu.pipeline_mode<synchronous>, transform_indices = @transform_1, window_bounds = array<i64: 9, 16, 4>}, {pipeline_mode = #tpu.pipeline_mode<synchronous>, transform_indices = @transform_2, window_bounds = array<i64: 16, 1>}, {pipeline_mode = #tpu.pipeline_mode<synchronous>, transform_indices = @transform_3, window_bounds = array<i64: 16, 1>}, {transform_indices = @transform_4, window_bounds = array<i64: 1, 8, 64>}]} {
    %c0_i32 = arith.constant 0 : i32
    %0 = arith.cmpi eq, %arg1, %c0_i32 : i32
    %1 = arith.extui %0 : i1 to i32
    %c0_i32_0 = arith.constant 0 : i32
    %2 = arith.cmpi ne, %1, %c0_i32_0 : i32
    scf.if %2 {
      %cst_629 = arith.constant 0.000000e+00 : f32
      %776 = vector.broadcast %cst_629 : f32 to vector<16x1xf32>
      %c0_630 = arith.constant 0 : index
      %c0_631 = arith.constant 0 : index
      %777 = vector.load %arg8[%c0_630, %c0_631] : memref<16x1xf32, #tpu.memory_space<vmem>>, vector<16x1xf32>
      tpu.vector_store %arg8[%c0_630, %c0_631], %776 {strides = array<i32>} : memref<16x1xf32, #tpu.memory_space<vmem>>, vector<16x1xf32>,
      %cst_632 = arith.constant 0.000000e+00 : f32
      %778 = vector.broadcast %cst_632 : f32 to vector<16x1xf32>
      %c0_633 = arith.constant 0 : index
      %c0_634 = arith.constant 0 : index
      %779 = vector.load %arg9[%c0_633, %c0_634] : memref<16x1xf32, #tpu.memory_space<vmem>>, vector<16x1xf32>
      tpu.vector_store %arg9[%c0_633, %c0_634], %778 {strides = array<i32>} : memref<16x1xf32, #tpu.memory_space<vmem>>, vector<16x1xf32>,
    } else {
    }
    %c0 = arith.constant 0 : index
    %c0_1 = arith.constant 0 : index
    %c0_2 = arith.constant 0 : index
    %3 = vector.load %arg3[%c0, %c0_1, %c0_2] : memref<9x16x4xbf16, #tpu.memory_space<vmem>>, vector<1x16x4xbf16>
    %4 = vector.shape_cast %3 : vector<1x16x4xbf16> to vector<16x4xbf16>
    %c1 = arith.constant 1 : index
    %c0_3 = arith.constant 0 : index
    %c0_4 = arith.constant 0 : index
    %5 = vector.load %arg3[%c1, %c0_3, %c0_4] : memref<9x16x4xbf16, #tpu.memory_space<vmem>>, vector<1x16x4xbf16>
    %6 = vector.shape_cast %5 : vector<1x16x4xbf16> to vector<16x4xbf16>
    %c2 = arith.constant 2 : index
    %c0_5 = arith.constant 0 : index
    %c0_6 = arith.constant 0 : index
    %7 = vector.load %arg3[%c2, %c0_5, %c0_6] : memref<9x16x4xbf16, #tpu.memory_space<vmem>>, vector<1x16x4xbf16>
    %8 = vector.shape_cast %7 : vector<1x16x4xbf16> to vector<16x4xbf16>
    %c3 = arith.constant 3 : index
    %c0_7 = arith.constant 0 : index
    %c0_8 = arith.constant 0 : index
    %9 = vector.load %arg3[%c3, %c0_7, %c0_8] : memref<9x16x4xbf16, #tpu.memory_space<vmem>>, vector<1x16x4xbf16>
    %10 = vector.shape_cast %9 : vector<1x16x4xbf16> to vector<16x4xbf16>
    %c4 = arith.constant 4 : index
    %c0_9 = arith.constant 0 : index
    %c0_10 = arith.constant 0 : index
    %11 = vector.load %arg3[%c4, %c0_9, %c0_10] : memref<9x16x4xbf16, #tpu.memory_space<vmem>>, vector<1x16x4xbf16>
    %12 = vector.shape_cast %11 : vector<1x16x4xbf16> to vector<16x4xbf16>
    %c5 = arith.constant 5 : index
    %c0_11 = arith.constant 0 : index
    %c0_12 = arith.constant 0 : index
    %13 = vector.load %arg3[%c5, %c0_11, %c0_12] : memref<9x16x4xbf16, #tpu.memory_space<vmem>>, vector<1x16x4xbf16>
    %14 = vector.shape_cast %13 : vector<1x16x4xbf16> to vector<16x4xbf16>
    %c6 = arith.constant 6 : index
    %c0_13 = arith.constant 0 : index
    %c0_14 = arith.constant 0 : index
    %15 = vector.load %arg3[%c6, %c0_13, %c0_14] : memref<9x16x4xbf16, #tpu.memory_space<vmem>>, vector<1x16x4xbf16>
    %16 = vector.shape_cast %15 : vector<1x16x4xbf16> to vector<16x4xbf16>
    %c7 = arith.constant 7 : index
    %c0_15 = arith.constant 0 : index
    %c0_16 = arith.constant 0 : index
    %17 = vector.load %arg3[%c7, %c0_15, %c0_16] : memref<9x16x4xbf16, #tpu.memory_space<vmem>>, vector<1x16x4xbf16>
    %18 = vector.shape_cast %17 : vector<1x16x4xbf16> to vector<16x4xbf16>
    %c8 = arith.constant 8 : index
    %c0_17 = arith.constant 0 : index
    %c0_18 = arith.constant 0 : index
    %19 = vector.load %arg3[%c8, %c0_17, %c0_18] : memref<9x16x4xbf16, #tpu.memory_space<vmem>>, vector<1x16x4xbf16>
    %20 = vector.shape_cast %19 : vector<1x16x4xbf16> to vector<16x4xbf16>
    %cst = arith.constant 0.000000e+00 : f32
    %21 = vector.broadcast %cst : f32 to vector<16x1xf32>
    %cst_19 = arith.constant 0.000000e+00 : f32
    %22 = vector.broadcast %cst_19 : f32 to vector<16x1xf32>
    %cst_20 = arith.constant 0.000000e+00 : f32
    %23 = vector.broadcast %cst_20 : f32 to vector<16x8xf32>
    %c8_i32 = arith.constant 8 : i32
    %24 = arith.muli %arg1, %c8_i32 : i32
    %c0_i32_21 = arith.constant 0 : i32
    %25 = arith.addi %c0_i32_21, %24 : i32
    %c0_i32_22 = arith.constant 0 : i32
    %26 = arith.addi %25, %c0_i32_22 : i32
    %c0_i32_23 = arith.constant 0 : i32
    %27 = arith.addi %26, %c0_i32_23 : i32
    %c0_24 = arith.constant 0 : index
    %28 = arith.index_cast %27 : i32 to index
    %c0_25 = arith.constant 0 : index
    %c0_26 = arith.constant 0 : index
    %29 = vector.load %arg2[%c0_24, %28, %c0_25, %c0_26] : memref<1x36x4x9xbf16, #tpu.memory_space<vmem>>, vector<1x1x4x8xbf16>
    %30 = vector.shape_cast %29 : vector<1x1x4x8xbf16> to vector<4x8xbf16>
    %cst_27 = arith.constant dense<0.000000e+00> : vector<16x8xf32>
    %31 = tpu.matmul %4, %30, %cst_27 {dimension_numbers = #tpu.dot_dimension_numbers<[1], [0], [0], [1], [0, 0, 1, 1], [], []>} : vector<16x4xbf16>, vector<4x8xbf16>, vector<16x8xf32> -> vector<16x8xf32>
    %32 = arith.addf %23, %31 : vector<16x8xf32>
    %c8_i32_28 = arith.constant 8 : i32
    %33 = arith.muli %arg1, %c8_i32_28 : i32
    %c9_i32 = arith.constant 9 : i32
    %34 = arith.addi %c9_i32, %33 : i32
    %c0_i32_29 = arith.constant 0 : i32
    %35 = arith.addi %34, %c0_i32_29 : i32
    %c0_i32_30 = arith.constant 0 : i32
    %36 = arith.addi %35, %c0_i32_30 : i32
    %c0_31 = arith.constant 0 : index
    %37 = arith.index_cast %36 : i32 to index
    %c0_32 = arith.constant 0 : index
    %c0_33 = arith.constant 0 : index
    %38 = vector.load %arg2[%c0_31, %37, %c0_32, %c0_33] : memref<1x36x4x9xbf16, #tpu.memory_space<vmem>>, vector<1x1x4x8xbf16>
    %39 = vector.shape_cast %38 : vector<1x1x4x8xbf16> to vector<4x8xbf16>
    %cst_34 = arith.constant dense<0.000000e+00> : vector<16x8xf32>
    %40 = tpu.matmul %6, %39, %cst_34 {dimension_numbers = #tpu.dot_dimension_numbers<[1], [0], [0], [1], [0, 0, 1, 1], [], []>} : vector<16x4xbf16>, vector<4x8xbf16>, vector<16x8xf32> -> vector<16x8xf32>
    %41 = arith.addf %32, %40 : vector<16x8xf32>
    %c8_i32_35 = arith.constant 8 : i32
    %42 = arith.muli %arg1, %c8_i32_35 : i32
    %c0_i32_36 = arith.constant 0 : i32
    %43 = arith.addi %c0_i32_36, %42 : i32
    %c0_i32_37 = arith.constant 0 : i32
    %44 = arith.addi %43, %c0_i32_37 : i32
    %c0_i32_38 = arith.constant 0 : i32
    %45 = arith.addi %44, %c0_i32_38 : i32
    %c0_39 = arith.constant 0 : index
    %46 = arith.index_cast %45 : i32 to index
    %c0_40 = arith.constant 0 : index
    %c1_41 = arith.constant 1 : index
    %47 = vector.load %arg2[%c0_39, %46, %c0_40, %c1_41] : memref<1x36x4x9xbf16, #tpu.memory_space<vmem>>, vector<1x1x4x8xbf16>
    %48 = vector.shape_cast %47 : vector<1x1x4x8xbf16> to vector<4x8xbf16>
    %cst_42 = arith.constant dense<0.000000e+00> : vector<16x8xf32>
    %49 = tpu.matmul %8, %48, %cst_42 {dimension_numbers = #tpu.dot_dimension_numbers<[1], [0], [0], [1], [0, 0, 1, 1], [], []>} : vector<16x4xbf16>, vector<4x8xbf16>, vector<16x8xf32> -> vector<16x8xf32>
    %50 = arith.addf %41, %49 : vector<16x8xf32>
    %c8_i32_43 = arith.constant 8 : i32
    %51 = arith.muli %arg1, %c8_i32_43 : i32
    %c18_i32 = arith.constant 18 : i32
    %52 = arith.addi %c18_i32, %51 : i32
    %c0_i32_44 = arith.constant 0 : i32
    %53 = arith.addi %52, %c0_i32_44 : i32
    %c0_i32_45 = arith.constant 0 : i32
    %54 = arith.addi %53, %c0_i32_45 : i32
    %c0_46 = arith.constant 0 : index
    %55 = arith.index_cast %54 : i32 to index
    %c0_47 = arith.constant 0 : index
    %c0_48 = arith.constant 0 : index
    %56 = vector.load %arg2[%c0_46, %55, %c0_47, %c0_48] : memref<1x36x4x9xbf16, #tpu.memory_space<vmem>>, vector<1x1x4x8xbf16>
    %57 = vector.shape_cast %56 : vector<1x1x4x8xbf16> to vector<4x8xbf16>
    %cst_49 = arith.constant dense<0.000000e+00> : vector<16x8xf32>
    %58 = tpu.matmul %10, %57, %cst_49 {dimension_numbers = #tpu.dot_dimension_numbers<[1], [0], [0], [1], [0, 0, 1, 1], [], []>} : vector<16x4xbf16>, vector<4x8xbf16>, vector<16x8xf32> -> vector<16x8xf32>
    %59 = arith.addf %50, %58 : vector<16x8xf32>
    %c8_i32_50 = arith.constant 8 : i32
    %60 = arith.muli %arg1, %c8_i32_50 : i32
    %c27_i32 = arith.constant 27 : i32
    %61 = arith.addi %c27_i32, %60 : i32
    %c0_i32_51 = arith.constant 0 : i32
    %62 = arith.addi %61, %c0_i32_51 : i32
    %c0_i32_52 = arith.constant 0 : i32
    %63 = arith.addi %62, %c0_i32_52 : i32
    %c0_53 = arith.constant 0 : index
    %64 = arith.index_cast %63 : i32 to index
    %c0_54 = arith.constant 0 : index
    %c0_55 = arith.constant 0 : index
    %65 = vector.load %arg2[%c0_53, %64, %c0_54, %c0_55] : memref<1x36x4x9xbf16, #tpu.memory_space<vmem>>, vector<1x1x4x8xbf16>
    %66 = vector.shape_cast %65 : vector<1x1x4x8xbf16> to vector<4x8xbf16>
    %cst_56 = arith.constant dense<0.000000e+00> : vector<16x8xf32>
    %67 = tpu.matmul %12, %66, %cst_56 {dimension_numbers = #tpu.dot_dimension_numbers<[1], [0], [0], [1], [0, 0, 1, 1], [], []>} : vector<16x4xbf16>, vector<4x8xbf16>, vector<16x8xf32> -> vector<16x8xf32>
    %68 = arith.addf %59, %67 : vector<16x8xf32>
    %c8_i32_57 = arith.constant 8 : i32
    %69 = arith.muli %arg1, %c8_i32_57 : i32
    %c18_i32_58 = arith.constant 18 : i32
    %70 = arith.addi %c18_i32_58, %69 : i32
    %c0_i32_59 = arith.constant 0 : i32
    %71 = arith.addi %70, %c0_i32_59 : i32
    %c0_i32_60 = arith.constant 0 : i32
    %72 = arith.addi %71, %c0_i32_60 : i32
    %c0_61 = arith.constant 0 : index
    %73 = arith.index_cast %72 : i32 to index
    %c0_62 = arith.constant 0 : index
    %c1_63 = arith.constant 1 : index
    %74 = vector.load %arg2[%c0_61, %73, %c0_62, %c1_63] : memref<1x36x4x9xbf16, #tpu.memory_space<vmem>>, vector<1x1x4x8xbf16>
    %75 = vector.shape_cast %74 : vector<1x1x4x8xbf16> to vector<4x8xbf16>
    %cst_64 = arith.constant dense<0.000000e+00> : vector<16x8xf32>
    %76 = tpu.matmul %14, %75, %cst_64 {dimension_numbers = #tpu.dot_dimension_numbers<[1], [0], [0], [1], [0, 0, 1, 1], [], []>} : vector<16x4xbf16>, vector<4x8xbf16>, vector<16x8xf32> -> vector<16x8xf32>
    %77 = arith.addf %68, %76 : vector<16x8xf32>
    %c8_i32_65 = arith.constant 8 : i32
    %78 = arith.muli %arg1, %c8_i32_65 : i32
    %c0_i32_66 = arith.constant 0 : i32
    %79 = arith.addi %c0_i32_66, %78 : i32
    %c0_i32_67 = arith.constant 0 : i32
    %80 = arith.addi %79, %c0_i32_67 : i32
    %c1_i32 = arith.constant 1 : i32
    %81 = arith.addi %80, %c1_i32 : i32
    %c0_68 = arith.constant 0 : index
    %82 = arith.index_cast %81 : i32 to index
    %c0_69 = arith.constant 0 : index
    %c0_70 = arith.constant 0 : index
    %83 = vector.load %arg2[%c0_68, %82, %c0_69, %c0_70] : memref<1x36x4x9xbf16, #tpu.memory_space<vmem>>, vector<1x1x4x8xbf16>
    %84 = vector.shape_cast %83 : vector<1x1x4x8xbf16> to vector<4x8xbf16>
    %cst_71 = arith.constant dense<0.000000e+00> : vector<16x8xf32>
    %85 = tpu.matmul %16, %84, %cst_71 {dimension_numbers = #tpu.dot_dimension_numbers<[1], [0], [0], [1], [0, 0, 1, 1], [], []>} : vector<16x4xbf16>, vector<4x8xbf16>, vector<16x8xf32> -> vector<16x8xf32>
    %86 = arith.addf %77, %85 : vector<16x8xf32>
    %c8_i32_72 = arith.constant 8 : i32
    %87 = arith.muli %arg1, %c8_i32_72 : i32
    %c9_i32_73 = arith.constant 9 : i32
    %88 = arith.addi %c9_i32_73, %87 : i32
    %c0_i32_74 = arith.constant 0 : i32
    %89 = arith.addi %88, %c0_i32_74 : i32
    %c1_i32_75 = arith.constant 1 : i32
    %90 = arith.addi %89, %c1_i32_75 : i32
    %c0_76 = arith.constant 0 : index
    %91 = arith.index_cast %90 : i32 to index
    %c0_77 = arith.constant 0 : index
    %c0_78 = arith.constant 0 : index
    %92 = vector.load %arg2[%c0_76, %91, %c0_77, %c0_78] : memref<1x36x4x9xbf16, #tpu.memory_space<vmem>>, vector<1x1x4x8xbf16>
    %93 = vector.shape_cast %92 : vector<1x1x4x8xbf16> to vector<4x8xbf16>
    %cst_79 = arith.constant dense<0.000000e+00> : vector<16x8xf32>
    %94 = tpu.matmul %18, %93, %cst_79 {dimension_numbers = #tpu.dot_dimension_numbers<[1], [0], [0], [1], [0, 0, 1, 1], [], []>} : vector<16x4xbf16>, vector<4x8xbf16>, vector<16x8xf32> -> vector<16x8xf32>
    %95 = arith.addf %86, %94 : vector<16x8xf32>
    %c8_i32_80 = arith.constant 8 : i32
    %96 = arith.muli %arg1, %c8_i32_80 : i32
    %c0_i32_81 = arith.constant 0 : i32
    %97 = arith.addi %c0_i32_81, %96 : i32
    %c0_i32_82 = arith.constant 0 : i32
    %98 = arith.addi %97, %c0_i32_82 : i32
    %c1_i32_83 = arith.constant 1 : i32
    %99 = arith.addi %98, %c1_i32_83 : i32
    %c0_84 = arith.constant 0 : index
    %100 = arith.index_cast %99 : i32 to index
    %c0_85 = arith.constant 0 : index
    %c1_86 = arith.constant 1 : index
    %101 = vector.load %arg2[%c0_84, %100, %c0_85, %c1_86] : memref<1x36x4x9xbf16, #tpu.memory_space<vmem>>, vector<1x1x4x8xbf16>
    %102 = vector.shape_cast %101 : vector<1x1x4x8xbf16> to vector<4x8xbf16>
    %cst_87 = arith.constant dense<0.000000e+00> : vector<16x8xf32>
    %103 = tpu.matmul %20, %102, %cst_87 {dimension_numbers = #tpu.dot_dimension_numbers<[1], [0], [0], [1], [0, 0, 1, 1], [], []>} : vector<16x4xbf16>, vector<4x8xbf16>, vector<16x8xf32> -> vector<16x8xf32>
    %104 = arith.addf %95, %103 : vector<16x8xf32>
    %cst_88 = arith.constant dense<0.000000e+00> : vector<16xf32>
    %105 = vector.multi_reduction <add>, %104, %cst_88 [1] : vector<16x8xf32> to vector<16xf32>
    %106 = vector.shape_cast %105 : vector<16xf32> to vector<16x1xf32>
    %107 = arith.addf %21, %106 : vector<16x1xf32>
    %108 = arith.mulf %104, %104 : vector<16x8xf32>
    %cst_89 = arith.constant dense<0.000000e+00> : vector<16xf32>
    %109 = vector.multi_reduction <add>, %108, %cst_89 [1] : vector<16x8xf32> to vector<16xf32>
    %110 = vector.shape_cast %109 : vector<16xf32> to vector<16x1xf32>
    %111 = arith.addf %22, %110 : vector<16x1xf32>
    %112 = arith.index_cast %arg1 : i32 to index
    %c0_90 = arith.constant 0 : index
    %c0_91 = arith.constant 0 : index
    %113 = vector.load %arg7[%112, %c0_90, %c0_91] : memref<1x16x64xf32, #tpu.memory_space<vmem>>, vector<1x16x8xf32>
    %114 = vector.shape_cast %113 : vector<1x16x8xf32> to vector<16x8xf32>
    %115 = vector.shape_cast %104 : vector<16x8xf32> to vector<1x16x8xf32>
    tpu.vector_store %arg7[%112, %c0_90, %c0_91], %115 {strides = array<i32>} : memref<1x16x64xf32, #tpu.memory_space<vmem>>, vector<1x16x8xf32>,
    %cst_92 = arith.constant 0.000000e+00 : f32
    %116 = vector.broadcast %cst_92 : f32 to vector<16x8xf32>
    %c8_i32_93 = arith.constant 8 : i32
    %117 = arith.muli %arg1, %c8_i32_93 : i32
    %c0_i32_94 = arith.constant 0 : i32
    %118 = arith.addi %c0_i32_94, %117 : i32
    %c1_i32_95 = arith.constant 1 : i32
    %119 = arith.addi %118, %c1_i32_95 : i32
    %c0_i32_96 = arith.constant 0 : i32
    %120 = arith.addi %119, %c0_i32_96 : i32
    %c0_97 = arith.constant 0 : index
    %121 = arith.index_cast %120 : i32 to index
    %c0_98 = arith.constant 0 : index
    %c0_99 = arith.constant 0 : index
    %122 = vector.load %arg2[%c0_97, %121, %c0_98, %c0_99] : memref<1x36x4x9xbf16, #tpu.memory_space<vmem>>, vector<1x1x4x8xbf16>
    %123 = vector.shape_cast %122 : vector<1x1x4x8xbf16> to vector<4x8xbf16>
    %cst_100 = arith.constant dense<0.000000e+00> : vector<16x8xf32>
    %124 = tpu.matmul %4, %123, %cst_100 {dimension_numbers = #tpu.dot_dimension_numbers<[1], [0], [0], [1], [0, 0, 1, 1], [], []>} : vector<16x4xbf16>, vector<4x8xbf16>, vector<16x8xf32> -> vector<16x8xf32>
    %125 = arith.addf %116, %124 : vector<16x8xf32>
    %c8_i32_101 = arith.constant 8 : i32
    %126 = arith.muli %arg1, %c8_i32_101 : i32
    %c9_i32_102 = arith.constant 9 : i32
    %127 = arith.addi %c9_i32_102, %126 : i32
    %c1_i32_103 = arith.constant 1 : i32
    %128 = arith.addi %127, %c1_i32_103 : i32
    %c0_i32_104 = arith.constant 0 : i32
    %129 = arith.addi %128, %c0_i32_104 : i32
    %c0_105 = arith.constant 0 : index
    %130 = arith.index_cast %129 : i32 to index
    %c0_106 = arith.constant 0 : index
    %c0_107 = arith.constant 0 : index
    %131 = vector.load %arg2[%c0_105, %130, %c0_106, %c0_107] : memref<1x36x4x9xbf16, #tpu.memory_space<vmem>>, vector<1x1x4x8xbf16>
    %132 = vector.shape_cast %131 : vector<1x1x4x8xbf16> to vector<4x8xbf16>
    %cst_108 = arith.constant dense<0.000000e+00> : vector<16x8xf32>
    %133 = tpu.matmul %6, %132, %cst_108 {dimension_numbers = #tpu.dot_dimension_numbers<[1], [0], [0], [1], [0, 0, 1, 1], [], []>} : vector<16x4xbf16>, vector<4x8xbf16>, vector<16x8xf32> -> vector<16x8xf32>
    %134 = arith.addf %125, %133 : vector<16x8xf32>
    %c8_i32_109 = arith.constant 8 : i32
    %135 = arith.muli %arg1, %c8_i32_109 : i32
    %c0_i32_110 = arith.constant 0 : i32
    %136 = arith.addi %c0_i32_110, %135 : i32
    %c1_i32_111 = arith.constant 1 : i32
    %137 = arith.addi %136, %c1_i32_111 : i32
    %c0_i32_112 = arith.constant 0 : i32
    %138 = arith.addi %137, %c0_i32_112 : i32
    %c0_113 = arith.constant 0 : index
    %139 = arith.index_cast %138 : i32 to index
    %c0_114 = arith.constant 0 : index
    %c1_115 = arith.constant 1 : index
    %140 = vector.load %arg2[%c0_113, %139, %c0_114, %c1_115] : memref<1x36x4x9xbf16, #tpu.memory_space<vmem>>, vector<1x1x4x8xbf16>
    %141 = vector.shape_cast %140 : vector<1x1x4x8xbf16> to vector<4x8xbf16>
    %cst_116 = arith.constant dense<0.000000e+00> : vector<16x8xf32>
    %142 = tpu.matmul %8, %141, %cst_116 {dimension_numbers = #tpu.dot_dimension_numbers<[1], [0], [0], [1], [0, 0, 1, 1], [], []>} : vector<16x4xbf16>, vector<4x8xbf16>, vector<16x8xf32> -> vector<16x8xf32>
    %143 = arith.addf %134, %142 : vector<16x8xf32>
    %c8_i32_117 = arith.constant 8 : i32
    %144 = arith.muli %arg1, %c8_i32_117 : i32
    %c18_i32_118 = arith.constant 18 : i32
    %145 = arith.addi %c18_i32_118, %144 : i32
    %c1_i32_119 = arith.constant 1 : i32
    %146 = arith.addi %145, %c1_i32_119 : i32
    %c0_i32_120 = arith.constant 0 : i32
    %147 = arith.addi %146, %c0_i32_120 : i32
    %c0_121 = arith.constant 0 : index
    %148 = arith.index_cast %147 : i32 to index
    %c0_122 = arith.constant 0 : index
    %c0_123 = arith.constant 0 : index
    %149 = vector.load %arg2[%c0_121, %148, %c0_122, %c0_123] : memref<1x36x4x9xbf16, #tpu.memory_space<vmem>>, vector<1x1x4x8xbf16>
    %150 = vector.shape_cast %149 : vector<1x1x4x8xbf16> to vector<4x8xbf16>
    %cst_124 = arith.constant dense<0.000000e+00> : vector<16x8xf32>
    %151 = tpu.matmul %10, %150, %cst_124 {dimension_numbers = #tpu.dot_dimension_numbers<[1], [0], [0], [1], [0, 0, 1, 1], [], []>} : vector<16x4xbf16>, vector<4x8xbf16>, vector<16x8xf32> -> vector<16x8xf32>
    %152 = arith.addf %143, %151 : vector<16x8xf32>
    %c8_i32_125 = arith.constant 8 : i32
    %153 = arith.muli %arg1, %c8_i32_125 : i32
    %c27_i32_126 = arith.constant 27 : i32
    %154 = arith.addi %c27_i32_126, %153 : i32
    %c1_i32_127 = arith.constant 1 : i32
    %155 = arith.addi %154, %c1_i32_127 : i32
    %c0_i32_128 = arith.constant 0 : i32
    %156 = arith.addi %155, %c0_i32_128 : i32
    %c0_129 = arith.constant 0 : index
    %157 = arith.index_cast %156 : i32 to index
    %c0_130 = arith.constant 0 : index
    %c0_131 = arith.constant 0 : index
    %158 = vector.load %arg2[%c0_129, %157, %c0_130, %c0_131] : memref<1x36x4x9xbf16, #tpu.memory_space<vmem>>, vector<1x1x4x8xbf16>
    %159 = vector.shape_cast %158 : vector<1x1x4x8xbf16> to vector<4x8xbf16>
    %cst_132 = arith.constant dense<0.000000e+00> : vector<16x8xf32>
    %160 = tpu.matmul %12, %159, %cst_132 {dimension_numbers = #tpu.dot_dimension_numbers<[1], [0], [0], [1], [0, 0, 1, 1], [], []>} : vector<16x4xbf16>, vector<4x8xbf16>, vector<16x8xf32> -> vector<16x8xf32>
    %161 = arith.addf %152, %160 : vector<16x8xf32>
    %c8_i32_133 = arith.constant 8 : i32
    %162 = arith.muli %arg1, %c8_i32_133 : i32
    %c18_i32_134 = arith.constant 18 : i32
    %163 = arith.addi %c18_i32_134, %162 : i32
    %c1_i32_135 = arith.constant 1 : i32
    %164 = arith.addi %163, %c1_i32_135 : i32
    %c0_i32_136 = arith.constant 0 : i32
    %165 = arith.addi %164, %c0_i32_136 : i32
    %c0_137 = arith.constant 0 : index
    %166 = arith.index_cast %165 : i32 to index
    %c0_138 = arith.constant 0 : index
    %c1_139 = arith.constant 1 : index
    %167 = vector.load %arg2[%c0_137, %166, %c0_138, %c1_139] : memref<1x36x4x9xbf16, #tpu.memory_space<vmem>>, vector<1x1x4x8xbf16>
    %168 = vector.shape_cast %167 : vector<1x1x4x8xbf16> to vector<4x8xbf16>
    %cst_140 = arith.constant dense<0.000000e+00> : vector<16x8xf32>
    %169 = tpu.matmul %14, %168, %cst_140 {dimension_numbers = #tpu.dot_dimension_numbers<[1], [0], [0], [1], [0, 0, 1, 1], [], []>} : vector<16x4xbf16>, vector<4x8xbf16>, vector<16x8xf32> -> vector<16x8xf32>
    %170 = arith.addf %161, %169 : vector<16x8xf32>
    %c8_i32_141 = arith.constant 8 : i32
    %171 = arith.muli %arg1, %c8_i32_141 : i32
    %c0_i32_142 = arith.constant 0 : i32
    %172 = arith.addi %c0_i32_142, %171 : i32
    %c1_i32_143 = arith.constant 1 : i32
    %173 = arith.addi %172, %c1_i32_143 : i32
    %c1_i32_144 = arith.constant 1 : i32
    %174 = arith.addi %173, %c1_i32_144 : i32
    %c0_145 = arith.constant 0 : index
    %175 = arith.index_cast %174 : i32 to index
    %c0_146 = arith.constant 0 : index
    %c0_147 = arith.constant 0 : index
    %176 = vector.load %arg2[%c0_145, %175, %c0_146, %c0_147] : memref<1x36x4x9xbf16, #tpu.memory_space<vmem>>, vector<1x1x4x8xbf16>
    %177 = vector.shape_cast %176 : vector<1x1x4x8xbf16> to vector<4x8xbf16>
    %cst_148 = arith.constant dense<0.000000e+00> : vector<16x8xf32>
    %178 = tpu.matmul %16, %177, %cst_148 {dimension_numbers = #tpu.dot_dimension_numbers<[1], [0], [0], [1], [0, 0, 1, 1], [], []>} : vector<16x4xbf16>, vector<4x8xbf16>, vector<16x8xf32> -> vector<16x8xf32>
    %179 = arith.addf %170, %178 : vector<16x8xf32>
    %c8_i32_149 = arith.constant 8 : i32
    %180 = arith.muli %arg1, %c8_i32_149 : i32
    %c9_i32_150 = arith.constant 9 : i32
    %181 = arith.addi %c9_i32_150, %180 : i32
    %c1_i32_151 = arith.constant 1 : i32
    %182 = arith.addi %181, %c1_i32_151 : i32
    %c1_i32_152 = arith.constant 1 : i32
    %183 = arith.addi %182, %c1_i32_152 : i32
    %c0_153 = arith.constant 0 : index
    %184 = arith.index_cast %183 : i32 to index
    %c0_154 = arith.constant 0 : index
    %c0_155 = arith.constant 0 : index
    %185 = vector.load %arg2[%c0_153, %184, %c0_154, %c0_155] : memref<1x36x4x9xbf16, #tpu.memory_space<vmem>>, vector<1x1x4x8xbf16>
    %186 = vector.shape_cast %185 : vector<1x1x4x8xbf16> to vector<4x8xbf16>
    %cst_156 = arith.constant dense<0.000000e+00> : vector<16x8xf32>
    %187 = tpu.matmul %18, %186, %cst_156 {dimension_numbers = #tpu.dot_dimension_numbers<[1], [0], [0], [1], [0, 0, 1, 1], [], []>} : vector<16x4xbf16>, vector<4x8xbf16>, vector<16x8xf32> -> vector<16x8xf32>
    %188 = arith.addf %179, %187 : vector<16x8xf32>
    %c8_i32_157 = arith.constant 8 : i32
    %189 = arith.muli %arg1, %c8_i32_157 : i32
    %c0_i32_158 = arith.constant 0 : i32
    %190 = arith.addi %c0_i32_158, %189 : i32
    %c1_i32_159 = arith.constant 1 : i32
    %191 = arith.addi %190, %c1_i32_159 : i32
    %c1_i32_160 = arith.constant 1 : i32
    %192 = arith.addi %191, %c1_i32_160 : i32
    %c0_161 = arith.constant 0 : index
    %193 = arith.index_cast %192 : i32 to index
    %c0_162 = arith.constant 0 : index
    %c1_163 = arith.constant 1 : index
    %194 = vector.load %arg2[%c0_161, %193, %c0_162, %c1_163] : memref<1x36x4x9xbf16, #tpu.memory_space<vmem>>, vector<1x1x4x8xbf16>
    %195 = vector.shape_cast %194 : vector<1x1x4x8xbf16> to vector<4x8xbf16>
    %cst_164 = arith.constant dense<0.000000e+00> : vector<16x8xf32>
    %196 = tpu.matmul %20, %195, %cst_164 {dimension_numbers = #tpu.dot_dimension_numbers<[1], [0], [0], [1], [0, 0, 1, 1], [], []>} : vector<16x4xbf16>, vector<4x8xbf16>, vector<16x8xf32> -> vector<16x8xf32>
    %197 = arith.addf %188, %196 : vector<16x8xf32>
    %cst_165 = arith.constant dense<0.000000e+00> : vector<16xf32>
    %198 = vector.multi_reduction <add>, %197, %cst_165 [1] : vector<16x8xf32> to vector<16xf32>
    %199 = vector.shape_cast %198 : vector<16xf32> to vector<16x1xf32>
    %200 = arith.addf %107, %199 : vector<16x1xf32>
    %201 = arith.mulf %197, %197 : vector<16x8xf32>
    %cst_166 = arith.constant dense<0.000000e+00> : vector<16xf32>
    %202 = vector.multi_reduction <add>, %201, %cst_166 [1] : vector<16x8xf32> to vector<16xf32>
    %203 = vector.shape_cast %202 : vector<16xf32> to vector<16x1xf32>
    %204 = arith.addf %111, %203 : vector<16x1xf32>
    %205 = arith.index_cast %arg1 : i32 to index
    %c0_167 = arith.constant 0 : index
    %c8_168 = arith.constant 8 : index
    %206 = vector.load %arg7[%205, %c0_167, %c8_168] : memref<1x16x64xf32, #tpu.memory_space<vmem>>, vector<1x16x8xf32>
    %207 = vector.shape_cast %206 : vector<1x16x8xf32> to vector<16x8xf32>
    %208 = vector.shape_cast %197 : vector<16x8xf32> to vector<1x16x8xf32>
    tpu.vector_store %arg7[%205, %c0_167, %c8_168], %208 {strides = array<i32>} : memref<1x16x64xf32, #tpu.memory_space<vmem>>, vector<1x16x8xf32>,
    %cst_169 = arith.constant 0.000000e+00 : f32
    %209 = vector.broadcast %cst_169 : f32 to vector<16x8xf32>
    %c8_i32_170 = arith.constant 8 : i32
    %210 = arith.muli %arg1, %c8_i32_170 : i32
    %c0_i32_171 = arith.constant 0 : i32
    %211 = arith.addi %c0_i32_171, %210 : i32
    %c2_i32 = arith.constant 2 : i32
    %212 = arith.addi %211, %c2_i32 : i32
    %c0_i32_172 = arith.constant 0 : i32
    %213 = arith.addi %212, %c0_i32_172 : i32
    %c0_173 = arith.constant 0 : index
    %214 = arith.index_cast %213 : i32 to index
    %c0_174 = arith.constant 0 : index
    %c0_175 = arith.constant 0 : index
    %215 = vector.load %arg2[%c0_173, %214, %c0_174, %c0_175] : memref<1x36x4x9xbf16, #tpu.memory_space<vmem>>, vector<1x1x4x8xbf16>
    %216 = vector.shape_cast %215 : vector<1x1x4x8xbf16> to vector<4x8xbf16>
    %cst_176 = arith.constant dense<0.000000e+00> : vector<16x8xf32>
    %217 = tpu.matmul %4, %216, %cst_176 {dimension_numbers = #tpu.dot_dimension_numbers<[1], [0], [0], [1], [0, 0, 1, 1], [], []>} : vector<16x4xbf16>, vector<4x8xbf16>, vector<16x8xf32> -> vector<16x8xf32>
    %218 = arith.addf %209, %217 : vector<16x8xf32>
    %c8_i32_177 = arith.constant 8 : i32
    %219 = arith.muli %arg1, %c8_i32_177 : i32
    %c9_i32_178 = arith.constant 9 : i32
    %220 = arith.addi %c9_i32_178, %219 : i32
    %c2_i32_179 = arith.constant 2 : i32
    %221 = arith.addi %220, %c2_i32_179 : i32
    %c0_i32_180 = arith.constant 0 : i32
    %222 = arith.addi %221, %c0_i32_180 : i32
    %c0_181 = arith.constant 0 : index
    %223 = arith.index_cast %222 : i32 to index
    %c0_182 = arith.constant 0 : index
    %c0_183 = arith.constant 0 : index
    %224 = vector.load %arg2[%c0_181, %223, %c0_182, %c0_183] : memref<1x36x4x9xbf16, #tpu.memory_space<vmem>>, vector<1x1x4x8xbf16>
    %225 = vector.shape_cast %224 : vector<1x1x4x8xbf16> to vector<4x8xbf16>
    %cst_184 = arith.constant dense<0.000000e+00> : vector<16x8xf32>
    %226 = tpu.matmul %6, %225, %cst_184 {dimension_numbers = #tpu.dot_dimension_numbers<[1], [0], [0], [1], [0, 0, 1, 1], [], []>} : vector<16x4xbf16>, vector<4x8xbf16>, vector<16x8xf32> -> vector<16x8xf32>
    %227 = arith.addf %218, %226 : vector<16x8xf32>
    %c8_i32_185 = arith.constant 8 : i32
    %228 = arith.muli %arg1, %c8_i32_185 : i32
    %c0_i32_186 = arith.constant 0 : i32
    %229 = arith.addi %c0_i32_186, %228 : i32
    %c2_i32_187 = arith.constant 2 : i32
    %230 = arith.addi %229, %c2_i32_187 : i32
    %c0_i32_188 = arith.constant 0 : i32
    %231 = arith.addi %230, %c0_i32_188 : i32
    %c0_189 = arith.constant 0 : index
    %232 = arith.index_cast %231 : i32 to index
    %c0_190 = arith.constant 0 : index
    %c1_191 = arith.constant 1 : index
    %233 = vector.load %arg2[%c0_189, %232, %c0_190, %c1_191] : memref<1x36x4x9xbf16, #tpu.memory_space<vmem>>, vector<1x1x4x8xbf16>
    %234 = vector.shape_cast %233 : vector<1x1x4x8xbf16> to vector<4x8xbf16>
    %cst_192 = arith.constant dense<0.000000e+00> : vector<16x8xf32>
    %235 = tpu.matmul %8, %234, %cst_192 {dimension_numbers = #tpu.dot_dimension_numbers<[1], [0], [0], [1], [0, 0, 1, 1], [], []>} : vector<16x4xbf16>, vector<4x8xbf16>, vector<16x8xf32> -> vector<16x8xf32>
    %236 = arith.addf %227, %235 : vector<16x8xf32>
    %c8_i32_193 = arith.constant 8 : i32
    %237 = arith.muli %arg1, %c8_i32_193 : i32
    %c18_i32_194 = arith.constant 18 : i32
    %238 = arith.addi %c18_i32_194, %237 : i32
    %c2_i32_195 = arith.constant 2 : i32
    %239 = arith.addi %238, %c2_i32_195 : i32
    %c0_i32_196 = arith.constant 0 : i32
    %240 = arith.addi %239, %c0_i32_196 : i32
    %c0_197 = arith.constant 0 : index
    %241 = arith.index_cast %240 : i32 to index
    %c0_198 = arith.constant 0 : index
    %c0_199 = arith.constant 0 : index
    %242 = vector.load %arg2[%c0_197, %241, %c0_198, %c0_199] : memref<1x36x4x9xbf16, #tpu.memory_space<vmem>>, vector<1x1x4x8xbf16>
    %243 = vector.shape_cast %242 : vector<1x1x4x8xbf16> to vector<4x8xbf16>
    %cst_200 = arith.constant dense<0.000000e+00> : vector<16x8xf32>
    %244 = tpu.matmul %10, %243, %cst_200 {dimension_numbers = #tpu.dot_dimension_numbers<[1], [0], [0], [1], [0, 0, 1, 1], [], []>} : vector<16x4xbf16>, vector<4x8xbf16>, vector<16x8xf32> -> vector<16x8xf32>
    %245 = arith.addf %236, %244 : vector<16x8xf32>
    %c8_i32_201 = arith.constant 8 : i32
    %246 = arith.muli %arg1, %c8_i32_201 : i32
    %c27_i32_202 = arith.constant 27 : i32
    %247 = arith.addi %c27_i32_202, %246 : i32
    %c2_i32_203 = arith.constant 2 : i32
    %248 = arith.addi %247, %c2_i32_203 : i32
    %c0_i32_204 = arith.constant 0 : i32
    %249 = arith.addi %248, %c0_i32_204 : i32
    %c0_205 = arith.constant 0 : index
    %250 = arith.index_cast %249 : i32 to index
    %c0_206 = arith.constant 0 : index
    %c0_207 = arith.constant 0 : index
    %251 = vector.load %arg2[%c0_205, %250, %c0_206, %c0_207] : memref<1x36x4x9xbf16, #tpu.memory_space<vmem>>, vector<1x1x4x8xbf16>
    %252 = vector.shape_cast %251 : vector<1x1x4x8xbf16> to vector<4x8xbf16>
    %cst_208 = arith.constant dense<0.000000e+00> : vector<16x8xf32>
    %253 = tpu.matmul %12, %252, %cst_208 {dimension_numbers = #tpu.dot_dimension_numbers<[1], [0], [0], [1], [0, 0, 1, 1], [], []>} : vector<16x4xbf16>, vector<4x8xbf16>, vector<16x8xf32> -> vector<16x8xf32>
    %254 = arith.addf %245, %253 : vector<16x8xf32>
    %c8_i32_209 = arith.constant 8 : i32
    %255 = arith.muli %arg1, %c8_i32_209 : i32
    %c18_i32_210 = arith.constant 18 : i32
    %256 = arith.addi %c18_i32_210, %255 : i32
    %c2_i32_211 = arith.constant 2 : i32
    %257 = arith.addi %256, %c2_i32_211 : i32
    %c0_i32_212 = arith.constant 0 : i32
    %258 = arith.addi %257, %c0_i32_212 : i32
    %c0_213 = arith.constant 0 : index
    %259 = arith.index_cast %258 : i32 to index
    %c0_214 = arith.constant 0 : index
    %c1_215 = arith.constant 1 : index
    %260 = vector.load %arg2[%c0_213, %259, %c0_214, %c1_215] : memref<1x36x4x9xbf16, #tpu.memory_space<vmem>>, vector<1x1x4x8xbf16>
    %261 = vector.shape_cast %260 : vector<1x1x4x8xbf16> to vector<4x8xbf16>
    %cst_216 = arith.constant dense<0.000000e+00> : vector<16x8xf32>
    %262 = tpu.matmul %14, %261, %cst_216 {dimension_numbers = #tpu.dot_dimension_numbers<[1], [0], [0], [1], [0, 0, 1, 1], [], []>} : vector<16x4xbf16>, vector<4x8xbf16>, vector<16x8xf32> -> vector<16x8xf32>
    %263 = arith.addf %254, %262 : vector<16x8xf32>
    %c8_i32_217 = arith.constant 8 : i32
    %264 = arith.muli %arg1, %c8_i32_217 : i32
    %c0_i32_218 = arith.constant 0 : i32
    %265 = arith.addi %c0_i32_218, %264 : i32
    %c2_i32_219 = arith.constant 2 : i32
    %266 = arith.addi %265, %c2_i32_219 : i32
    %c1_i32_220 = arith.constant 1 : i32
    %267 = arith.addi %266, %c1_i32_220 : i32
    %c0_221 = arith.constant 0 : index
    %268 = arith.index_cast %267 : i32 to index
    %c0_222 = arith.constant 0 : index
    %c0_223 = arith.constant 0 : index
    %269 = vector.load %arg2[%c0_221, %268, %c0_222, %c0_223] : memref<1x36x4x9xbf16, #tpu.memory_space<vmem>>, vector<1x1x4x8xbf16>
    %270 = vector.shape_cast %269 : vector<1x1x4x8xbf16> to vector<4x8xbf16>
    %cst_224 = arith.constant dense<0.000000e+00> : vector<16x8xf32>
    %271 = tpu.matmul %16, %270, %cst_224 {dimension_numbers = #tpu.dot_dimension_numbers<[1], [0], [0], [1], [0, 0, 1, 1], [], []>} : vector<16x4xbf16>, vector<4x8xbf16>, vector<16x8xf32> -> vector<16x8xf32>
    %272 = arith.addf %263, %271 : vector<16x8xf32>
    %c8_i32_225 = arith.constant 8 : i32
    %273 = arith.muli %arg1, %c8_i32_225 : i32
    %c9_i32_226 = arith.constant 9 : i32
    %274 = arith.addi %c9_i32_226, %273 : i32
    %c2_i32_227 = arith.constant 2 : i32
    %275 = arith.addi %274, %c2_i32_227 : i32
    %c1_i32_228 = arith.constant 1 : i32
    %276 = arith.addi %275, %c1_i32_228 : i32
    %c0_229 = arith.constant 0 : index
    %277 = arith.index_cast %276 : i32 to index
    %c0_230 = arith.constant 0 : index
    %c0_231 = arith.constant 0 : index
    %278 = vector.load %arg2[%c0_229, %277, %c0_230, %c0_231] : memref<1x36x4x9xbf16, #tpu.memory_space<vmem>>, vector<1x1x4x8xbf16>
    %279 = vector.shape_cast %278 : vector<1x1x4x8xbf16> to vector<4x8xbf16>
    %cst_232 = arith.constant dense<0.000000e+00> : vector<16x8xf32>
    %280 = tpu.matmul %18, %279, %cst_232 {dimension_numbers = #tpu.dot_dimension_numbers<[1], [0], [0], [1], [0, 0, 1, 1], [], []>} : vector<16x4xbf16>, vector<4x8xbf16>, vector<16x8xf32> -> vector<16x8xf32>
    %281 = arith.addf %272, %280 : vector<16x8xf32>
    %c8_i32_233 = arith.constant 8 : i32
    %282 = arith.muli %arg1, %c8_i32_233 : i32
    %c0_i32_234 = arith.constant 0 : i32
    %283 = arith.addi %c0_i32_234, %282 : i32
    %c2_i32_235 = arith.constant 2 : i32
    %284 = arith.addi %283, %c2_i32_235 : i32
    %c1_i32_236 = arith.constant 1 : i32
    %285 = arith.addi %284, %c1_i32_236 : i32
    %c0_237 = arith.constant 0 : index
    %286 = arith.index_cast %285 : i32 to index
    %c0_238 = arith.constant 0 : index
    %c1_239 = arith.constant 1 : index
    %287 = vector.load %arg2[%c0_237, %286, %c0_238, %c1_239] : memref<1x36x4x9xbf16, #tpu.memory_space<vmem>>, vector<1x1x4x8xbf16>
    %288 = vector.shape_cast %287 : vector<1x1x4x8xbf16> to vector<4x8xbf16>
    %cst_240 = arith.constant dense<0.000000e+00> : vector<16x8xf32>
    %289 = tpu.matmul %20, %288, %cst_240 {dimension_numbers = #tpu.dot_dimension_numbers<[1], [0], [0], [1], [0, 0, 1, 1], [], []>} : vector<16x4xbf16>, vector<4x8xbf16>, vector<16x8xf32> -> vector<16x8xf32>
    %290 = arith.addf %281, %289 : vector<16x8xf32>
    %cst_241 = arith.constant dense<0.000000e+00> : vector<16xf32>
    %291 = vector.multi_reduction <add>, %290, %cst_241 [1] : vector<16x8xf32> to vector<16xf32>
    %292 = vector.shape_cast %291 : vector<16xf32> to vector<16x1xf32>
    %293 = arith.addf %200, %292 : vector<16x1xf32>
    %294 = arith.mulf %290, %290 : vector<16x8xf32>
    %cst_242 = arith.constant dense<0.000000e+00> : vector<16xf32>
    %295 = vector.multi_reduction <add>, %294, %cst_242 [1] : vector<16x8xf32> to vector<16xf32>
    %296 = vector.shape_cast %295 : vector<16xf32> to vector<16x1xf32>
    %297 = arith.addf %204, %296 : vector<16x1xf32>
    %298 = arith.index_cast %arg1 : i32 to index
    %c0_243 = arith.constant 0 : index
    %c16 = arith.constant 16 : index
    %299 = vector.load %arg7[%298, %c0_243, %c16] : memref<1x16x64xf32, #tpu.memory_space<vmem>>, vector<1x16x8xf32>
    %300 = vector.shape_cast %299 : vector<1x16x8xf32> to vector<16x8xf32>
    %301 = vector.shape_cast %290 : vector<16x8xf32> to vector<1x16x8xf32>
    tpu.vector_store %arg7[%298, %c0_243, %c16], %301 {strides = array<i32>} : memref<1x16x64xf32, #tpu.memory_space<vmem>>, vector<1x16x8xf32>,
    %cst_244 = arith.constant 0.000000e+00 : f32
    %302 = vector.broadcast %cst_244 : f32 to vector<16x8xf32>
    %c8_i32_245 = arith.constant 8 : i32
    %303 = arith.muli %arg1, %c8_i32_245 : i32
    %c0_i32_246 = arith.constant 0 : i32
    %304 = arith.addi %c0_i32_246, %303 : i32
    %c3_i32 = arith.constant 3 : i32
    %305 = arith.addi %304, %c3_i32 : i32
    %c0_i32_247 = arith.constant 0 : i32
    %306 = arith.addi %305, %c0_i32_247 : i32
    %c0_248 = arith.constant 0 : index
    %307 = arith.index_cast %306 : i32 to index
    %c0_249 = arith.constant 0 : index
    %c0_250 = arith.constant 0 : index
    %308 = vector.load %arg2[%c0_248, %307, %c0_249, %c0_250] : memref<1x36x4x9xbf16, #tpu.memory_space<vmem>>, vector<1x1x4x8xbf16>
    %309 = vector.shape_cast %308 : vector<1x1x4x8xbf16> to vector<4x8xbf16>
    %cst_251 = arith.constant dense<0.000000e+00> : vector<16x8xf32>
    %310 = tpu.matmul %4, %309, %cst_251 {dimension_numbers = #tpu.dot_dimension_numbers<[1], [0], [0], [1], [0, 0, 1, 1], [], []>} : vector<16x4xbf16>, vector<4x8xbf16>, vector<16x8xf32> -> vector<16x8xf32>
    %311 = arith.addf %302, %310 : vector<16x8xf32>
    %c8_i32_252 = arith.constant 8 : i32
    %312 = arith.muli %arg1, %c8_i32_252 : i32
    %c9_i32_253 = arith.constant 9 : i32
    %313 = arith.addi %c9_i32_253, %312 : i32
    %c3_i32_254 = arith.constant 3 : i32
    %314 = arith.addi %313, %c3_i32_254 : i32
    %c0_i32_255 = arith.constant 0 : i32
    %315 = arith.addi %314, %c0_i32_255 : i32
    %c0_256 = arith.constant 0 : index
    %316 = arith.index_cast %315 : i32 to index
    %c0_257 = arith.constant 0 : index
    %c0_258 = arith.constant 0 : index
    %317 = vector.load %arg2[%c0_256, %316, %c0_257, %c0_258] : memref<1x36x4x9xbf16, #tpu.memory_space<vmem>>, vector<1x1x4x8xbf16>
    %318 = vector.shape_cast %317 : vector<1x1x4x8xbf16> to vector<4x8xbf16>
    %cst_259 = arith.constant dense<0.000000e+00> : vector<16x8xf32>
    %319 = tpu.matmul %6, %318, %cst_259 {dimension_numbers = #tpu.dot_dimension_numbers<[1], [0], [0], [1], [0, 0, 1, 1], [], []>} : vector<16x4xbf16>, vector<4x8xbf16>, vector<16x8xf32> -> vector<16x8xf32>
    %320 = arith.addf %311, %319 : vector<16x8xf32>
    %c8_i32_260 = arith.constant 8 : i32
    %321 = arith.muli %arg1, %c8_i32_260 : i32
    %c0_i32_261 = arith.constant 0 : i32
    %322 = arith.addi %c0_i32_261, %321 : i32
    %c3_i32_262 = arith.constant 3 : i32
    %323 = arith.addi %322, %c3_i32_262 : i32
    %c0_i32_263 = arith.constant 0 : i32
    %324 = arith.addi %323, %c0_i32_263 : i32
    %c0_264 = arith.constant 0 : index
    %325 = arith.index_cast %324 : i32 to index
    %c0_265 = arith.constant 0 : index
    %c1_266 = arith.constant 1 : index
    %326 = vector.load %arg2[%c0_264, %325, %c0_265, %c1_266] : memref<1x36x4x9xbf16, #tpu.memory_space<vmem>>, vector<1x1x4x8xbf16>
    %327 = vector.shape_cast %326 : vector<1x1x4x8xbf16> to vector<4x8xbf16>
    %cst_267 = arith.constant dense<0.000000e+00> : vector<16x8xf32>
    %328 = tpu.matmul %8, %327, %cst_267 {dimension_numbers = #tpu.dot_dimension_numbers<[1], [0], [0], [1], [0, 0, 1, 1], [], []>} : vector<16x4xbf16>, vector<4x8xbf16>, vector<16x8xf32> -> vector<16x8xf32>
    %329 = arith.addf %320, %328 : vector<16x8xf32>
    %c8_i32_268 = arith.constant 8 : i32
    %330 = arith.muli %arg1, %c8_i32_268 : i32
    %c18_i32_269 = arith.constant 18 : i32
    %331 = arith.addi %c18_i32_269, %330 : i32
    %c3_i32_270 = arith.constant 3 : i32
    %332 = arith.addi %331, %c3_i32_270 : i32
    %c0_i32_271 = arith.constant 0 : i32
    %333 = arith.addi %332, %c0_i32_271 : i32
    %c0_272 = arith.constant 0 : index
    %334 = arith.index_cast %333 : i32 to index
    %c0_273 = arith.constant 0 : index
    %c0_274 = arith.constant 0 : index
    %335 = vector.load %arg2[%c0_272, %334, %c0_273, %c0_274] : memref<1x36x4x9xbf16, #tpu.memory_space<vmem>>, vector<1x1x4x8xbf16>
    %336 = vector.shape_cast %335 : vector<1x1x4x8xbf16> to vector<4x8xbf16>
    %cst_275 = arith.constant dense<0.000000e+00> : vector<16x8xf32>
    %337 = tpu.matmul %10, %336, %cst_275 {dimension_numbers = #tpu.dot_dimension_numbers<[1], [0], [0], [1], [0, 0, 1, 1], [], []>} : vector<16x4xbf16>, vector<4x8xbf16>, vector<16x8xf32> -> vector<16x8xf32>
    %338 = arith.addf %329, %337 : vector<16x8xf32>
    %c8_i32_276 = arith.constant 8 : i32
    %339 = arith.muli %arg1, %c8_i32_276 : i32
    %c27_i32_277 = arith.constant 27 : i32
    %340 = arith.addi %c27_i32_277, %339 : i32
    %c3_i32_278 = arith.constant 3 : i32
    %341 = arith.addi %340, %c3_i32_278 : i32
    %c0_i32_279 = arith.constant 0 : i32
    %342 = arith.addi %341, %c0_i32_279 : i32
    %c0_280 = arith.constant 0 : index
    %343 = arith.index_cast %342 : i32 to index
    %c0_281 = arith.constant 0 : index
    %c0_282 = arith.constant 0 : index
    %344 = vector.load %arg2[%c0_280, %343, %c0_281, %c0_282] : memref<1x36x4x9xbf16, #tpu.memory_space<vmem>>, vector<1x1x4x8xbf16>
    %345 = vector.shape_cast %344 : vector<1x1x4x8xbf16> to vector<4x8xbf16>
    %cst_283 = arith.constant dense<0.000000e+00> : vector<16x8xf32>
    %346 = tpu.matmul %12, %345, %cst_283 {dimension_numbers = #tpu.dot_dimension_numbers<[1], [0], [0], [1], [0, 0, 1, 1], [], []>} : vector<16x4xbf16>, vector<4x8xbf16>, vector<16x8xf32> -> vector<16x8xf32>
    %347 = arith.addf %338, %346 : vector<16x8xf32>
    %c8_i32_284 = arith.constant 8 : i32
    %348 = arith.muli %arg1, %c8_i32_284 : i32
    %c18_i32_285 = arith.constant 18 : i32
    %349 = arith.addi %c18_i32_285, %348 : i32
    %c3_i32_286 = arith.constant 3 : i32
    %350 = arith.addi %349, %c3_i32_286 : i32
    %c0_i32_287 = arith.constant 0 : i32
    %351 = arith.addi %350, %c0_i32_287 : i32
    %c0_288 = arith.constant 0 : index
    %352 = arith.index_cast %351 : i32 to index
    %c0_289 = arith.constant 0 : index
    %c1_290 = arith.constant 1 : index
    %353 = vector.load %arg2[%c0_288, %352, %c0_289, %c1_290] : memref<1x36x4x9xbf16, #tpu.memory_space<vmem>>, vector<1x1x4x8xbf16>
    %354 = vector.shape_cast %353 : vector<1x1x4x8xbf16> to vector<4x8xbf16>
    %cst_291 = arith.constant dense<0.000000e+00> : vector<16x8xf32>
    %355 = tpu.matmul %14, %354, %cst_291 {dimension_numbers = #tpu.dot_dimension_numbers<[1], [0], [0], [1], [0, 0, 1, 1], [], []>} : vector<16x4xbf16>, vector<4x8xbf16>, vector<16x8xf32> -> vector<16x8xf32>
    %356 = arith.addf %347, %355 : vector<16x8xf32>
    %c8_i32_292 = arith.constant 8 : i32
    %357 = arith.muli %arg1, %c8_i32_292 : i32
    %c0_i32_293 = arith.constant 0 : i32
    %358 = arith.addi %c0_i32_293, %357 : i32
    %c3_i32_294 = arith.constant 3 : i32
    %359 = arith.addi %358, %c3_i32_294 : i32
    %c1_i32_295 = arith.constant 1 : i32
    %360 = arith.addi %359, %c1_i32_295 : i32
    %c0_296 = arith.constant 0 : index
    %361 = arith.index_cast %360 : i32 to index
    %c0_297 = arith.constant 0 : index
    %c0_298 = arith.constant 0 : index
    %362 = vector.load %arg2[%c0_296, %361, %c0_297, %c0_298] : memref<1x36x4x9xbf16, #tpu.memory_space<vmem>>, vector<1x1x4x8xbf16>
    %363 = vector.shape_cast %362 : vector<1x1x4x8xbf16> to vector<4x8xbf16>
    %cst_299 = arith.constant dense<0.000000e+00> : vector<16x8xf32>
    %364 = tpu.matmul %16, %363, %cst_299 {dimension_numbers = #tpu.dot_dimension_numbers<[1], [0], [0], [1], [0, 0, 1, 1], [], []>} : vector<16x4xbf16>, vector<4x8xbf16>, vector<16x8xf32> -> vector<16x8xf32>
    %365 = arith.addf %356, %364 : vector<16x8xf32>
    %c8_i32_300 = arith.constant 8 : i32
    %366 = arith.muli %arg1, %c8_i32_300 : i32
    %c9_i32_301 = arith.constant 9 : i32
    %367 = arith.addi %c9_i32_301, %366 : i32
    %c3_i32_302 = arith.constant 3 : i32
    %368 = arith.addi %367, %c3_i32_302 : i32
    %c1_i32_303 = arith.constant 1 : i32
    %369 = arith.addi %368, %c1_i32_303 : i32
    %c0_304 = arith.constant 0 : index
    %370 = arith.index_cast %369 : i32 to index
    %c0_305 = arith.constant 0 : index
    %c0_306 = arith.constant 0 : index
    %371 = vector.load %arg2[%c0_304, %370, %c0_305, %c0_306] : memref<1x36x4x9xbf16, #tpu.memory_space<vmem>>, vector<1x1x4x8xbf16>
    %372 = vector.shape_cast %371 : vector<1x1x4x8xbf16> to vector<4x8xbf16>
    %cst_307 = arith.constant dense<0.000000e+00> : vector<16x8xf32>
    %373 = tpu.matmul %18, %372, %cst_307 {dimension_numbers = #tpu.dot_dimension_numbers<[1], [0], [0], [1], [0, 0, 1, 1], [], []>} : vector<16x4xbf16>, vector<4x8xbf16>, vector<16x8xf32> -> vector<16x8xf32>
    %374 = arith.addf %365, %373 : vector<16x8xf32>
    %c8_i32_308 = arith.constant 8 : i32
    %375 = arith.muli %arg1, %c8_i32_308 : i32
    %c0_i32_309 = arith.constant 0 : i32
    %376 = arith.addi %c0_i32_309, %375 : i32
    %c3_i32_310 = arith.constant 3 : i32
    %377 = arith.addi %376, %c3_i32_310 : i32
    %c1_i32_311 = arith.constant 1 : i32
    %378 = arith.addi %377, %c1_i32_311 : i32
    %c0_312 = arith.constant 0 : index
    %379 = arith.index_cast %378 : i32 to index
    %c0_313 = arith.constant 0 : index
    %c1_314 = arith.constant 1 : index
    %380 = vector.load %arg2[%c0_312, %379, %c0_313, %c1_314] : memref<1x36x4x9xbf16, #tpu.memory_space<vmem>>, vector<1x1x4x8xbf16>
    %381 = vector.shape_cast %380 : vector<1x1x4x8xbf16> to vector<4x8xbf16>
    %cst_315 = arith.constant dense<0.000000e+00> : vector<16x8xf32>
    %382 = tpu.matmul %20, %381, %cst_315 {dimension_numbers = #tpu.dot_dimension_numbers<[1], [0], [0], [1], [0, 0, 1, 1], [], []>} : vector<16x4xbf16>, vector<4x8xbf16>, vector<16x8xf32> -> vector<16x8xf32>
    %383 = arith.addf %374, %382 : vector<16x8xf32>
    %cst_316 = arith.constant dense<0.000000e+00> : vector<16xf32>
    %384 = vector.multi_reduction <add>, %383, %cst_316 [1] : vector<16x8xf32> to vector<16xf32>
    %385 = vector.shape_cast %384 : vector<16xf32> to vector<16x1xf32>
    %386 = arith.addf %293, %385 : vector<16x1xf32>
    %387 = arith.mulf %383, %383 : vector<16x8xf32>
    %cst_317 = arith.constant dense<0.000000e+00> : vector<16xf32>
    %388 = vector.multi_reduction <add>, %387, %cst_317 [1] : vector<16x8xf32> to vector<16xf32>
    %389 = vector.shape_cast %388 : vector<16xf32> to vector<16x1xf32>
    %390 = arith.addf %297, %389 : vector<16x1xf32>
    %391 = arith.index_cast %arg1 : i32 to index
    %c0_318 = arith.constant 0 : index
    %c24 = arith.constant 24 : index
    %392 = vector.load %arg7[%391, %c0_318, %c24] : memref<1x16x64xf32, #tpu.memory_space<vmem>>, vector<1x16x8xf32>
    %393 = vector.shape_cast %392 : vector<1x16x8xf32> to vector<16x8xf32>
    %394 = vector.shape_cast %383 : vector<16x8xf32> to vector<1x16x8xf32>
    tpu.vector_store %arg7[%391, %c0_318, %c24], %394 {strides = array<i32>} : memref<1x16x64xf32, #tpu.memory_space<vmem>>, vector<1x16x8xf32>,
    %cst_319 = arith.constant 0.000000e+00 : f32
    %395 = vector.broadcast %cst_319 : f32 to vector<16x8xf32>
    %c8_i32_320 = arith.constant 8 : i32
    %396 = arith.muli %arg1, %c8_i32_320 : i32
    %c0_i32_321 = arith.constant 0 : i32
    %397 = arith.addi %c0_i32_321, %396 : i32
    %c4_i32 = arith.constant 4 : i32
    %398 = arith.addi %397, %c4_i32 : i32
    %c0_i32_322 = arith.constant 0 : i32
    %399 = arith.addi %398, %c0_i32_322 : i32
    %c0_323 = arith.constant 0 : index
    %400 = arith.index_cast %399 : i32 to index
    %c0_324 = arith.constant 0 : index
    %c0_325 = arith.constant 0 : index
    %401 = vector.load %arg2[%c0_323, %400, %c0_324, %c0_325] : memref<1x36x4x9xbf16, #tpu.memory_space<vmem>>, vector<1x1x4x8xbf16>
    %402 = vector.shape_cast %401 : vector<1x1x4x8xbf16> to vector<4x8xbf16>
    %cst_326 = arith.constant dense<0.000000e+00> : vector<16x8xf32>
    %403 = tpu.matmul %4, %402, %cst_326 {dimension_numbers = #tpu.dot_dimension_numbers<[1], [0], [0], [1], [0, 0, 1, 1], [], []>} : vector<16x4xbf16>, vector<4x8xbf16>, vector<16x8xf32> -> vector<16x8xf32>
    %404 = arith.addf %395, %403 : vector<16x8xf32>
    %c8_i32_327 = arith.constant 8 : i32
    %405 = arith.muli %arg1, %c8_i32_327 : i32
    %c9_i32_328 = arith.constant 9 : i32
    %406 = arith.addi %c9_i32_328, %405 : i32
    %c4_i32_329 = arith.constant 4 : i32
    %407 = arith.addi %406, %c4_i32_329 : i32
    %c0_i32_330 = arith.constant 0 : i32
    %408 = arith.addi %407, %c0_i32_330 : i32
    %c0_331 = arith.constant 0 : index
    %409 = arith.index_cast %408 : i32 to index
    %c0_332 = arith.constant 0 : index
    %c0_333 = arith.constant 0 : index
    %410 = vector.load %arg2[%c0_331, %409, %c0_332, %c0_333] : memref<1x36x4x9xbf16, #tpu.memory_space<vmem>>, vector<1x1x4x8xbf16>
    %411 = vector.shape_cast %410 : vector<1x1x4x8xbf16> to vector<4x8xbf16>
    %cst_334 = arith.constant dense<0.000000e+00> : vector<16x8xf32>
    %412 = tpu.matmul %6, %411, %cst_334 {dimension_numbers = #tpu.dot_dimension_numbers<[1], [0], [0], [1], [0, 0, 1, 1], [], []>} : vector<16x4xbf16>, vector<4x8xbf16>, vector<16x8xf32> -> vector<16x8xf32>
    %413 = arith.addf %404, %412 : vector<16x8xf32>
    %c8_i32_335 = arith.constant 8 : i32
    %414 = arith.muli %arg1, %c8_i32_335 : i32
    %c0_i32_336 = arith.constant 0 : i32
    %415 = arith.addi %c0_i32_336, %414 : i32
    %c4_i32_337 = arith.constant 4 : i32
    %416 = arith.addi %415, %c4_i32_337 : i32
    %c0_i32_338 = arith.constant 0 : i32
    %417 = arith.addi %416, %c0_i32_338 : i32
    %c0_339 = arith.constant 0 : index
    %418 = arith.index_cast %417 : i32 to index
    %c0_340 = arith.constant 0 : index
    %c1_341 = arith.constant 1 : index
    %419 = vector.load %arg2[%c0_339, %418, %c0_340, %c1_341] : memref<1x36x4x9xbf16, #tpu.memory_space<vmem>>, vector<1x1x4x8xbf16>
    %420 = vector.shape_cast %419 : vector<1x1x4x8xbf16> to vector<4x8xbf16>
    %cst_342 = arith.constant dense<0.000000e+00> : vector<16x8xf32>
    %421 = tpu.matmul %8, %420, %cst_342 {dimension_numbers = #tpu.dot_dimension_numbers<[1], [0], [0], [1], [0, 0, 1, 1], [], []>} : vector<16x4xbf16>, vector<4x8xbf16>, vector<16x8xf32> -> vector<16x8xf32>
    %422 = arith.addf %413, %421 : vector<16x8xf32>
    %c8_i32_343 = arith.constant 8 : i32
    %423 = arith.muli %arg1, %c8_i32_343 : i32
    %c18_i32_344 = arith.constant 18 : i32
    %424 = arith.addi %c18_i32_344, %423 : i32
    %c4_i32_345 = arith.constant 4 : i32
    %425 = arith.addi %424, %c4_i32_345 : i32
    %c0_i32_346 = arith.constant 0 : i32
    %426 = arith.addi %425, %c0_i32_346 : i32
    %c0_347 = arith.constant 0 : index
    %427 = arith.index_cast %426 : i32 to index
    %c0_348 = arith.constant 0 : index
    %c0_349 = arith.constant 0 : index
    %428 = vector.load %arg2[%c0_347, %427, %c0_348, %c0_349] : memref<1x36x4x9xbf16, #tpu.memory_space<vmem>>, vector<1x1x4x8xbf16>
    %429 = vector.shape_cast %428 : vector<1x1x4x8xbf16> to vector<4x8xbf16>
    %cst_350 = arith.constant dense<0.000000e+00> : vector<16x8xf32>
    %430 = tpu.matmul %10, %429, %cst_350 {dimension_numbers = #tpu.dot_dimension_numbers<[1], [0], [0], [1], [0, 0, 1, 1], [], []>} : vector<16x4xbf16>, vector<4x8xbf16>, vector<16x8xf32> -> vector<16x8xf32>
    %431 = arith.addf %422, %430 : vector<16x8xf32>
    %c8_i32_351 = arith.constant 8 : i32
    %432 = arith.muli %arg1, %c8_i32_351 : i32
    %c27_i32_352 = arith.constant 27 : i32
    %433 = arith.addi %c27_i32_352, %432 : i32
    %c4_i32_353 = arith.constant 4 : i32
    %434 = arith.addi %433, %c4_i32_353 : i32
    %c0_i32_354 = arith.constant 0 : i32
    %435 = arith.addi %434, %c0_i32_354 : i32
    %c0_355 = arith.constant 0 : index
    %436 = arith.index_cast %435 : i32 to index
    %c0_356 = arith.constant 0 : index
    %c0_357 = arith.constant 0 : index
    %437 = vector.load %arg2[%c0_355, %436, %c0_356, %c0_357] : memref<1x36x4x9xbf16, #tpu.memory_space<vmem>>, vector<1x1x4x8xbf16>
    %438 = vector.shape_cast %437 : vector<1x1x4x8xbf16> to vector<4x8xbf16>
    %cst_358 = arith.constant dense<0.000000e+00> : vector<16x8xf32>
    %439 = tpu.matmul %12, %438, %cst_358 {dimension_numbers = #tpu.dot_dimension_numbers<[1], [0], [0], [1], [0, 0, 1, 1], [], []>} : vector<16x4xbf16>, vector<4x8xbf16>, vector<16x8xf32> -> vector<16x8xf32>
    %440 = arith.addf %431, %439 : vector<16x8xf32>
    %c8_i32_359 = arith.constant 8 : i32
    %441 = arith.muli %arg1, %c8_i32_359 : i32
    %c18_i32_360 = arith.constant 18 : i32
    %442 = arith.addi %c18_i32_360, %441 : i32
    %c4_i32_361 = arith.constant 4 : i32
    %443 = arith.addi %442, %c4_i32_361 : i32
    %c0_i32_362 = arith.constant 0 : i32
    %444 = arith.addi %443, %c0_i32_362 : i32
    %c0_363 = arith.constant 0 : index
    %445 = arith.index_cast %444 : i32 to index
    %c0_364 = arith.constant 0 : index
    %c1_365 = arith.constant 1 : index
    %446 = vector.load %arg2[%c0_363, %445, %c0_364, %c1_365] : memref<1x36x4x9xbf16, #tpu.memory_space<vmem>>, vector<1x1x4x8xbf16>
    %447 = vector.shape_cast %446 : vector<1x1x4x8xbf16> to vector<4x8xbf16>
    %cst_366 = arith.constant dense<0.000000e+00> : vector<16x8xf32>
    %448 = tpu.matmul %14, %447, %cst_366 {dimension_numbers = #tpu.dot_dimension_numbers<[1], [0], [0], [1], [0, 0, 1, 1], [], []>} : vector<16x4xbf16>, vector<4x8xbf16>, vector<16x8xf32> -> vector<16x8xf32>
    %449 = arith.addf %440, %448 : vector<16x8xf32>
    %c8_i32_367 = arith.constant 8 : i32
    %450 = arith.muli %arg1, %c8_i32_367 : i32
    %c0_i32_368 = arith.constant 0 : i32
    %451 = arith.addi %c0_i32_368, %450 : i32
    %c4_i32_369 = arith.constant 4 : i32
    %452 = arith.addi %451, %c4_i32_369 : i32
    %c1_i32_370 = arith.constant 1 : i32
    %453 = arith.addi %452, %c1_i32_370 : i32
    %c0_371 = arith.constant 0 : index
    %454 = arith.index_cast %453 : i32 to index
    %c0_372 = arith.constant 0 : index
    %c0_373 = arith.constant 0 : index
    %455 = vector.load %arg2[%c0_371, %454, %c0_372, %c0_373] : memref<1x36x4x9xbf16, #tpu.memory_space<vmem>>, vector<1x1x4x8xbf16>
    %456 = vector.shape_cast %455 : vector<1x1x4x8xbf16> to vector<4x8xbf16>
    %cst_374 = arith.constant dense<0.000000e+00> : vector<16x8xf32>
    %457 = tpu.matmul %16, %456, %cst_374 {dimension_numbers = #tpu.dot_dimension_numbers<[1], [0], [0], [1], [0, 0, 1, 1], [], []>} : vector<16x4xbf16>, vector<4x8xbf16>, vector<16x8xf32> -> vector<16x8xf32>
    %458 = arith.addf %449, %457 : vector<16x8xf32>
    %c8_i32_375 = arith.constant 8 : i32
    %459 = arith.muli %arg1, %c8_i32_375 : i32
    %c9_i32_376 = arith.constant 9 : i32
    %460 = arith.addi %c9_i32_376, %459 : i32
    %c4_i32_377 = arith.constant 4 : i32
    %461 = arith.addi %460, %c4_i32_377 : i32
    %c1_i32_378 = arith.constant 1 : i32
    %462 = arith.addi %461, %c1_i32_378 : i32
    %c0_379 = arith.constant 0 : index
    %463 = arith.index_cast %462 : i32 to index
    %c0_380 = arith.constant 0 : index
    %c0_381 = arith.constant 0 : index
    %464 = vector.load %arg2[%c0_379, %463, %c0_380, %c0_381] : memref<1x36x4x9xbf16, #tpu.memory_space<vmem>>, vector<1x1x4x8xbf16>
    %465 = vector.shape_cast %464 : vector<1x1x4x8xbf16> to vector<4x8xbf16>
    %cst_382 = arith.constant dense<0.000000e+00> : vector<16x8xf32>
    %466 = tpu.matmul %18, %465, %cst_382 {dimension_numbers = #tpu.dot_dimension_numbers<[1], [0], [0], [1], [0, 0, 1, 1], [], []>} : vector<16x4xbf16>, vector<4x8xbf16>, vector<16x8xf32> -> vector<16x8xf32>
    %467 = arith.addf %458, %466 : vector<16x8xf32>
    %c8_i32_383 = arith.constant 8 : i32
    %468 = arith.muli %arg1, %c8_i32_383 : i32
    %c0_i32_384 = arith.constant 0 : i32
    %469 = arith.addi %c0_i32_384, %468 : i32
    %c4_i32_385 = arith.constant 4 : i32
    %470 = arith.addi %469, %c4_i32_385 : i32
    %c1_i32_386 = arith.constant 1 : i32
    %471 = arith.addi %470, %c1_i32_386 : i32
    %c0_387 = arith.constant 0 : index
    %472 = arith.index_cast %471 : i32 to index
    %c0_388 = arith.constant 0 : index
    %c1_389 = arith.constant 1 : index
    %473 = vector.load %arg2[%c0_387, %472, %c0_388, %c1_389] : memref<1x36x4x9xbf16, #tpu.memory_space<vmem>>, vector<1x1x4x8xbf16>
    %474 = vector.shape_cast %473 : vector<1x1x4x8xbf16> to vector<4x8xbf16>
    %cst_390 = arith.constant dense<0.000000e+00> : vector<16x8xf32>
    %475 = tpu.matmul %20, %474, %cst_390 {dimension_numbers = #tpu.dot_dimension_numbers<[1], [0], [0], [1], [0, 0, 1, 1], [], []>} : vector<16x4xbf16>, vector<4x8xbf16>, vector<16x8xf32> -> vector<16x8xf32>
    %476 = arith.addf %467, %475 : vector<16x8xf32>
    %cst_391 = arith.constant dense<0.000000e+00> : vector<16xf32>
    %477 = vector.multi_reduction <add>, %476, %cst_391 [1] : vector<16x8xf32> to vector<16xf32>
    %478 = vector.shape_cast %477 : vector<16xf32> to vector<16x1xf32>
    %479 = arith.addf %386, %478 : vector<16x1xf32>
    %480 = arith.mulf %476, %476 : vector<16x8xf32>
    %cst_392 = arith.constant dense<0.000000e+00> : vector<16xf32>
    %481 = vector.multi_reduction <add>, %480, %cst_392 [1] : vector<16x8xf32> to vector<16xf32>
    %482 = vector.shape_cast %481 : vector<16xf32> to vector<16x1xf32>
    %483 = arith.addf %390, %482 : vector<16x1xf32>
    %484 = arith.index_cast %arg1 : i32 to index
    %c0_393 = arith.constant 0 : index
    %c32 = arith.constant 32 : index
    %485 = vector.load %arg7[%484, %c0_393, %c32] : memref<1x16x64xf32, #tpu.memory_space<vmem>>, vector<1x16x8xf32>
    %486 = vector.shape_cast %485 : vector<1x16x8xf32> to vector<16x8xf32>
    %487 = vector.shape_cast %476 : vector<16x8xf32> to vector<1x16x8xf32>
    tpu.vector_store %arg7[%484, %c0_393, %c32], %487 {strides = array<i32>} : memref<1x16x64xf32, #tpu.memory_space<vmem>>, vector<1x16x8xf32>,
    %cst_394 = arith.constant 0.000000e+00 : f32
    %488 = vector.broadcast %cst_394 : f32 to vector<16x8xf32>
    %c8_i32_395 = arith.constant 8 : i32
    %489 = arith.muli %arg1, %c8_i32_395 : i32
    %c0_i32_396 = arith.constant 0 : i32
    %490 = arith.addi %c0_i32_396, %489 : i32
    %c5_i32 = arith.constant 5 : i32
    %491 = arith.addi %490, %c5_i32 : i32
    %c0_i32_397 = arith.constant 0 : i32
    %492 = arith.addi %491, %c0_i32_397 : i32
    %c0_398 = arith.constant 0 : index
    %493 = arith.index_cast %492 : i32 to index
    %c0_399 = arith.constant 0 : index
    %c0_400 = arith.constant 0 : index
    %494 = vector.load %arg2[%c0_398, %493, %c0_399, %c0_400] : memref<1x36x4x9xbf16, #tpu.memory_space<vmem>>, vector<1x1x4x8xbf16>
    %495 = vector.shape_cast %494 : vector<1x1x4x8xbf16> to vector<4x8xbf16>
    %cst_401 = arith.constant dense<0.000000e+00> : vector<16x8xf32>
    %496 = tpu.matmul %4, %495, %cst_401 {dimension_numbers = #tpu.dot_dimension_numbers<[1], [0], [0], [1], [0, 0, 1, 1], [], []>} : vector<16x4xbf16>, vector<4x8xbf16>, vector<16x8xf32> -> vector<16x8xf32>
    %497 = arith.addf %488, %496 : vector<16x8xf32>
    %c8_i32_402 = arith.constant 8 : i32
    %498 = arith.muli %arg1, %c8_i32_402 : i32
    %c9_i32_403 = arith.constant 9 : i32
    %499 = arith.addi %c9_i32_403, %498 : i32
    %c5_i32_404 = arith.constant 5 : i32
    %500 = arith.addi %499, %c5_i32_404 : i32
    %c0_i32_405 = arith.constant 0 : i32
    %501 = arith.addi %500, %c0_i32_405 : i32
    %c0_406 = arith.constant 0 : index
    %502 = arith.index_cast %501 : i32 to index
    %c0_407 = arith.constant 0 : index
    %c0_408 = arith.constant 0 : index
    %503 = vector.load %arg2[%c0_406, %502, %c0_407, %c0_408] : memref<1x36x4x9xbf16, #tpu.memory_space<vmem>>, vector<1x1x4x8xbf16>
    %504 = vector.shape_cast %503 : vector<1x1x4x8xbf16> to vector<4x8xbf16>
    %cst_409 = arith.constant dense<0.000000e+00> : vector<16x8xf32>
    %505 = tpu.matmul %6, %504, %cst_409 {dimension_numbers = #tpu.dot_dimension_numbers<[1], [0], [0], [1], [0, 0, 1, 1], [], []>} : vector<16x4xbf16>, vector<4x8xbf16>, vector<16x8xf32> -> vector<16x8xf32>
    %506 = arith.addf %497, %505 : vector<16x8xf32>
    %c8_i32_410 = arith.constant 8 : i32
    %507 = arith.muli %arg1, %c8_i32_410 : i32
    %c0_i32_411 = arith.constant 0 : i32
    %508 = arith.addi %c0_i32_411, %507 : i32
    %c5_i32_412 = arith.constant 5 : i32
    %509 = arith.addi %508, %c5_i32_412 : i32
    %c0_i32_413 = arith.constant 0 : i32
    %510 = arith.addi %509, %c0_i32_413 : i32
    %c0_414 = arith.constant 0 : index
    %511 = arith.index_cast %510 : i32 to index
    %c0_415 = arith.constant 0 : index
    %c1_416 = arith.constant 1 : index
    %512 = vector.load %arg2[%c0_414, %511, %c0_415, %c1_416] : memref<1x36x4x9xbf16, #tpu.memory_space<vmem>>, vector<1x1x4x8xbf16>
    %513 = vector.shape_cast %512 : vector<1x1x4x8xbf16> to vector<4x8xbf16>
    %cst_417 = arith.constant dense<0.000000e+00> : vector<16x8xf32>
    %514 = tpu.matmul %8, %513, %cst_417 {dimension_numbers = #tpu.dot_dimension_numbers<[1], [0], [0], [1], [0, 0, 1, 1], [], []>} : vector<16x4xbf16>, vector<4x8xbf16>, vector<16x8xf32> -> vector<16x8xf32>
    %515 = arith.addf %506, %514 : vector<16x8xf32>
    %c8_i32_418 = arith.constant 8 : i32
    %516 = arith.muli %arg1, %c8_i32_418 : i32
    %c18_i32_419 = arith.constant 18 : i32
    %517 = arith.addi %c18_i32_419, %516 : i32
    %c5_i32_420 = arith.constant 5 : i32
    %518 = arith.addi %517, %c5_i32_420 : i32
    %c0_i32_421 = arith.constant 0 : i32
    %519 = arith.addi %518, %c0_i32_421 : i32
    %c0_422 = arith.constant 0 : index
    %520 = arith.index_cast %519 : i32 to index
    %c0_423 = arith.constant 0 : index
    %c0_424 = arith.constant 0 : index
    %521 = vector.load %arg2[%c0_422, %520, %c0_423, %c0_424] : memref<1x36x4x9xbf16, #tpu.memory_space<vmem>>, vector<1x1x4x8xbf16>
    %522 = vector.shape_cast %521 : vector<1x1x4x8xbf16> to vector<4x8xbf16>
    %cst_425 = arith.constant dense<0.000000e+00> : vector<16x8xf32>
    %523 = tpu.matmul %10, %522, %cst_425 {dimension_numbers = #tpu.dot_dimension_numbers<[1], [0], [0], [1], [0, 0, 1, 1], [], []>} : vector<16x4xbf16>, vector<4x8xbf16>, vector<16x8xf32> -> vector<16x8xf32>
    %524 = arith.addf %515, %523 : vector<16x8xf32>
    %c8_i32_426 = arith.constant 8 : i32
    %525 = arith.muli %arg1, %c8_i32_426 : i32
    %c27_i32_427 = arith.constant 27 : i32
    %526 = arith.addi %c27_i32_427, %525 : i32
    %c5_i32_428 = arith.constant 5 : i32
    %527 = arith.addi %526, %c5_i32_428 : i32
    %c0_i32_429 = arith.constant 0 : i32
    %528 = arith.addi %527, %c0_i32_429 : i32
    %c0_430 = arith.constant 0 : index
    %529 = arith.index_cast %528 : i32 to index
    %c0_431 = arith.constant 0 : index
    %c0_432 = arith.constant 0 : index
    %530 = vector.load %arg2[%c0_430, %529, %c0_431, %c0_432] : memref<1x36x4x9xbf16, #tpu.memory_space<vmem>>, vector<1x1x4x8xbf16>
    %531 = vector.shape_cast %530 : vector<1x1x4x8xbf16> to vector<4x8xbf16>
    %cst_433 = arith.constant dense<0.000000e+00> : vector<16x8xf32>
    %532 = tpu.matmul %12, %531, %cst_433 {dimension_numbers = #tpu.dot_dimension_numbers<[1], [0], [0], [1], [0, 0, 1, 1], [], []>} : vector<16x4xbf16>, vector<4x8xbf16>, vector<16x8xf32> -> vector<16x8xf32>
    %533 = arith.addf %524, %532 : vector<16x8xf32>
    %c8_i32_434 = arith.constant 8 : i32
    %534 = arith.muli %arg1, %c8_i32_434 : i32
    %c18_i32_435 = arith.constant 18 : i32
    %535 = arith.addi %c18_i32_435, %534 : i32
    %c5_i32_436 = arith.constant 5 : i32
    %536 = arith.addi %535, %c5_i32_436 : i32
    %c0_i32_437 = arith.constant 0 : i32
    %537 = arith.addi %536, %c0_i32_437 : i32
    %c0_438 = arith.constant 0 : index
    %538 = arith.index_cast %537 : i32 to index
    %c0_439 = arith.constant 0 : index
    %c1_440 = arith.constant 1 : index
    %539 = vector.load %arg2[%c0_438, %538, %c0_439, %c1_440] : memref<1x36x4x9xbf16, #tpu.memory_space<vmem>>, vector<1x1x4x8xbf16>
    %540 = vector.shape_cast %539 : vector<1x1x4x8xbf16> to vector<4x8xbf16>
    %cst_441 = arith.constant dense<0.000000e+00> : vector<16x8xf32>
    %541 = tpu.matmul %14, %540, %cst_441 {dimension_numbers = #tpu.dot_dimension_numbers<[1], [0], [0], [1], [0, 0, 1, 1], [], []>} : vector<16x4xbf16>, vector<4x8xbf16>, vector<16x8xf32> -> vector<16x8xf32>
    %542 = arith.addf %533, %541 : vector<16x8xf32>
    %c8_i32_442 = arith.constant 8 : i32
    %543 = arith.muli %arg1, %c8_i32_442 : i32
    %c0_i32_443 = arith.constant 0 : i32
    %544 = arith.addi %c0_i32_443, %543 : i32
    %c5_i32_444 = arith.constant 5 : i32
    %545 = arith.addi %544, %c5_i32_444 : i32
    %c1_i32_445 = arith.constant 1 : i32
    %546 = arith.addi %545, %c1_i32_445 : i32
    %c0_446 = arith.constant 0 : index
    %547 = arith.index_cast %546 : i32 to index
    %c0_447 = arith.constant 0 : index
    %c0_448 = arith.constant 0 : index
    %548 = vector.load %arg2[%c0_446, %547, %c0_447, %c0_448] : memref<1x36x4x9xbf16, #tpu.memory_space<vmem>>, vector<1x1x4x8xbf16>
    %549 = vector.shape_cast %548 : vector<1x1x4x8xbf16> to vector<4x8xbf16>
    %cst_449 = arith.constant dense<0.000000e+00> : vector<16x8xf32>
    %550 = tpu.matmul %16, %549, %cst_449 {dimension_numbers = #tpu.dot_dimension_numbers<[1], [0], [0], [1], [0, 0, 1, 1], [], []>} : vector<16x4xbf16>, vector<4x8xbf16>, vector<16x8xf32> -> vector<16x8xf32>
    %551 = arith.addf %542, %550 : vector<16x8xf32>
    %c8_i32_450 = arith.constant 8 : i32
    %552 = arith.muli %arg1, %c8_i32_450 : i32
    %c9_i32_451 = arith.constant 9 : i32
    %553 = arith.addi %c9_i32_451, %552 : i32
    %c5_i32_452 = arith.constant 5 : i32
    %554 = arith.addi %553, %c5_i32_452 : i32
    %c1_i32_453 = arith.constant 1 : i32
    %555 = arith.addi %554, %c1_i32_453 : i32
    %c0_454 = arith.constant 0 : index
    %556 = arith.index_cast %555 : i32 to index
    %c0_455 = arith.constant 0 : index
    %c0_456 = arith.constant 0 : index
    %557 = vector.load %arg2[%c0_454, %556, %c0_455, %c0_456] : memref<1x36x4x9xbf16, #tpu.memory_space<vmem>>, vector<1x1x4x8xbf16>
    %558 = vector.shape_cast %557 : vector<1x1x4x8xbf16> to vector<4x8xbf16>
    %cst_457 = arith.constant dense<0.000000e+00> : vector<16x8xf32>
    %559 = tpu.matmul %18, %558, %cst_457 {dimension_numbers = #tpu.dot_dimension_numbers<[1], [0], [0], [1], [0, 0, 1, 1], [], []>} : vector<16x4xbf16>, vector<4x8xbf16>, vector<16x8xf32> -> vector<16x8xf32>
    %560 = arith.addf %551, %559 : vector<16x8xf32>
    %c8_i32_458 = arith.constant 8 : i32
    %561 = arith.muli %arg1, %c8_i32_458 : i32
    %c0_i32_459 = arith.constant 0 : i32
    %562 = arith.addi %c0_i32_459, %561 : i32
    %c5_i32_460 = arith.constant 5 : i32
    %563 = arith.addi %562, %c5_i32_460 : i32
    %c1_i32_461 = arith.constant 1 : i32
    %564 = arith.addi %563, %c1_i32_461 : i32
    %c0_462 = arith.constant 0 : index
    %565 = arith.index_cast %564 : i32 to index
    %c0_463 = arith.constant 0 : index
    %c1_464 = arith.constant 1 : index
    %566 = vector.load %arg2[%c0_462, %565, %c0_463, %c1_464] : memref<1x36x4x9xbf16, #tpu.memory_space<vmem>>, vector<1x1x4x8xbf16>
    %567 = vector.shape_cast %566 : vector<1x1x4x8xbf16> to vector<4x8xbf16>
    %cst_465 = arith.constant dense<0.000000e+00> : vector<16x8xf32>
    %568 = tpu.matmul %20, %567, %cst_465 {dimension_numbers = #tpu.dot_dimension_numbers<[1], [0], [0], [1], [0, 0, 1, 1], [], []>} : vector<16x4xbf16>, vector<4x8xbf16>, vector<16x8xf32> -> vector<16x8xf32>
    %569 = arith.addf %560, %568 : vector<16x8xf32>
    %cst_466 = arith.constant dense<0.000000e+00> : vector<16xf32>
    %570 = vector.multi_reduction <add>, %569, %cst_466 [1] : vector<16x8xf32> to vector<16xf32>
    %571 = vector.shape_cast %570 : vector<16xf32> to vector<16x1xf32>
    %572 = arith.addf %479, %571 : vector<16x1xf32>
    %573 = arith.mulf %569, %569 : vector<16x8xf32>
    %cst_467 = arith.constant dense<0.000000e+00> : vector<16xf32>
    %574 = vector.multi_reduction <add>, %573, %cst_467 [1] : vector<16x8xf32> to vector<16xf32>
    %575 = vector.shape_cast %574 : vector<16xf32> to vector<16x1xf32>
    %576 = arith.addf %483, %575 : vector<16x1xf32>
    %577 = arith.index_cast %arg1 : i32 to index
    %c0_468 = arith.constant 0 : index
    %c40 = arith.constant 40 : index
    %578 = vector.load %arg7[%577, %c0_468, %c40] : memref<1x16x64xf32, #tpu.memory_space<vmem>>, vector<1x16x8xf32>
    %579 = vector.shape_cast %578 : vector<1x16x8xf32> to vector<16x8xf32>
    %580 = vector.shape_cast %569 : vector<16x8xf32> to vector<1x16x8xf32>
    tpu.vector_store %arg7[%577, %c0_468, %c40], %580 {strides = array<i32>} : memref<1x16x64xf32, #tpu.memory_space<vmem>>, vector<1x16x8xf32>,
    %cst_469 = arith.constant 0.000000e+00 : f32
    %581 = vector.broadcast %cst_469 : f32 to vector<16x8xf32>
    %c8_i32_470 = arith.constant 8 : i32
    %582 = arith.muli %arg1, %c8_i32_470 : i32
    %c0_i32_471 = arith.constant 0 : i32
    %583 = arith.addi %c0_i32_471, %582 : i32
    %c6_i32 = arith.constant 6 : i32
    %584 = arith.addi %583, %c6_i32 : i32
    %c0_i32_472 = arith.constant 0 : i32
    %585 = arith.addi %584, %c0_i32_472 : i32
    %c0_473 = arith.constant 0 : index
    %586 = arith.index_cast %585 : i32 to index
    %c0_474 = arith.constant 0 : index
    %c0_475 = arith.constant 0 : index
    %587 = vector.load %arg2[%c0_473, %586, %c0_474, %c0_475] : memref<1x36x4x9xbf16, #tpu.memory_space<vmem>>, vector<1x1x4x8xbf16>
    %588 = vector.shape_cast %587 : vector<1x1x4x8xbf16> to vector<4x8xbf16>
    %cst_476 = arith.constant dense<0.000000e+00> : vector<16x8xf32>
    %589 = tpu.matmul %4, %588, %cst_476 {dimension_numbers = #tpu.dot_dimension_numbers<[1], [0], [0], [1], [0, 0, 1, 1], [], []>} : vector<16x4xbf16>, vector<4x8xbf16>, vector<16x8xf32> -> vector<16x8xf32>
    %590 = arith.addf %581, %589 : vector<16x8xf32>
    %c8_i32_477 = arith.constant 8 : i32
    %591 = arith.muli %arg1, %c8_i32_477 : i32
    %c9_i32_478 = arith.constant 9 : i32
    %592 = arith.addi %c9_i32_478, %591 : i32
    %c6_i32_479 = arith.constant 6 : i32
    %593 = arith.addi %592, %c6_i32_479 : i32
    %c0_i32_480 = arith.constant 0 : i32
    %594 = arith.addi %593, %c0_i32_480 : i32
    %c0_481 = arith.constant 0 : index
    %595 = arith.index_cast %594 : i32 to index
    %c0_482 = arith.constant 0 : index
    %c0_483 = arith.constant 0 : index
    %596 = vector.load %arg2[%c0_481, %595, %c0_482, %c0_483] : memref<1x36x4x9xbf16, #tpu.memory_space<vmem>>, vector<1x1x4x8xbf16>
    %597 = vector.shape_cast %596 : vector<1x1x4x8xbf16> to vector<4x8xbf16>
    %cst_484 = arith.constant dense<0.000000e+00> : vector<16x8xf32>
    %598 = tpu.matmul %6, %597, %cst_484 {dimension_numbers = #tpu.dot_dimension_numbers<[1], [0], [0], [1], [0, 0, 1, 1], [], []>} : vector<16x4xbf16>, vector<4x8xbf16>, vector<16x8xf32> -> vector<16x8xf32>
    %599 = arith.addf %590, %598 : vector<16x8xf32>
    %c8_i32_485 = arith.constant 8 : i32
    %600 = arith.muli %arg1, %c8_i32_485 : i32
    %c0_i32_486 = arith.constant 0 : i32
    %601 = arith.addi %c0_i32_486, %600 : i32
    %c6_i32_487 = arith.constant 6 : i32
    %602 = arith.addi %601, %c6_i32_487 : i32
    %c0_i32_488 = arith.constant 0 : i32
    %603 = arith.addi %602, %c0_i32_488 : i32
    %c0_489 = arith.constant 0 : index
    %604 = arith.index_cast %603 : i32 to index
    %c0_490 = arith.constant 0 : index
    %c1_491 = arith.constant 1 : index
    %605 = vector.load %arg2[%c0_489, %604, %c0_490, %c1_491] : memref<1x36x4x9xbf16, #tpu.memory_space<vmem>>, vector<1x1x4x8xbf16>
    %606 = vector.shape_cast %605 : vector<1x1x4x8xbf16> to vector<4x8xbf16>
    %cst_492 = arith.constant dense<0.000000e+00> : vector<16x8xf32>
    %607 = tpu.matmul %8, %606, %cst_492 {dimension_numbers = #tpu.dot_dimension_numbers<[1], [0], [0], [1], [0, 0, 1, 1], [], []>} : vector<16x4xbf16>, vector<4x8xbf16>, vector<16x8xf32> -> vector<16x8xf32>
    %608 = arith.addf %599, %607 : vector<16x8xf32>
    %c8_i32_493 = arith.constant 8 : i32
    %609 = arith.muli %arg1, %c8_i32_493 : i32
    %c18_i32_494 = arith.constant 18 : i32
    %610 = arith.addi %c18_i32_494, %609 : i32
    %c6_i32_495 = arith.constant 6 : i32
    %611 = arith.addi %610, %c6_i32_495 : i32
    %c0_i32_496 = arith.constant 0 : i32
    %612 = arith.addi %611, %c0_i32_496 : i32
    %c0_497 = arith.constant 0 : index
    %613 = arith.index_cast %612 : i32 to index
    %c0_498 = arith.constant 0 : index
    %c0_499 = arith.constant 0 : index
    %614 = vector.load %arg2[%c0_497, %613, %c0_498, %c0_499] : memref<1x36x4x9xbf16, #tpu.memory_space<vmem>>, vector<1x1x4x8xbf16>
    %615 = vector.shape_cast %614 : vector<1x1x4x8xbf16> to vector<4x8xbf16>
    %cst_500 = arith.constant dense<0.000000e+00> : vector<16x8xf32>
    %616 = tpu.matmul %10, %615, %cst_500 {dimension_numbers = #tpu.dot_dimension_numbers<[1], [0], [0], [1], [0, 0, 1, 1], [], []>} : vector<16x4xbf16>, vector<4x8xbf16>, vector<16x8xf32> -> vector<16x8xf32>
    %617 = arith.addf %608, %616 : vector<16x8xf32>
    %c8_i32_501 = arith.constant 8 : i32
    %618 = arith.muli %arg1, %c8_i32_501 : i32
    %c27_i32_502 = arith.constant 27 : i32
    %619 = arith.addi %c27_i32_502, %618 : i32
    %c6_i32_503 = arith.constant 6 : i32
    %620 = arith.addi %619, %c6_i32_503 : i32
    %c0_i32_504 = arith.constant 0 : i32
    %621 = arith.addi %620, %c0_i32_504 : i32
    %c0_505 = arith.constant 0 : index
    %622 = arith.index_cast %621 : i32 to index
    %c0_506 = arith.constant 0 : index
    %c0_507 = arith.constant 0 : index
    %623 = vector.load %arg2[%c0_505, %622, %c0_506, %c0_507] : memref<1x36x4x9xbf16, #tpu.memory_space<vmem>>, vector<1x1x4x8xbf16>
    %624 = vector.shape_cast %623 : vector<1x1x4x8xbf16> to vector<4x8xbf16>
    %cst_508 = arith.constant dense<0.000000e+00> : vector<16x8xf32>
    %625 = tpu.matmul %12, %624, %cst_508 {dimension_numbers = #tpu.dot_dimension_numbers<[1], [0], [0], [1], [0, 0, 1, 1], [], []>} : vector<16x4xbf16>, vector<4x8xbf16>, vector<16x8xf32> -> vector<16x8xf32>
    %626 = arith.addf %617, %625 : vector<16x8xf32>
    %c8_i32_509 = arith.constant 8 : i32
    %627 = arith.muli %arg1, %c8_i32_509 : i32
    %c18_i32_510 = arith.constant 18 : i32
    %628 = arith.addi %c18_i32_510, %627 : i32
    %c6_i32_511 = arith.constant 6 : i32
    %629 = arith.addi %628, %c6_i32_511 : i32
    %c0_i32_512 = arith.constant 0 : i32
    %630 = arith.addi %629, %c0_i32_512 : i32
    %c0_513 = arith.constant 0 : index
    %631 = arith.index_cast %630 : i32 to index
    %c0_514 = arith.constant 0 : index
    %c1_515 = arith.constant 1 : index
    %632 = vector.load %arg2[%c0_513, %631, %c0_514, %c1_515] : memref<1x36x4x9xbf16, #tpu.memory_space<vmem>>, vector<1x1x4x8xbf16>
    %633 = vector.shape_cast %632 : vector<1x1x4x8xbf16> to vector<4x8xbf16>
    %cst_516 = arith.constant dense<0.000000e+00> : vector<16x8xf32>
    %634 = tpu.matmul %14, %633, %cst_516 {dimension_numbers = #tpu.dot_dimension_numbers<[1], [0], [0], [1], [0, 0, 1, 1], [], []>} : vector<16x4xbf16>, vector<4x8xbf16>, vector<16x8xf32> -> vector<16x8xf32>
    %635 = arith.addf %626, %634 : vector<16x8xf32>
    %c8_i32_517 = arith.constant 8 : i32
    %636 = arith.muli %arg1, %c8_i32_517 : i32
    %c0_i32_518 = arith.constant 0 : i32
    %637 = arith.addi %c0_i32_518, %636 : i32
    %c6_i32_519 = arith.constant 6 : i32
    %638 = arith.addi %637, %c6_i32_519 : i32
    %c1_i32_520 = arith.constant 1 : i32
    %639 = arith.addi %638, %c1_i32_520 : i32
    %c0_521 = arith.constant 0 : index
    %640 = arith.index_cast %639 : i32 to index
    %c0_522 = arith.constant 0 : index
    %c0_523 = arith.constant 0 : index
    %641 = vector.load %arg2[%c0_521, %640, %c0_522, %c0_523] : memref<1x36x4x9xbf16, #tpu.memory_space<vmem>>, vector<1x1x4x8xbf16>
    %642 = vector.shape_cast %641 : vector<1x1x4x8xbf16> to vector<4x8xbf16>
    %cst_524 = arith.constant dense<0.000000e+00> : vector<16x8xf32>
    %643 = tpu.matmul %16, %642, %cst_524 {dimension_numbers = #tpu.dot_dimension_numbers<[1], [0], [0], [1], [0, 0, 1, 1], [], []>} : vector<16x4xbf16>, vector<4x8xbf16>, vector<16x8xf32> -> vector<16x8xf32>
    %644 = arith.addf %635, %643 : vector<16x8xf32>
    %c8_i32_525 = arith.constant 8 : i32
    %645 = arith.muli %arg1, %c8_i32_525 : i32
    %c9_i32_526 = arith.constant 9 : i32
    %646 = arith.addi %c9_i32_526, %645 : i32
    %c6_i32_527 = arith.constant 6 : i32
    %647 = arith.addi %646, %c6_i32_527 : i32
    %c1_i32_528 = arith.constant 1 : i32
    %648 = arith.addi %647, %c1_i32_528 : i32
    %c0_529 = arith.constant 0 : index
    %649 = arith.index_cast %648 : i32 to index
    %c0_530 = arith.constant 0 : index
    %c0_531 = arith.constant 0 : index
    %650 = vector.load %arg2[%c0_529, %649, %c0_530, %c0_531] : memref<1x36x4x9xbf16, #tpu.memory_space<vmem>>, vector<1x1x4x8xbf16>
    %651 = vector.shape_cast %650 : vector<1x1x4x8xbf16> to vector<4x8xbf16>
    %cst_532 = arith.constant dense<0.000000e+00> : vector<16x8xf32>
    %652 = tpu.matmul %18, %651, %cst_532 {dimension_numbers = #tpu.dot_dimension_numbers<[1], [0], [0], [1], [0, 0, 1, 1], [], []>} : vector<16x4xbf16>, vector<4x8xbf16>, vector<16x8xf32> -> vector<16x8xf32>
    %653 = arith.addf %644, %652 : vector<16x8xf32>
    %c8_i32_533 = arith.constant 8 : i32
    %654 = arith.muli %arg1, %c8_i32_533 : i32
    %c0_i32_534 = arith.constant 0 : i32
    %655 = arith.addi %c0_i32_534, %654 : i32
    %c6_i32_535 = arith.constant 6 : i32
    %656 = arith.addi %655, %c6_i32_535 : i32
    %c1_i32_536 = arith.constant 1 : i32
    %657 = arith.addi %656, %c1_i32_536 : i32
    %c0_537 = arith.constant 0 : index
    %658 = arith.index_cast %657 : i32 to index
    %c0_538 = arith.constant 0 : index
    %c1_539 = arith.constant 1 : index
    %659 = vector.load %arg2[%c0_537, %658, %c0_538, %c1_539] : memref<1x36x4x9xbf16, #tpu.memory_space<vmem>>, vector<1x1x4x8xbf16>
    %660 = vector.shape_cast %659 : vector<1x1x4x8xbf16> to vector<4x8xbf16>
    %cst_540 = arith.constant dense<0.000000e+00> : vector<16x8xf32>
    %661 = tpu.matmul %20, %660, %cst_540 {dimension_numbers = #tpu.dot_dimension_numbers<[1], [0], [0], [1], [0, 0, 1, 1], [], []>} : vector<16x4xbf16>, vector<4x8xbf16>, vector<16x8xf32> -> vector<16x8xf32>
    %662 = arith.addf %653, %661 : vector<16x8xf32>
    %cst_541 = arith.constant dense<0.000000e+00> : vector<16xf32>
    %663 = vector.multi_reduction <add>, %662, %cst_541 [1] : vector<16x8xf32> to vector<16xf32>
    %664 = vector.shape_cast %663 : vector<16xf32> to vector<16x1xf32>
    %665 = arith.addf %572, %664 : vector<16x1xf32>
    %666 = arith.mulf %662, %662 : vector<16x8xf32>
    %cst_542 = arith.constant dense<0.000000e+00> : vector<16xf32>
    %667 = vector.multi_reduction <add>, %666, %cst_542 [1] : vector<16x8xf32> to vector<16xf32>
    %668 = vector.shape_cast %667 : vector<16xf32> to vector<16x1xf32>
    %669 = arith.addf %576, %668 : vector<16x1xf32>
    %670 = arith.index_cast %arg1 : i32 to index
    %c0_543 = arith.constant 0 : index
    %c48 = arith.constant 48 : index
    %671 = vector.load %arg7[%670, %c0_543, %c48] : memref<1x16x64xf32, #tpu.memory_space<vmem>>, vector<1x16x8xf32>
    %672 = vector.shape_cast %671 : vector<1x16x8xf32> to vector<16x8xf32>
    %673 = vector.shape_cast %662 : vector<16x8xf32> to vector<1x16x8xf32>
    tpu.vector_store %arg7[%670, %c0_543, %c48], %673 {strides = array<i32>} : memref<1x16x64xf32, #tpu.memory_space<vmem>>, vector<1x16x8xf32>,
    %cst_544 = arith.constant 0.000000e+00 : f32
    %674 = vector.broadcast %cst_544 : f32 to vector<16x8xf32>
    %c8_i32_545 = arith.constant 8 : i32
    %675 = arith.muli %arg1, %c8_i32_545 : i32
    %c0_i32_546 = arith.constant 0 : i32
    %676 = arith.addi %c0_i32_546, %675 : i32
    %c7_i32 = arith.constant 7 : i32
    %677 = arith.addi %676, %c7_i32 : i32
    %c0_i32_547 = arith.constant 0 : i32
    %678 = arith.addi %677, %c0_i32_547 : i32
    %c0_548 = arith.constant 0 : index
    %679 = arith.index_cast %678 : i32 to index
    %c0_549 = arith.constant 0 : index
    %c0_550 = arith.constant 0 : index
    %680 = vector.load %arg2[%c0_548, %679, %c0_549, %c0_550] : memref<1x36x4x9xbf16, #tpu.memory_space<vmem>>, vector<1x1x4x8xbf16>
    %681 = vector.shape_cast %680 : vector<1x1x4x8xbf16> to vector<4x8xbf16>
    %cst_551 = arith.constant dense<0.000000e+00> : vector<16x8xf32>
    %682 = tpu.matmul %4, %681, %cst_551 {dimension_numbers = #tpu.dot_dimension_numbers<[1], [0], [0], [1], [0, 0, 1, 1], [], []>} : vector<16x4xbf16>, vector<4x8xbf16>, vector<16x8xf32> -> vector<16x8xf32>
    %683 = arith.addf %674, %682 : vector<16x8xf32>
    %c8_i32_552 = arith.constant 8 : i32
    %684 = arith.muli %arg1, %c8_i32_552 : i32
    %c9_i32_553 = arith.constant 9 : i32
    %685 = arith.addi %c9_i32_553, %684 : i32
    %c7_i32_554 = arith.constant 7 : i32
    %686 = arith.addi %685, %c7_i32_554 : i32
    %c0_i32_555 = arith.constant 0 : i32
    %687 = arith.addi %686, %c0_i32_555 : i32
    %c0_556 = arith.constant 0 : index
    %688 = arith.index_cast %687 : i32 to index
    %c0_557 = arith.constant 0 : index
    %c0_558 = arith.constant 0 : index
    %689 = vector.load %arg2[%c0_556, %688, %c0_557, %c0_558] : memref<1x36x4x9xbf16, #tpu.memory_space<vmem>>, vector<1x1x4x8xbf16>
    %690 = vector.shape_cast %689 : vector<1x1x4x8xbf16> to vector<4x8xbf16>
    %cst_559 = arith.constant dense<0.000000e+00> : vector<16x8xf32>
    %691 = tpu.matmul %6, %690, %cst_559 {dimension_numbers = #tpu.dot_dimension_numbers<[1], [0], [0], [1], [0, 0, 1, 1], [], []>} : vector<16x4xbf16>, vector<4x8xbf16>, vector<16x8xf32> -> vector<16x8xf32>
    %692 = arith.addf %683, %691 : vector<16x8xf32>
    %c8_i32_560 = arith.constant 8 : i32
    %693 = arith.muli %arg1, %c8_i32_560 : i32
    %c0_i32_561 = arith.constant 0 : i32
    %694 = arith.addi %c0_i32_561, %693 : i32
    %c7_i32_562 = arith.constant 7 : i32
    %695 = arith.addi %694, %c7_i32_562 : i32
    %c0_i32_563 = arith.constant 0 : i32
    %696 = arith.addi %695, %c0_i32_563 : i32
    %c0_564 = arith.constant 0 : index
    %697 = arith.index_cast %696 : i32 to index
    %c0_565 = arith.constant 0 : index
    %c1_566 = arith.constant 1 : index
    %698 = vector.load %arg2[%c0_564, %697, %c0_565, %c1_566] : memref<1x36x4x9xbf16, #tpu.memory_space<vmem>>, vector<1x1x4x8xbf16>
    %699 = vector.shape_cast %698 : vector<1x1x4x8xbf16> to vector<4x8xbf16>
    %cst_567 = arith.constant dense<0.000000e+00> : vector<16x8xf32>
    %700 = tpu.matmul %8, %699, %cst_567 {dimension_numbers = #tpu.dot_dimension_numbers<[1], [0], [0], [1], [0, 0, 1, 1], [], []>} : vector<16x4xbf16>, vector<4x8xbf16>, vector<16x8xf32> -> vector<16x8xf32>
    %701 = arith.addf %692, %700 : vector<16x8xf32>
    %c8_i32_568 = arith.constant 8 : i32
    %702 = arith.muli %arg1, %c8_i32_568 : i32
    %c18_i32_569 = arith.constant 18 : i32
    %703 = arith.addi %c18_i32_569, %702 : i32
    %c7_i32_570 = arith.constant 7 : i32
    %704 = arith.addi %703, %c7_i32_570 : i32
    %c0_i32_571 = arith.constant 0 : i32
    %705 = arith.addi %704, %c0_i32_571 : i32
    %c0_572 = arith.constant 0 : index
    %706 = arith.index_cast %705 : i32 to index
    %c0_573 = arith.constant 0 : index
    %c0_574 = arith.constant 0 : index
    %707 = vector.load %arg2[%c0_572, %706, %c0_573, %c0_574] : memref<1x36x4x9xbf16, #tpu.memory_space<vmem>>, vector<1x1x4x8xbf16>
    %708 = vector.shape_cast %707 : vector<1x1x4x8xbf16> to vector<4x8xbf16>
    %cst_575 = arith.constant dense<0.000000e+00> : vector<16x8xf32>
    %709 = tpu.matmul %10, %708, %cst_575 {dimension_numbers = #tpu.dot_dimension_numbers<[1], [0], [0], [1], [0, 0, 1, 1], [], []>} : vector<16x4xbf16>, vector<4x8xbf16>, vector<16x8xf32> -> vector<16x8xf32>
    %710 = arith.addf %701, %709 : vector<16x8xf32>
    %c8_i32_576 = arith.constant 8 : i32
    %711 = arith.muli %arg1, %c8_i32_576 : i32
    %c27_i32_577 = arith.constant 27 : i32
    %712 = arith.addi %c27_i32_577, %711 : i32
    %c7_i32_578 = arith.constant 7 : i32
    %713 = arith.addi %712, %c7_i32_578 : i32
    %c0_i32_579 = arith.constant 0 : i32
    %714 = arith.addi %713, %c0_i32_579 : i32
    %c0_580 = arith.constant 0 : index
    %715 = arith.index_cast %714 : i32 to index
    %c0_581 = arith.constant 0 : index
    %c0_582 = arith.constant 0 : index
    %716 = vector.load %arg2[%c0_580, %715, %c0_581, %c0_582] : memref<1x36x4x9xbf16, #tpu.memory_space<vmem>>, vector<1x1x4x8xbf16>
    %717 = vector.shape_cast %716 : vector<1x1x4x8xbf16> to vector<4x8xbf16>
    %cst_583 = arith.constant dense<0.000000e+00> : vector<16x8xf32>
    %718 = tpu.matmul %12, %717, %cst_583 {dimension_numbers = #tpu.dot_dimension_numbers<[1], [0], [0], [1], [0, 0, 1, 1], [], []>} : vector<16x4xbf16>, vector<4x8xbf16>, vector<16x8xf32> -> vector<16x8xf32>
    %719 = arith.addf %710, %718 : vector<16x8xf32>
    %c8_i32_584 = arith.constant 8 : i32
    %720 = arith.muli %arg1, %c8_i32_584 : i32
    %c18_i32_585 = arith.constant 18 : i32
    %721 = arith.addi %c18_i32_585, %720 : i32
    %c7_i32_586 = arith.constant 7 : i32
    %722 = arith.addi %721, %c7_i32_586 : i32
    %c0_i32_587 = arith.constant 0 : i32
    %723 = arith.addi %722, %c0_i32_587 : i32
    %c0_588 = arith.constant 0 : index
    %724 = arith.index_cast %723 : i32 to index
    %c0_589 = arith.constant 0 : index
    %c1_590 = arith.constant 1 : index
    %725 = vector.load %arg2[%c0_588, %724, %c0_589, %c1_590] : memref<1x36x4x9xbf16, #tpu.memory_space<vmem>>, vector<1x1x4x8xbf16>
    %726 = vector.shape_cast %725 : vector<1x1x4x8xbf16> to vector<4x8xbf16>
    %cst_591 = arith.constant dense<0.000000e+00> : vector<16x8xf32>
    %727 = tpu.matmul %14, %726, %cst_591 {dimension_numbers = #tpu.dot_dimension_numbers<[1], [0], [0], [1], [0, 0, 1, 1], [], []>} : vector<16x4xbf16>, vector<4x8xbf16>, vector<16x8xf32> -> vector<16x8xf32>
    %728 = arith.addf %719, %727 : vector<16x8xf32>
    %c8_i32_592 = arith.constant 8 : i32
    %729 = arith.muli %arg1, %c8_i32_592 : i32
    %c0_i32_593 = arith.constant 0 : i32
    %730 = arith.addi %c0_i32_593, %729 : i32
    %c7_i32_594 = arith.constant 7 : i32
    %731 = arith.addi %730, %c7_i32_594 : i32
    %c1_i32_595 = arith.constant 1 : i32
    %732 = arith.addi %731, %c1_i32_595 : i32
    %c0_596 = arith.constant 0 : index
    %733 = arith.index_cast %732 : i32 to index
    %c0_597 = arith.constant 0 : index
    %c0_598 = arith.constant 0 : index
    %734 = vector.load %arg2[%c0_596, %733, %c0_597, %c0_598] : memref<1x36x4x9xbf16, #tpu.memory_space<vmem>>, vector<1x1x4x8xbf16>
    %735 = vector.shape_cast %734 : vector<1x1x4x8xbf16> to vector<4x8xbf16>
    %cst_599 = arith.constant dense<0.000000e+00> : vector<16x8xf32>
    %736 = tpu.matmul %16, %735, %cst_599 {dimension_numbers = #tpu.dot_dimension_numbers<[1], [0], [0], [1], [0, 0, 1, 1], [], []>} : vector<16x4xbf16>, vector<4x8xbf16>, vector<16x8xf32> -> vector<16x8xf32>
    %737 = arith.addf %728, %736 : vector<16x8xf32>
    %c8_i32_600 = arith.constant 8 : i32
    %738 = arith.muli %arg1, %c8_i32_600 : i32
    %c9_i32_601 = arith.constant 9 : i32
    %739 = arith.addi %c9_i32_601, %738 : i32
    %c7_i32_602 = arith.constant 7 : i32
    %740 = arith.addi %739, %c7_i32_602 : i32
    %c1_i32_603 = arith.constant 1 : i32
    %741 = arith.addi %740, %c1_i32_603 : i32
    %c0_604 = arith.constant 0 : index
    %742 = arith.index_cast %741 : i32 to index
    %c0_605 = arith.constant 0 : index
    %c0_606 = arith.constant 0 : index
    %743 = vector.load %arg2[%c0_604, %742, %c0_605, %c0_606] : memref<1x36x4x9xbf16, #tpu.memory_space<vmem>>, vector<1x1x4x8xbf16>
    %744 = vector.shape_cast %743 : vector<1x1x4x8xbf16> to vector<4x8xbf16>
    %cst_607 = arith.constant dense<0.000000e+00> : vector<16x8xf32>
    %745 = tpu.matmul %18, %744, %cst_607 {dimension_numbers = #tpu.dot_dimension_numbers<[1], [0], [0], [1], [0, 0, 1, 1], [], []>} : vector<16x4xbf16>, vector<4x8xbf16>, vector<16x8xf32> -> vector<16x8xf32>
    %746 = arith.addf %737, %745 : vector<16x8xf32>
    %c8_i32_608 = arith.constant 8 : i32
    %747 = arith.muli %arg1, %c8_i32_608 : i32
    %c0_i32_609 = arith.constant 0 : i32
    %748 = arith.addi %c0_i32_609, %747 : i32
    %c7_i32_610 = arith.constant 7 : i32
    %749 = arith.addi %748, %c7_i32_610 : i32
    %c1_i32_611 = arith.constant 1 : i32
    %750 = arith.addi %749, %c1_i32_611 : i32
    %c0_612 = arith.constant 0 : index
    %751 = arith.index_cast %750 : i32 to index
    %c0_613 = arith.constant 0 : index
    %c1_614 = arith.constant 1 : index
    %752 = vector.load %arg2[%c0_612, %751, %c0_613, %c1_614] : memref<1x36x4x9xbf16, #tpu.memory_space<vmem>>, vector<1x1x4x8xbf16>
    %753 = vector.shape_cast %752 : vector<1x1x4x8xbf16> to vector<4x8xbf16>
    %cst_615 = arith.constant dense<0.000000e+00> : vector<16x8xf32>
    %754 = tpu.matmul %20, %753, %cst_615 {dimension_numbers = #tpu.dot_dimension_numbers<[1], [0], [0], [1], [0, 0, 1, 1], [], []>} : vector<16x4xbf16>, vector<4x8xbf16>, vector<16x8xf32> -> vector<16x8xf32>
    %755 = arith.addf %746, %754 : vector<16x8xf32>
    %cst_616 = arith.constant dense<0.000000e+00> : vector<16xf32>
    %756 = vector.multi_reduction <add>, %755, %cst_616 [1] : vector<16x8xf32> to vector<16xf32>
    %757 = vector.shape_cast %756 : vector<16xf32> to vector<16x1xf32>
    %758 = arith.addf %665, %757 : vector<16x1xf32>
    %759 = arith.mulf %755, %755 : vector<16x8xf32>
    %cst_617 = arith.constant dense<0.000000e+00> : vector<16xf32>
    %760 = vector.multi_reduction <add>, %759, %cst_617 [1] : vector<16x8xf32> to vector<16xf32>
    %761 = vector.shape_cast %760 : vector<16xf32> to vector<16x1xf32>
    %762 = arith.addf %669, %761 : vector<16x1xf32>
    %763 = arith.index_cast %arg1 : i32 to index
    %c0_618 = arith.constant 0 : index
    %c56 = arith.constant 56 : index
    %764 = vector.load %arg7[%763, %c0_618, %c56] : memref<1x16x64xf32, #tpu.memory_space<vmem>>, vector<1x16x8xf32>
    %765 = vector.shape_cast %764 : vector<1x16x8xf32> to vector<16x8xf32>
    %766 = vector.shape_cast %755 : vector<16x8xf32> to vector<1x16x8xf32>
    tpu.vector_store %arg7[%763, %c0_618, %c56], %766 {strides = array<i32>} : memref<1x16x64xf32, #tpu.memory_space<vmem>>, vector<1x16x8xf32>,
    %c0_619 = arith.constant 0 : index
    %c0_620 = arith.constant 0 : index
    %767 = vector.load %arg8[%c0_619, %c0_620] : memref<16x1xf32, #tpu.memory_space<vmem>>, vector<16x1xf32>
    %768 = arith.addf %767, %758 : vector<16x1xf32>
    %c0_621 = arith.constant 0 : index
    %c0_622 = arith.constant 0 : index
    %769 = vector.load %arg8[%c0_621, %c0_622] : memref<16x1xf32, #tpu.memory_space<vmem>>, vector<16x1xf32>
    tpu.vector_store %arg8[%c0_621, %c0_622], %768 {strides = array<i32>} : memref<16x1xf32, #tpu.memory_space<vmem>>, vector<16x1xf32>,
    %c0_623 = arith.constant 0 : index
    %c0_624 = arith.constant 0 : index
    %770 = vector.load %arg9[%c0_623, %c0_624] : memref<16x1xf32, #tpu.memory_space<vmem>>, vector<16x1xf32>
    %771 = arith.addf %770, %762 : vector<16x1xf32>
    %c0_625 = arith.constant 0 : index
    %c0_626 = arith.constant 0 : index
    %772 = vector.load %arg9[%c0_625, %c0_626] : memref<16x1xf32, #tpu.memory_space<vmem>>, vector<16x1xf32>
    tpu.vector_store %arg9[%c0_625, %c0_626], %771 {strides = array<i32>} : memref<16x1xf32, #tpu.memory_space<vmem>>, vector<16x1xf32>,
    %c0_i32_627 = arith.constant 0 : i32
    %773 = arith.cmpi eq, %arg1, %c0_i32_627 : i32
    %774 = arith.extui %773 : i1 to i32
    %c0_i32_628 = arith.constant 0 : i32
    %775 = arith.cmpi ne, %774, %c0_i32_628 : i32
    scf.if %775 {
      %c0_629 = arith.constant 0 : index
      %c0_630 = arith.constant 0 : index
      %776 = vector.load %arg8[%c0_629, %c0_630] : memref<16x1xf32, #tpu.memory_space<vmem>>, vector<16x1xf32>
      %cst_631 = arith.constant 1.562500e-02 : f32
      %777 = vector.broadcast %cst_631 : f32 to vector<16x1xf32>
      %778 = arith.mulf %776, %777 : vector<16x1xf32>
      %c0_632 = arith.constant 0 : index
      %c0_633 = arith.constant 0 : index
      %779 = vector.load %arg9[%c0_632, %c0_633] : memref<16x1xf32, #tpu.memory_space<vmem>>, vector<16x1xf32>
      %cst_634 = arith.constant 1.562500e-02 : f32
      %780 = vector.broadcast %cst_634 : f32 to vector<16x1xf32>
      %781 = arith.mulf %779, %780 : vector<16x1xf32>
      %782 = arith.mulf %778, %778 : vector<16x1xf32>
      %783 = arith.subf %781, %782 : vector<16x1xf32>
      %c0_635 = arith.constant 0 : index
      %c0_636 = arith.constant 0 : index
      %784 = vector.load %arg4[%c0_635, %c0_636] : memref<16x1xf32, #tpu.memory_space<vmem>>, vector<16x1xf32>
      %cst_637 = arith.constant 9.99999974E-6 : f32
      %785 = vector.broadcast %cst_637 : f32 to vector<16x1xf32>
      %786 = arith.addf %783, %785 : vector<16x1xf32>
      %787 = math.rsqrt %786 : vector<16x1xf32>
      %788 = arith.mulf %784, %787 : vector<16x1xf32>
      %c0_638 = arith.constant 0 : index
      %c0_639 = arith.constant 0 : index
      %789 = vector.load %arg5[%c0_638, %c0_639] : memref<16x1xf32, #tpu.memory_space<vmem>>, vector<16x1xf32>
      %790 = arith.mulf %778, %788 : vector<16x1xf32>
      %791 = arith.subf %789, %790 : vector<16x1xf32>
      %c0_640 = arith.constant 0 : index
      %c0_641 = arith.constant 0 : index
      %c0_642 = arith.constant 0 : index
      %792 = vector.load %arg7[%c0_640, %c0_641, %c0_642] : memref<1x16x64xf32, #tpu.memory_space<vmem>>, vector<1x16x64xf32>
      %793 = vector.shape_cast %792 : vector<1x16x64xf32> to vector<16x64xf32>
      %794 = vector.broadcast %788 : vector<16x1xf32> to vector<16x64xf32>
      %795 = arith.mulf %793, %794 : vector<16x64xf32>
      %796 = vector.broadcast %791 : vector<16x1xf32> to vector<16x64xf32>
      %797 = arith.addf %795, %796 : vector<16x64xf32>
      %cst_643 = arith.constant 2.000000e-01 : f32
      %798 = vector.broadcast %cst_643 : f32 to vector<16x64xf32>
      %799 = arith.mulf %798, %797 : vector<16x64xf32>
      %800 = arith.maximumf %797, %799 : vector<16x64xf32>
      %801 = vector.extract_strided_slice %800 {offsets = [0, 0], sizes = [8, 64], strides = [1, 1]} : vector<16x64xf32> to vector<8x64xf32>
      %802 = vector.extract_strided_slice %800 {offsets = [8, 0], sizes = [8, 64], strides = [1, 1]} : vector<16x64xf32> to vector<8x64xf32>
      %803 = arith.addf %801, %802 : vector<8x64xf32>
      %c0_644 = arith.constant 0 : index
      %c0_645 = arith.constant 0 : index
      %c0_646 = arith.constant 0 : index
      %804 = vector.load %arg6[%c0_644, %c0_645, %c0_646] : memref<1x8x64xf32, #tpu.memory_space<vmem>>, vector<1x8x64xf32>
      %805 = vector.shape_cast %804 : vector<1x8x64xf32> to vector<8x64xf32>
      %806 = vector.shape_cast %803 : vector<8x64xf32> to vector<1x8x64xf32>
      tpu.vector_store %arg6[%c0_644, %c0_645, %c0_646], %806 {strides = array<i32>} : memref<1x8x64xf32, #tpu.memory_space<vmem>>, vector<1x8x64xf32>,
    } else {
    }
    return
  }
  func.func @transform_0(%arg0: i32, %arg1: i32) -> (i32, i32, i32, i32) {
    %c0_i32 = arith.constant 0 : i32
    %c0_i32_0 = arith.constant 0 : i32
    %c0_i32_1 = arith.constant 0 : i32
    %c0_i32_2 = arith.constant 0 : i32
    return %arg0, %c0_i32, %c0_i32_0, %c0_i32_1 : i32, i32, i32, i32
  }
  func.func @transform_1(%arg0: i32, %arg1: i32) -> (i32, i32, i32) {
    %c0_i32 = arith.constant 0 : i32
    %c0_i32_0 = arith.constant 0 : i32
    %c0_i32_1 = arith.constant 0 : i32
    %c0_i32_2 = arith.constant 0 : i32
    return %c0_i32, %c0_i32_0, %c0_i32_1 : i32, i32, i32
  }
  func.func @transform_2(%arg0: i32, %arg1: i32) -> (i32, i32) {
    %c0_i32 = arith.constant 0 : i32
    %c0_i32_0 = arith.constant 0 : i32
    %c0_i32_1 = arith.constant 0 : i32
    return %c0_i32, %c0_i32_0 : i32, i32
  }
  func.func @transform_3(%arg0: i32, %arg1: i32) -> (i32, i32) {
    %c0_i32 = arith.constant 0 : i32
    %c0_i32_0 = arith.constant 0 : i32
    %c0_i32_1 = arith.constant 0 : i32
    return %c0_i32, %c0_i32_0 : i32, i32
  }
  func.func @transform_4(%arg0: i32, %arg1: i32) -> (i32, i32, i32) {
    %c0_i32 = arith.constant 0 : i32
    %c0_i32_0 = arith.constant 0 : i32
    %c0_i32_1 = arith.constant 0 : i32
    return %arg0, %c0_i32, %c0_i32_0 : i32, i32, i32
  }
}

</mosaic_0001>

<llo_original>
// kernel: tpu_custom_call.1
$region0: #{tpu_custom_call.1}
  #allocation0 [shape = 'u32[]', space=smem, size = 0x4, offset = 0x4, fixed_abs, tag = 'smem constant byte address 0x4 - core index']
  #allocation1 [shape = 'u32[72,128]{1,0:T(1,128)}', space=vmem, size = 0x9000, scoped, tag = 'internal scratch']
  #allocation2 [shape = 'f32[1,16,64]{2,1,0:T(8,128)}', space=vmem, size = 0x2000, scoped, tag = 'scratch operand']
  #allocation3 [shape = 'f32[16,1]{1,0:T(8,128)}', space=vmem, size = 0x2000, scoped, tag = 'scratch operand']
  #allocation4 [shape = 'f32[16,1]{1,0:T(8,128)}', space=vmem, size = 0x2000, scoped, tag = 'scratch operand']
  %s0 = inlined_call_operand.vmem [shape: bf16[2,36,4,9], index: 0, kind: input, shape index: {}]
  %s1 = inlined_call_operand.vmem [shape: bf16[9,16,4], index: 1, kind: input, shape index: {}]
  %s2 = inlined_call_operand.vmem [shape: f32[16,1], index: 2, kind: input, shape index: {}]
  %s3 = inlined_call_operand.vmem [shape: f32[16,1], index: 3, kind: input, shape index: {}]
  %s4 = inlined_call_operand.hbm [shape: f32[2,8,64], index: 4, kind: output, shape index: {}]
  %s5 = sld [smem:[#allocation0]]
  $region57: #{tpu_custom_call.1} parent=0
    _
  %s7 = ssub.s32 1, %s5
  %s8 = scalar_select 0, %s7, %s5
  $region1: #{tpu_custom_call.1} parent=0
    #allocation5 [shape = 'u8[8192]{0}', space=vmem, size = 0x2000, scoped, tag = 'output window, operand 0']
    #allocation6 [shape = 's32[2]{0}', space=sflag, size = 0x8, scoped, tag = 'scoped memory for tpu_custom_call.1']
    %9 = vsyncpa [#allocation6], 0
    %s10 = scalar_lea.sflag [#allocation6], 1
    %11 = vsyncpa %s10, 0
    loop: start=0, step=1, limit=4
    $region2: #{tpu_custom_call.1} parent=1 // loop_pre_header
      _
    $region3: #{tpu_custom_call.1} parent=1 // loop_header
      %s13 = sphi 0, %s17
      %p14 = scmp.ge.s32.totalorder %s13, 4
      %s20 = sphi 0, %s32
      %s21 = sphi 0, %s28
      %s22 = sphi 0, %s20
      %s23 = sphi 0, %s21
      %s24 = sphi 0, %s22
      %s25 = sphi 0, %s23
      %s35 = sphi 0, %s37
      %s38 = sphi 0, %s35
      %s39 = sphi 0, %s38
      %s55 = sphi 0, %s39
      %s59 = sphi 0, %s59
      %s61 = sphi 0, %s59
      %s62 = sphi 0, %s61
      %s76 = sphi 0, %s62
      %s80 = sphi 0, %s80
      %s82 = sphi 0, %s80
      %s83 = sphi 0, %s82
      %s97 = sphi 0, %s83
      %s101 = sphi 0, %s101
      %s103 = sphi 0, %s101
      %s104 = sphi 0, %s103
      %s118 = sphi 0, %s104
      %s124 = sphi 0, %s126
      %s127 = sphi 0, %s124
      %s128 = sphi 0, %s127
      %s144 = sphi 0, %s128
    $region4: #{tpu_custom_call.1} parent=1 // loop_header_branch
      %16 = sbr.rel (%p14) target = $region8
    $region5: #{tpu_custom_call.1} parent=1 // loop_body
      %s18 = ssub.s32 %s13, 1
      %s19 = ssub.s32 %s13, 2
      %s26 = sadd.s32 1, %s21
      %p27 = scmp.ge.s32.totalorder %s26, 1
      %s28 = scalar_select %p27, 0, %s26
      %s29 = sadd.s32 1, %s20
      %s30 = scalar_select %p27, %s29, %s20
      %p31 = scmp.ge.s32.totalorder %s30, 2
      %s32 = scalar_select %p31, 0, %s30
      %s33 = ssub.s32 %s20, %s32
      %p34 = scmp.eq.s32.totalorder %s33, 0
      %s36 = sadd.s32 %s35, 1
      %s37 = scalar_select %p34, %s35, %s36
      %p40 = pneg %p34
      %p41 = scmp.eq.s32.totalorder %s13, 1
      %p42 = por %p40, %p41
      %p43 = scmp.ne.s32.totalorder %s35, %s38
      %p44 = scmp.eq.s32.totalorder %s13, 0
      %p45 = por %p43, %p44
      %p46 = scmp.ne.s32.totalorder %s35, %s38
      %p47 = scmp.eq.s32.totalorder %s18, 1
      %p48 = por %p46, %p47
      %p49 = scmp.ne.s32.totalorder %s38, %s39
      %p50 = scmp.eq.s32.totalorder %s18, 0
      %p51 = por %p49, %p50
      %p52 = scmp.ne.s32.totalorder %s38, %s39
      %p53 = scmp.eq.s32.totalorder %s19, 1
      %p54 = por %p52, %p53
      %p56 = scmp.ne.s32.totalorder %s39, %s55
      %p57 = scmp.eq.s32.totalorder %s19, 0
      %p58 = por %p56, %p57
      %s60 = sadd.s32 %s59, 1
      %p63 = scmp.eq.s32.totalorder %s13, 1
      %p64 = scmp.ne.s32.totalorder %s59, %s61
      %p65 = scmp.eq.s32.totalorder %s13, 0
      %p66 = por %p64, %p65
      %p67 = scmp.ne.s32.totalorder %s59, %s61
      %p68 = scmp.eq.s32.totalorder %s18, 1
      %p69 = por %p67, %p68
      %p70 = scmp.ne.s32.totalorder %s61, %s62
      %p71 = scmp.eq.s32.totalorder %s18, 0
      %p72 = por %p70, %p71
      %p73 = scmp.ne.s32.totalorder %s61, %s62
      %p74 = scmp.eq.s32.totalorder %s19, 1
      %p75 = por %p73, %p74
      %p77 = scmp.ne.s32.totalorder %s62, %s76
      %p78 = scmp.eq.s32.totalorder %s19, 0
      %p79 = por %p77, %p78
      %s81 = sadd.s32 %s80, 1
      %p84 = scmp.eq.s32.totalorder %s13, 1
      %p85 = scmp.ne.s32.totalorder %s80, %s82
      %p86 = scmp.eq.s32.totalorder %s13, 0
      %p87 = por %p85, %p86
      %p88 = scmp.ne.s32.totalorder %s80, %s82
      %p89 = scmp.eq.s32.totalorder %s18, 1
      %p90 = por %p88, %p89
      %p91 = scmp.ne.s32.totalorder %s82, %s83
      %p92 = scmp.eq.s32.totalorder %s18, 0
      %p93 = por %p91, %p92
      %p94 = scmp.ne.s32.totalorder %s82, %s83
      %p95 = scmp.eq.s32.totalorder %s19, 1
      %p96 = por %p94, %p95
      %p98 = scmp.ne.s32.totalorder %s83, %s97
      %p99 = scmp.eq.s32.totalorder %s19, 0
      %p100 = por %p98, %p99
      %s102 = sadd.s32 %s101, 1
      %p105 = scmp.eq.s32.totalorder %s13, 1
      %p106 = scmp.ne.s32.totalorder %s101, %s103
      %p107 = scmp.eq.s32.totalorder %s13, 0
      %p108 = por %p106, %p107
      %p109 = scmp.ne.s32.totalorder %s101, %s103
      %p110 = scmp.eq.s32.totalorder %s18, 1
      %p111 = por %p109, %p110
      %p112 = scmp.ne.s32.totalorder %s103, %s104
      %p113 = scmp.eq.s32.totalorder %s18, 0
      %p114 = por %p112, %p113
      %p115 = scmp.ne.s32.totalorder %s103, %s104
      %p116 = scmp.eq.s32.totalorder %s19, 1
      %p117 = por %p115, %p116
      %p119 = scmp.ne.s32.totalorder %s104, %s118
      %p120 = scmp.eq.s32.totalorder %s19, 0
      %p121 = por %p119, %p120
      %s122 = ssub.s32 %s20, %s32
      %p123 = scmp.eq.s32.totalorder %s122, 0
      %s125 = sadd.s32 %s124, 1
      %s126 = scalar_select %p123, %s124, %s125
      %p129 = pneg %p123
      %p130 = scmp.eq.s32.totalorder %s13, 1
      %p131 = por %p129, %p130
      %p132 = scmp.ne.s32.totalorder %s124, %s127
      %p133 = scmp.eq.s32.totalorder %s13, 0
      %p134 = por %p132, %p133
      %p135 = scmp.ne.s32.totalorder %s124, %s127
      %p136 = scmp.eq.s32.totalorder %s18, 1
      %p137 = por %p135, %p136
      %p138 = scmp.ne.s32.totalorder %s127, %s128
      %p139 = scmp.eq.s32.totalorder %s18, 0
      %p140 = por %p138, %p139
      %p141 = scmp.ne.s32.totalorder %s127, %s128
      %p142 = scmp.eq.s32.totalorder %s19, 1
      %p143 = por %p141, %p142
      %p145 = scmp.ne.s32.totalorder %s128, %s144
      %p146 = scmp.eq.s32.totalorder %s19, 0
      %p147 = por %p145, %p146
      %p148 = scmp.le.s32.totalorder 1, %s13
      %p149 = scmp.lt.s32.totalorder %s13, 3
      %p150 = pnand %p148, %p149
      %p151 = pneg %p150
      // Predicated region
      $region9: #{tpu_custom_call.1} parent=5 // pred_check
        _
      $region10: #{tpu_custom_call.1} parent=5 // pred_check_branch
        %153 = sbr.rel (%p150) target = $region12
      $region11: #{tpu_custom_call.1} parent=5 // pred_region
        %s154 = ssub.s32 %s13, 1
        // Predicated region
        $region13: #{tpu_custom_call.1} parent=11 // pred_check
          %p155 = pneg %p72
        $region14: #{tpu_custom_call.1} parent=11 // pred_check_branch
          %157 = sbr.rel (%p155) target = $region16
        $region15: #{tpu_custom_call.1} parent=11 // pred_region
          _
        $region16: #{tpu_custom_call.1} parent=11 // pred_fallthru
          _
        // Predicated region
        $region17: #{tpu_custom_call.1} parent=11 // pred_check
          %p158 = pneg %p93
        $region18: #{tpu_custom_call.1} parent=11 // pred_check_branch
          %160 = sbr.rel (%p158) target = $region20
        $region19: #{tpu_custom_call.1} parent=11 // pred_region
          _
        $region20: #{tpu_custom_call.1} parent=11 // pred_fallthru
          _
        // Predicated region
        $region21: #{tpu_custom_call.1} parent=11 // pred_check
          %p161 = pneg %p114
        $region22: #{tpu_custom_call.1} parent=11 // pred_check_branch
          %163 = sbr.rel (%p161) target = $region24
        $region23: #{tpu_custom_call.1} parent=11 // pred_region
          _
        $region24: #{tpu_custom_call.1} parent=11 // pred_fallthru
          _
      $region12: #{tpu_custom_call.1} parent=5 // pred_fallthru
        _
      %p164 = scmp.lt.s32.totalorder %s13, 2
      // Predicated region
      $region25: #{tpu_custom_call.1} parent=5 // pred_check
        %p165 = pneg %p164
      $region26: #{tpu_custom_call.1} parent=5 // pred_check_branch
        %167 = sbr.rel (%p165) target = $region28
      $region27: #{tpu_custom_call.1} parent=5 // pred_region
        // Predicated region
        $region29: #{tpu_custom_call.1} parent=27 // pred_check
          %p168 = pneg %p45
        $region30: #{tpu_custom_call.1} parent=27 // pred_check_branch
          %170 = sbr.rel (%p168) target = $region32
        $region31: #{tpu_custom_call.1} parent=27 // pred_region
          %p171 = scmp.lt.s32.totalorder %s20, 1
          %s172 = scalar_select %p171, %s20, 1
          %s173 = smul.addr %s172, 36
          %s174 = smul.addr %s173, 2
          %s175 = scalar_lea.vmem %s0, %s174
        $region32: #{tpu_custom_call.1} parent=27 // pred_fallthru
          _
      $region28: #{tpu_custom_call.1} parent=5 // pred_fallthru
        _
      %p176 = scmp.le.s32.totalorder 1, %s13
      %p177 = scmp.lt.s32.totalorder %s13, 3
      %p178 = pnand %p176, %p177
      %p179 = pneg %p178
      // Predicated region
      $region33: #{tpu_custom_call.1} parent=5 // pred_check
        _
      $region34: #{tpu_custom_call.1} parent=5 // pred_check_branch
        %181 = sbr.rel (%p178) target = $region36
      $region35: #{tpu_custom_call.1} parent=5 // pred_region
        %s182 = ssub.s32 %s13, 1
        %p183 = scmp.lt.s32.totalorder %s22, 1
        %s184 = scalar_select %p183, %s22, 1
        %s185 = smul.addr %s184, 36
        %s186 = smul.addr %s185, 2
        %s187 = scalar_lea.vmem %s0, %s186
        %p188 = pneg %p51
        %p189 = pneg %p48
        %p190 = pneg %p72
        %p191 = pneg %p69
        %p192 = pneg %p93
        %p193 = pneg %p90
        %p194 = pneg %p114
        %p195 = pneg %p111
        %p196 = pneg %p140
        %p197 = pneg %p137
        %s198 = sand.u32 %s127, 1
        %s199 = scalar_lea.sflag [#allocation6], %s198
        %s200 = sand.u32 %s127, 1
        %s201 = smul.addr %s200, 8
        %s202 = scalar_lea.vmem [#allocation5], %s201
        %p203 = scmp.lt.s32.totalorder %s22, 1
        %s204 = scalar_select %p203, %s22, 1
        %s205 = smul.addr %s204, 36
        %s206 = smul.addr %s205, 2
        %s207 = scalar_lea.vmem %s0, %s206
        %p209 = scmp.eq.s32.totalorder %s23, 0
        // Predicated region
        $region37: #{tpu_custom_call.1} parent=35 // pred_check
          %p210 = pneg %p209
        $region38: #{tpu_custom_call.1} parent=35 // pred_check_branch
          %212 = sbr.rel (%p210) target = $region40
        $region39: #{tpu_custom_call.1} parent=35 // pred_region
          %vm213 = vcmask 7168
          %214 = vst.msk [vmem:[#allocation3] sm:$0xff] %vm213, 0.0
          %215 = vst.msk [vmem:[#allocation3 + $0x8] sm:$0xff] %vm213, 0.0
          %216 = vst.msk [vmem:[#allocation4] sm:$0xff] %vm213, 0.0
          %217 = vst.msk [vmem:[#allocation4 + $0x8] sm:$0xff] %vm213, 0.0
        $region40: #{tpu_custom_call.1} parent=35 // pred_fallthru
          _
        %v218 = vld [vmem:[%s1] sm:$0xf]
        %v219 = vld [vmem:[%s1 + $0x4] sm:$0xf]
        %s220 = scalar_lea.vmem %s1, 8
        %v221 = vld [vmem:[%s220] sm:$0xf]
        %v222 = vld [vmem:[%s220 + $0x4] sm:$0xf]
        %s223 = scalar_lea.vmem %s1, 16
        %v224 = vld [vmem:[%s223] sm:$0xf]
        %v225 = vld [vmem:[%s223 + $0x4] sm:$0xf]
        %s226 = scalar_lea.vmem %s1, 24
        %v227 = vld [vmem:[%s226] sm:$0xf]
        %v228 = vld [vmem:[%s226 + $0x4] sm:$0xf]
        %s229 = scalar_lea.vmem %s1, 32
        %v230 = vld [vmem:[%s229] sm:$0xf]
        %v231 = vld [vmem:[%s229 + $0x4] sm:$0xf]
        %s232 = scalar_lea.vmem %s1, 40
        %v233 = vld [vmem:[%s232] sm:$0xf]
        %v234 = vld [vmem:[%s232 + $0x4] sm:$0xf]
        %s235 = scalar_lea.vmem %s1, 48
        %v236 = vld [vmem:[%s235] sm:$0xf]
        %v237 = vld [vmem:[%s235 + $0x4] sm:$0xf]
        %s238 = scalar_lea.vmem %s1, 56
        %v239 = vld [vmem:[%s238] sm:$0xf]
        %v240 = vld [vmem:[%s238 + $0x4] sm:$0xf]
        %s241 = scalar_lea.vmem %s1, 64
        %v242 = vld [vmem:[%s241] sm:$0xf]
        %v243 = vld [vmem:[%s241 + $0x4] sm:$0xf]
        %s244 = smul.u32 %s23, 8
        %s245 = smul.addr %s244, 2
        %s246 = scalar_lea.vmem %s207, %s245
        %v247 = vld [vmem:[%s246] sm:$0x3]
        %s248 = sadd.s32 %s244, 9
        %s249 = smul.addr %s248, 2
        %s250 = scalar_lea.vmem %s207, %s249
        %v251 = vld [vmem:[%s250] sm:$0x3]
        %v254 = vunpack.c.l.b16 %v221
        %v255 = vunpack.c.l.b16 %v222
        %v256 = vpack.c.b16 %v255, %v254
        %vm257 = vcmask 31744
        %v259 = vsel %vm257, %v256, 0
        %vm261 = vcmask 1041408
        %v263 = vsel %vm261, %v251, 0
        %265 = vmatpush.bf16.msra.mxu0 0
        %266 = vmatpush.bf16.msra.mxu0 0
        %267 = vmatpush.bf16.msra.mxu0 0
        %268 = vmatpush.bf16.msra.mxu0 0
        %269 = vmatpush.bf16.msra.mxu0 0
        %270 = vmatpush.bf16.msra.mxu0 0
        %271 = vmatpush.bf16.msra.mxu0 0
        %272 = vmatpush.bf16.msra.mxu0 %v263
        %273 = vmatmul.bf16.gmra.mxu0 %v259
        %v274 = vpop.f32.mrf.mxu0
        %v275 = vadd.f32 0.0, %v274
        %v276 = vpop.f32.mrf.mxu0
        %v277 = vadd.f32 0.0, %v276
        %278 = vdwg.mxu0
        %v281 = vunpack.c.l.b16 %v218
        %v282 = vunpack.c.l.b16 %v219
        %v283 = vpack.c.b16 %v282, %v281
        %v285 = vsel %vm257, %v283, 0
        %v288 = vsel %vm261, %v247, 0
        %290 = vmatpush.bf16.msra.mxu0 0
        %291 = vmatpush.bf16.msra.mxu0 0
        %292 = vmatpush.bf16.msra.mxu0 0
        %293 = vmatpush.bf16.msra.mxu0 0
        %294 = vmatpush.bf16.msra.mxu0 0
        %295 = vmatpush.bf16.msra.mxu0 0
        %296 = vmatpush.bf16.msra.mxu0 0
        %297 = vmatpush.bf16.msra.mxu0 %v288
        %298 = vmatmul.bf16.gmra.mxu0 %v285
        %v299 = vpop.f32.mrf.mxu0
        %v300 = vadd.f32 %v275, %v299
        %v301 = vpop.f32.mrf.mxu0
        %v302 = vadd.f32 %v277, %v301
        %303 = vdwg.mxu0
        %v306 = vunpack.c.l.b16 %v224
        %v307 = vunpack.c.l.b16 %v225
        %v308 = vpack.c.b16 %v307, %v306
        %309 = vst [vmem:[#allocation1] ss:$4 sm:$0xff] %v247
        %v310 = vld.sshfl [vmem:[#allocation1] sm:$0xff pattern:$0x73625140]
        %312 = vrot.lane.b32.xlu0 %v310, 127
        %v313 = vpop.permute.xlu0 %312
        %v315 = vsel %vm257, %v308, 0
        %v318 = vsel %vm261, %v313, 0
        %320 = vmatpush.bf16.msra.mxu0 0
        %321 = vmatpush.bf16.msra.mxu0 0
        %322 = vmatpush.bf16.msra.mxu0 0
        %323 = vmatpush.bf16.msra.mxu0 0
        %324 = vmatpush.bf16.msra.mxu0 0
        %325 = vmatpush.bf16.msra.mxu0 0
        %326 = vmatpush.bf16.msra.mxu0 0
        %327 = vmatpush.bf16.msra.mxu0 %v318
        %328 = vmatmul.bf16.gmra.mxu0 %v315
        %v329 = vpop.f32.mrf.mxu0
        %v330 = vadd.f32 0.0, %v329
        %v331 = vpop.f32.mrf.mxu0
        %v332 = vadd.f32 0.0, %v331
        %333 = vdwg.mxu0
        %v334 = vadd.f32 %v300, %v330
        %v335 = vadd.f32 %v302, %v332
        %s336 = sadd.s32 %s244, 18
        %s337 = smul.addr %s336, 2
        %s338 = scalar_lea.vmem %s207, %s337
        %v339 = vld [vmem:[%s338] sm:$0x3]
        %v342 = vunpack.c.l.b16 %v227
        %v343 = vunpack.c.l.b16 %v228
        %v344 = vpack.c.b16 %v343, %v342
        %v346 = vsel %vm257, %v344, 0
        %v349 = vsel %vm261, %v339, 0
        %351 = vmatpush.bf16.msra.mxu0 0
        %352 = vmatpush.bf16.msra.mxu0 0
        %353 = vmatpush.bf16.msra.mxu0 0
        %354 = vmatpush.bf16.msra.mxu0 0
        %355 = vmatpush.bf16.msra.mxu0 0
        %356 = vmatpush.bf16.msra.mxu0 0
        %357 = vmatpush.bf16.msra.mxu0 0
        %358 = vmatpush.bf16.msra.mxu0 %v349
        %359 = vmatmul.bf16.gmra.mxu0 %v346
        %v360 = vpop.f32.mrf.mxu0
        %v361 = vadd.f32 0.0, %v360
        %v362 = vpop.f32.mrf.mxu0
        %v363 = vadd.f32 0.0, %v362
        %364 = vdwg.mxu0
        %v365 = vadd.f32 %v334, %v361
        %v366 = vadd.f32 %v335, %v363
        %s367 = sadd.s32 %s244, 27
        %s368 = smul.addr %s367, 2
        %s369 = scalar_lea.vmem %s207, %s368
        %v370 = vld [vmem:[%s369] sm:$0x3]
        %v373 = vunpack.c.l.b16 %v230
        %v374 = vunpack.c.l.b16 %v231
        %v375 = vpack.c.b16 %v374, %v373
        %v377 = vsel %vm257, %v375, 0
        %v380 = vsel %vm261, %v370, 0
        %382 = vmatpush.bf16.msra.mxu0 0
        %383 = vmatpush.bf16.msra.mxu0 0
        %384 = vmatpush.bf16.msra.mxu0 0
        %385 = vmatpush.bf16.msra.mxu0 0
        %386 = vmatpush.bf16.msra.mxu0 0
        %387 = vmatpush.bf16.msra.mxu0 0
        %388 = vmatpush.bf16.msra.mxu0 0
        %389 = vmatpush.bf16.msra.mxu0 %v380
        %390 = vmatmul.bf16.gmra.mxu0 %v377
        %v391 = vpop.f32.mrf.mxu0
        %v392 = vadd.f32 0.0, %v391
        %v393 = vpop.f32.mrf.mxu0
        %v394 = vadd.f32 0.0, %v393
        %395 = vdwg.mxu0
        %v396 = vadd.f32 %v365, %v392
        %v397 = vadd.f32 %v366, %v394
        %v400 = vunpack.c.l.b16 %v233
        %v401 = vunpack.c.l.b16 %v234
        %v402 = vpack.c.b16 %v401, %v400
        %403 = vst [vmem:[#allocation1] ss:$4 sm:$0xff] %v339
        %v404 = vld.sshfl [vmem:[#allocation1] sm:$0xff pattern:$0x73625140]
        %406 = vrot.lane.b32.xlu0 %v404, 127
        %v407 = vpop.permute.xlu0 %406
        %v409 = vsel %vm257, %v402, 0
        %v412 = vsel %vm261, %v407, 0
        %414 = vmatpush.bf16.msra.mxu0 0
        %415 = vmatpush.bf16.msra.mxu0 0
        %416 = vmatpush.bf16.msra.mxu0 0
        %417 = vmatpush.bf16.msra.mxu0 0
        %418 = vmatpush.bf16.msra.mxu0 0
        %419 = vmatpush.bf16.msra.mxu0 0
        %420 = vmatpush.bf16.msra.mxu0 0
        %421 = vmatpush.bf16.msra.mxu0 %v412
        %422 = vmatmul.bf16.gmra.mxu0 %v409
        %v423 = vpop.f32.mrf.mxu0
        %v424 = vadd.f32 0.0, %v423
        %v425 = vpop.f32.mrf.mxu0
        %v426 = vadd.f32 0.0, %v425
        %427 = vdwg.mxu0
        %v428 = vadd.f32 %v396, %v424
        %v429 = vadd.f32 %v397, %v426
        %s430 = sadd.s32 %s244, 1
        %s431 = smul.addr %s430, 2
        %s432 = scalar_lea.vmem %s207, %s431
        %v433 = vld [vmem:[%s432] sm:$0x3]
        %v436 = vunpack.c.l.b16 %v236
        %v437 = vunpack.c.l.b16 %v237
        %v438 = vpack.c.b16 %v437, %v436
        %v440 = vsel %vm257, %v438, 0
        %v443 = vsel %vm261, %v433, 0
        %445 = vmatpush.bf16.msra.mxu0 0
        %446 = vmatpush.bf16.msra.mxu0 0
        %447 = vmatpush.bf16.msra.mxu0 0
        %448 = vmatpush.bf16.msra.mxu0 0
        %449 = vmatpush.bf16.msra.mxu0 0
        %450 = vmatpush.bf16.msra.mxu0 0
        %451 = vmatpush.bf16.msra.mxu0 0
        %452 = vmatpush.bf16.msra.mxu0 %v443
        %453 = vmatmul.bf16.gmra.mxu0 %v440
        %v454 = vpop.f32.mrf.mxu0
        %v455 = vadd.f32 0.0, %v454
        %v456 = vpop.f32.mrf.mxu0
        %v457 = vadd.f32 0.0, %v456
        %458 = vdwg.mxu0
        %v459 = vadd.f32 %v428, %v455
        %v460 = vadd.f32 %v429, %v457
        %s461 = sadd.s32 %s244, 10
        %s462 = smul.addr %s461, 2
        %s463 = scalar_lea.vmem %s207, %s462
        %v464 = vld [vmem:[%s463] sm:$0x3]
        %v467 = vunpack.c.l.b16 %v239
        %v468 = vunpack.c.l.b16 %v240
        %v469 = vpack.c.b16 %v468, %v467
        %v471 = vsel %vm257, %v469, 0
        %v474 = vsel %vm261, %v464, 0
        %476 = vmatpush.bf16.msra.mxu0 0
        %477 = vmatpush.bf16.msra.mxu0 0
        %478 = vmatpush.bf16.msra.mxu0 0
        %479 = vmatpush.bf16.msra.mxu0 0
        %480 = vmatpush.bf16.msra.mxu0 0
        %481 = vmatpush.bf16.msra.mxu0 0
        %482 = vmatpush.bf16.msra.mxu0 0
        %483 = vmatpush.bf16.msra.mxu0 %v474
        %484 = vmatmul.bf16.gmra.mxu0 %v471
        %v485 = vpop.f32.mrf.mxu0
        %v486 = vadd.f32 0.0, %v485
        %v487 = vpop.f32.mrf.mxu0
        %v488 = vadd.f32 0.0, %v487
        %489 = vdwg.mxu0
        %v490 = vadd.f32 %v459, %v486
        %v491 = vadd.f32 %v460, %v488
        %v494 = vunpack.c.l.b16 %v242
        %v495 = vunpack.c.l.b16 %v243
        %v496 = vpack.c.b16 %v495, %v494
        %497 = vst [vmem:[#allocation1] ss:$4 sm:$0xff] %v433
        %v498 = vld.sshfl [vmem:[#allocation1] sm:$0xff pattern:$0x73625140]
        %500 = vrot.lane.b32.xlu0 %v498, 127
        %v501 = vpop.permute.xlu0 %500
        %v503 = vsel %vm257, %v496, 0
        %v506 = vsel %vm261, %v501, 0
        %508 = vmatpush.bf16.msra.mxu0 0
        %509 = vmatpush.bf16.msra.mxu0 0
        %510 = vmatpush.bf16.msra.mxu0 0
        %511 = vmatpush.bf16.msra.mxu0 0
        %512 = vmatpush.bf16.msra.mxu0 0
        %513 = vmatpush.bf16.msra.mxu0 0
        %514 = vmatpush.bf16.msra.mxu0 0
        %515 = vmatpush.bf16.msra.mxu0 %v506
        %516 = vmatmul.bf16.gmra.mxu0 %v503
        %v517 = vpop.f32.mrf.mxu0
        %v518 = vadd.f32 0.0, %v517
        %v519 = vpop.f32.mrf.mxu0
        %v520 = vadd.f32 0.0, %v519
        %521 = vdwg.mxu0
        %v522 = vadd.f32 %v490, %v518
        %v523 = vadd.f32 %v491, %v520
        %vm524 = vcmask 64512
        %v525 = vsel %vm524, %v522, 0.0
        %526 = vadd.xlane.f32.xlu0 %v525
        %v527 = vpop.xlane.xlu0 %526
        %v528 = vsel %vm524, %v523, 0.0
        %529 = vadd.xlane.f32.xlu0 %v528
        %v530 = vpop.xlane.xlu0 %529
        %v531 = vadd.f32 %v527, 0.0
        %v532 = vadd.f32 %v530, 0.0
        %v533 = vmul.f32 %v522, %v522
        %v534 = vmul.f32 %v523, %v523
        %v535 = vsel %vm524, %v533, 0.0
        %536 = vadd.xlane.f32.xlu0 %v535
        %v537 = vpop.xlane.xlu0 %536
        %v538 = vsel %vm524, %v534, 0.0
        %539 = vadd.xlane.f32.xlu0 %v538
        %v540 = vpop.xlane.xlu0 %539
        %v541 = vadd.f32 %v537, 0.0
        %v542 = vadd.f32 %v540, 0.0
        %s543 = smul.u32 %s23, 16
        %s544 = scalar_lea.vmem [#allocation2], %s543
        %545 = vst.msk [vmem:[%s544] sm:$0xff] %vm524, %v522
        %546 = vst.msk [vmem:[%s544 + $0x8] sm:$0xff] %vm524, %v523
        %v547 = vld [vmem:[%s432] sm:$0x3]
        %v548 = vld [vmem:[%s463] sm:$0x3]
        %v550 = vsel %vm261, %v548, 0
        %552 = vmatpush.bf16.msra.mxu0 0
        %553 = vmatpush.bf16.msra.mxu0 0
        %554 = vmatpush.bf16.msra.mxu0 0
        %555 = vmatpush.bf16.msra.mxu0 0
        %556 = vmatpush.bf16.msra.mxu0 0
        %557 = vmatpush.bf16.msra.mxu0 0
        %558 = vmatpush.bf16.msra.mxu0 0
        %559 = vmatpush.bf16.msra.mxu0 %v550
        %560 = vmatmul.bf16.gmra.mxu0 %v259
        %v561 = vpop.f32.mrf.mxu0
        %v562 = vadd.f32 0.0, %v561
        %v563 = vpop.f32.mrf.mxu0
        %v564 = vadd.f32 0.0, %v563
        %565 = vdwg.mxu0
        %v567 = vsel %vm261, %v547, 0
        %569 = vmatpush.bf16.msra.mxu0 0
        %570 = vmatpush.bf16.msra.mxu0 0
        %571 = vmatpush.bf16.msra.mxu0 0
        %572 = vmatpush.bf16.msra.mxu0 0
        %573 = vmatpush.bf16.msra.mxu0 0
        %574 = vmatpush.bf16.msra.mxu0 0
        %575 = vmatpush.bf16.msra.mxu0 0
        %576 = vmatpush.bf16.msra.mxu0 %v567
        %577 = vmatmul.bf16.gmra.mxu0 %v285
        %v578 = vpop.f32.mrf.mxu0
        %v579 = vadd.f32 %v562, %v578
        %v580 = vpop.f32.mrf.mxu0
        %v581 = vadd.f32 %v564, %v580
        %582 = vdwg.mxu0
        %583 = vst [vmem:[#allocation1] ss:$4 sm:$0xff] %v547
        %v584 = vld.sshfl [vmem:[#allocation1] sm:$0xff pattern:$0x73625140]
        %586 = vrot.lane.b32.xlu0 %v584, 127
        %v587 = vpop.permute.xlu0 %586
        %v589 = vsel %vm261, %v587, 0
        %591 = vmatpush.bf16.msra.mxu0 0
        %592 = vmatpush.bf16.msra.mxu0 0
        %593 = vmatpush.bf16.msra.mxu0 0
        %594 = vmatpush.bf16.msra.mxu0 0
        %595 = vmatpush.bf16.msra.mxu0 0
        %596 = vmatpush.bf16.msra.mxu0 0
        %597 = vmatpush.bf16.msra.mxu0 0
        %598 = vmatpush.bf16.msra.mxu0 %v589
        %599 = vmatmul.bf16.gmra.mxu0 %v315
        %v600 = vpop.f32.mrf.mxu0
        %v601 = vadd.f32 0.0, %v600
        %v602 = vpop.f32.mrf.mxu0
        %v603 = vadd.f32 0.0, %v602
        %604 = vdwg.mxu0
        %v605 = vadd.f32 %v579, %v601
        %v606 = vadd.f32 %v581, %v603
        %s607 = sadd.s32 %s244, 19
        %s608 = smul.addr %s607, 2
        %s609 = scalar_lea.vmem %s207, %s608
        %v610 = vld [vmem:[%s609] sm:$0x3]
        %v612 = vsel %vm261, %v610, 0
        %614 = vmatpush.bf16.msra.mxu0 0
        %615 = vmatpush.bf16.msra.mxu0 0
        %616 = vmatpush.bf16.msra.mxu0 0
        %617 = vmatpush.bf16.msra.mxu0 0
        %618 = vmatpush.bf16.msra.mxu0 0
        %619 = vmatpush.bf16.msra.mxu0 0
        %620 = vmatpush.bf16.msra.mxu0 0
        %621 = vmatpush.bf16.msra.mxu0 %v612
        %622 = vmatmul.bf16.gmra.mxu0 %v346
        %v623 = vpop.f32.mrf.mxu0
        %v624 = vadd.f32 0.0, %v623
        %v625 = vpop.f32.mrf.mxu0
        %v626 = vadd.f32 0.0, %v625
        %627 = vdwg.mxu0
        %v628 = vadd.f32 %v605, %v624
        %v629 = vadd.f32 %v606, %v626
        %s630 = sadd.s32 %s244, 28
        %s631 = smul.addr %s630, 2
        %s632 = scalar_lea.vmem %s207, %s631
        %v633 = vld [vmem:[%s632] sm:$0x3]
        %v635 = vsel %vm261, %v633, 0
        %637 = vmatpush.bf16.msra.mxu0 0
        %638 = vmatpush.bf16.msra.mxu0 0
        %639 = vmatpush.bf16.msra.mxu0 0
        %640 = vmatpush.bf16.msra.mxu0 0
        %641 = vmatpush.bf16.msra.mxu0 0
        %642 = vmatpush.bf16.msra.mxu0 0
        %643 = vmatpush.bf16.msra.mxu0 0
        %644 = vmatpush.bf16.msra.mxu0 %v635
        %645 = vmatmul.bf16.gmra.mxu0 %v377
        %v646 = vpop.f32.mrf.mxu0
        %v647 = vadd.f32 0.0, %v646
        %v648 = vpop.f32.mrf.mxu0
        %v649 = vadd.f32 0.0, %v648
        %650 = vdwg.mxu0
        %v651 = vadd.f32 %v628, %v647
        %v652 = vadd.f32 %v629, %v649
        %653 = vst [vmem:[#allocation1] ss:$4 sm:$0xff] %v610
        %v654 = vld.sshfl [vmem:[#allocation1] sm:$0xff pattern:$0x73625140]
        %656 = vrot.lane.b32.xlu0 %v654, 127
        %v657 = vpop.permute.xlu0 %656
        %v659 = vsel %vm261, %v657, 0
        %661 = vmatpush.bf16.msra.mxu0 0
        %662 = vmatpush.bf16.msra.mxu0 0
        %663 = vmatpush.bf16.msra.mxu0 0
        %664 = vmatpush.bf16.msra.mxu0 0
        %665 = vmatpush.bf16.msra.mxu0 0
        %666 = vmatpush.bf16.msra.mxu0 0
        %667 = vmatpush.bf16.msra.mxu0 0
        %668 = vmatpush.bf16.msra.mxu0 %v659
        %669 = vmatmul.bf16.gmra.mxu0 %v409
        %v670 = vpop.f32.mrf.mxu0
        %v671 = vadd.f32 0.0, %v670
        %v672 = vpop.f32.mrf.mxu0
        %v673 = vadd.f32 0.0, %v672
        %674 = vdwg.mxu0
        %v675 = vadd.f32 %v651, %v671
        %v676 = vadd.f32 %v652, %v673
        %s677 = sadd.s32 %s244, 2
        %s678 = smul.addr %s677, 2
        %s679 = scalar_lea.vmem %s207, %s678
        %v680 = vld [vmem:[%s679] sm:$0x3]
        %v682 = vsel %vm261, %v680, 0
        %684 = vmatpush.bf16.msra.mxu0 0
        %685 = vmatpush.bf16.msra.mxu0 0
        %686 = vmatpush.bf16.msra.mxu0 0
        %687 = vmatpush.bf16.msra.mxu0 0
        %688 = vmatpush.bf16.msra.mxu0 0
        %689 = vmatpush.bf16.msra.mxu0 0
        %690 = vmatpush.bf16.msra.mxu0 0
        %691 = vmatpush.bf16.msra.mxu0 %v682
        %692 = vmatmul.bf16.gmra.mxu0 %v440
        %v693 = vpop.f32.mrf.mxu0
        %v694 = vadd.f32 0.0, %v693
        %v695 = vpop.f32.mrf.mxu0
        %v696 = vadd.f32 0.0, %v695
        %697 = vdwg.mxu0
        %v698 = vadd.f32 %v675, %v694
        %v699 = vadd.f32 %v676, %v696
        %s700 = sadd.s32 %s244, 11
        %s701 = smul.addr %s700, 2
        %s702 = scalar_lea.vmem %s207, %s701
        %v703 = vld [vmem:[%s702] sm:$0x3]
        %v705 = vsel %vm261, %v703, 0
        %707 = vmatpush.bf16.msra.mxu0 0
        %708 = vmatpush.bf16.msra.mxu0 0
        %709 = vmatpush.bf16.msra.mxu0 0
        %710 = vmatpush.bf16.msra.mxu0 0
        %711 = vmatpush.bf16.msra.mxu0 0
        %712 = vmatpush.bf16.msra.mxu0 0
        %713 = vmatpush.bf16.msra.mxu0 0
        %714 = vmatpush.bf16.msra.mxu0 %v705
        %715 = vmatmul.bf16.gmra.mxu0 %v471
        %v716 = vpop.f32.mrf.mxu0
        %v717 = vadd.f32 0.0, %v716
        %v718 = vpop.f32.mrf.mxu0
        %v719 = vadd.f32 0.0, %v718
        %720 = vdwg.mxu0
        %v721 = vadd.f32 %v698, %v717
        %v722 = vadd.f32 %v699, %v719
        %723 = vst [vmem:[#allocation1] ss:$4 sm:$0xff] %v680
        %v724 = vld.sshfl [vmem:[#allocation1] sm:$0xff pattern:$0x73625140]
        %726 = vrot.lane.b32.xlu0 %v724, 127
        %v727 = vpop.permute.xlu0 %726
        %v729 = vsel %vm261, %v727, 0
        %731 = vmatpush.bf16.msra.mxu0 0
        %732 = vmatpush.bf16.msra.mxu0 0
        %733 = vmatpush.bf16.msra.mxu0 0
        %734 = vmatpush.bf16.msra.mxu0 0
        %735 = vmatpush.bf16.msra.mxu0 0
        %736 = vmatpush.bf16.msra.mxu0 0
        %737 = vmatpush.bf16.msra.mxu0 0
        %738 = vmatpush.bf16.msra.mxu0 %v729
        %739 = vmatmul.bf16.gmra.mxu0 %v503
        %v740 = vpop.f32.mrf.mxu0
        %v741 = vadd.f32 0.0, %v740
        %v742 = vpop.f32.mrf.mxu0
        %v743 = vadd.f32 0.0, %v742
        %744 = vdwg.mxu0
        %v745 = vadd.f32 %v721, %v741
        %v746 = vadd.f32 %v722, %v743
        %v747 = vsel %vm524, %v745, 0.0
        %748 = vadd.xlane.f32.xlu0 %v747
        %v749 = vpop.xlane.xlu0 %748
        %v750 = vsel %vm524, %v746, 0.0
        %751 = vadd.xlane.f32.xlu0 %v750
        %v752 = vpop.xlane.xlu0 %751
        %v753 = vadd.f32 %v531, %v749
        %v754 = vadd.f32 %v532, %v752
        %v755 = vmul.f32 %v745, %v745
        %v756 = vmul.f32 %v746, %v746
        %v757 = vsel %vm524, %v755, 0.0
        %758 = vadd.xlane.f32.xlu0 %v757
        %v759 = vpop.xlane.xlu0 %758
        %v760 = vsel %vm524, %v756, 0.0
        %761 = vadd.xlane.f32.xlu0 %v760
        %v762 = vpop.xlane.xlu0 %761
        %v763 = vadd.f32 %v541, %v759
        %v764 = vadd.f32 %v542, %v762
        %767 = vrot.lane.b32.xlu0 %v745, 8
        %v768 = vpop.permute.xlu0 %767
        %769 = vrot.lane.b32.xlu0 %v746, 8
        %v770 = vpop.permute.xlu0 %769
        %vm773 = vcmask 130112
        %774 = vst.msk [vmem:[%s544] sm:$0xff] %vm773, %v768
        %775 = vst.msk [vmem:[%s544 + $0x8] sm:$0xff] %vm773, %v770
        %v776 = vld [vmem:[%s679] sm:$0x3]
        %v777 = vld [vmem:[%s702] sm:$0x3]
        %v779 = vsel %vm261, %v777, 0
        %781 = vmatpush.bf16.msra.mxu0 0
        %782 = vmatpush.bf16.msra.mxu0 0
        %783 = vmatpush.bf16.msra.mxu0 0
        %784 = vmatpush.bf16.msra.mxu0 0
        %785 = vmatpush.bf16.msra.mxu0 0
        %786 = vmatpush.bf16.msra.mxu0 0
        %787 = vmatpush.bf16.msra.mxu0 0
        %788 = vmatpush.bf16.msra.mxu0 %v779
        %789 = vmatmul.bf16.gmra.mxu0 %v259
        %v790 = vpop.f32.mrf.mxu0
        %v791 = vadd.f32 0.0, %v790
        %v792 = vpop.f32.mrf.mxu0
        %v793 = vadd.f32 0.0, %v792
        %794 = vdwg.mxu0
        %v796 = vsel %vm261, %v776, 0
        %798 = vmatpush.bf16.msra.mxu0 0
        %799 = vmatpush.bf16.msra.mxu0 0
        %800 = vmatpush.bf16.msra.mxu0 0
        %801 = vmatpush.bf16.msra.mxu0 0
        %802 = vmatpush.bf16.msra.mxu0 0
        %803 = vmatpush.bf16.msra.mxu0 0
        %804 = vmatpush.bf16.msra.mxu0 0
        %805 = vmatpush.bf16.msra.mxu0 %v796
        %806 = vmatmul.bf16.gmra.mxu0 %v285
        %v807 = vpop.f32.mrf.mxu0
        %v808 = vadd.f32 %v791, %v807
        %v809 = vpop.f32.mrf.mxu0
        %v810 = vadd.f32 %v793, %v809
        %811 = vdwg.mxu0
        %812 = vst [vmem:[#allocation1] ss:$4 sm:$0xff] %v776
        %v813 = vld.sshfl [vmem:[#allocation1] sm:$0xff pattern:$0x73625140]
        %815 = vrot.lane.b32.xlu0 %v813, 127
        %v816 = vpop.permute.xlu0 %815
        %v818 = vsel %vm261, %v816, 0
        %820 = vmatpush.bf16.msra.mxu0 0
        %821 = vmatpush.bf16.msra.mxu0 0
        %822 = vmatpush.bf16.msra.mxu0 0
        %823 = vmatpush.bf16.msra.mxu0 0
        %824 = vmatpush.bf16.msra.mxu0 0
        %825 = vmatpush.bf16.msra.mxu0 0
        %826 = vmatpush.bf16.msra.mxu0 0
        %827 = vmatpush.bf16.msra.mxu0 %v818
        %828 = vmatmul.bf16.gmra.mxu0 %v315
        %v829 = vpop.f32.mrf.mxu0
        %v830 = vadd.f32 0.0, %v829
        %v831 = vpop.f32.mrf.mxu0
        %v832 = vadd.f32 0.0, %v831
        %833 = vdwg.mxu0
        %v834 = vadd.f32 %v808, %v830
        %v835 = vadd.f32 %v810, %v832
        %s836 = sadd.s32 %s244, 20
        %s837 = smul.addr %s836, 2
        %s838 = scalar_lea.vmem %s207, %s837
        %v839 = vld [vmem:[%s838] sm:$0x3]
        %v841 = vsel %vm261, %v839, 0
        %843 = vmatpush.bf16.msra.mxu0 0
        %844 = vmatpush.bf16.msra.mxu0 0
        %845 = vmatpush.bf16.msra.mxu0 0
        %846 = vmatpush.bf16.msra.mxu0 0
        %847 = vmatpush.bf16.msra.mxu0 0
        %848 = vmatpush.bf16.msra.mxu0 0
        %849 = vmatpush.bf16.msra.mxu0 0
        %850 = vmatpush.bf16.msra.mxu0 %v841
        %851 = vmatmul.bf16.gmra.mxu0 %v346
        %v852 = vpop.f32.mrf.mxu0
        %v853 = vadd.f32 0.0, %v852
        %v854 = vpop.f32.mrf.mxu0
        %v855 = vadd.f32 0.0, %v854
        %856 = vdwg.mxu0
        %v857 = vadd.f32 %v834, %v853
        %v858 = vadd.f32 %v835, %v855
        %s859 = sadd.s32 %s244, 29
        %s860 = smul.addr %s859, 2
        %s861 = scalar_lea.vmem %s207, %s860
        %v862 = vld [vmem:[%s861] sm:$0x3]
        %v864 = vsel %vm261, %v862, 0
        %866 = vmatpush.bf16.msra.mxu0 0
        %867 = vmatpush.bf16.msra.mxu0 0
        %868 = vmatpush.bf16.msra.mxu0 0
        %869 = vmatpush.bf16.msra.mxu0 0
        %870 = vmatpush.bf16.msra.mxu0 0
        %871 = vmatpush.bf16.msra.mxu0 0
        %872 = vmatpush.bf16.msra.mxu0 0
        %873 = vmatpush.bf16.msra.mxu0 %v864
        %874 = vmatmul.bf16.gmra.mxu0 %v377
        %v875 = vpop.f32.mrf.mxu0
        %v876 = vadd.f32 0.0, %v875
        %v877 = vpop.f32.mrf.mxu0
        %v878 = vadd.f32 0.0, %v877
        %879 = vdwg.mxu0
        %v880 = vadd.f32 %v857, %v876
        %v881 = vadd.f32 %v858, %v878
        %882 = vst [vmem:[#allocation1] ss:$4 sm:$0xff] %v839
        %v883 = vld.sshfl [vmem:[#allocation1] sm:$0xff pattern:$0x73625140]
        %885 = vrot.lane.b32.xlu0 %v883, 127
        %v886 = vpop.permute.xlu0 %885
        %v888 = vsel %vm261, %v886, 0
        %890 = vmatpush.bf16.msra.mxu0 0
        %891 = vmatpush.bf16.msra.mxu0 0
        %892 = vmatpush.bf16.msra.mxu0 0
        %893 = vmatpush.bf16.msra.mxu0 0
        %894 = vmatpush.bf16.msra.mxu0 0
        %895 = vmatpush.bf16.msra.mxu0 0
        %896 = vmatpush.bf16.msra.mxu0 0
        %897 = vmatpush.bf16.msra.mxu0 %v888
        %898 = vmatmul.bf16.gmra.mxu0 %v409
        %v899 = vpop.f32.mrf.mxu0
        %v900 = vadd.f32 0.0, %v899
        %v901 = vpop.f32.mrf.mxu0
        %v902 = vadd.f32 0.0, %v901
        %903 = vdwg.mxu0
        %v904 = vadd.f32 %v880, %v900
        %v905 = vadd.f32 %v881, %v902
        %s906 = sadd.s32 %s244, 3
        %s907 = smul.addr %s906, 2
        %s908 = scalar_lea.vmem %s207, %s907
        %v909 = vld [vmem:[%s908] sm:$0x3]
        %v911 = vsel %vm261, %v909, 0
        %913 = vmatpush.bf16.msra.mxu0 0
        %914 = vmatpush.bf16.msra.mxu0 0
        %915 = vmatpush.bf16.msra.mxu0 0
        %916 = vmatpush.bf16.msra.mxu0 0
        %917 = vmatpush.bf16.msra.mxu0 0
        %918 = vmatpush.bf16.msra.mxu0 0
        %919 = vmatpush.bf16.msra.mxu0 0
        %920 = vmatpush.bf16.msra.mxu0 %v911
        %921 = vmatmul.bf16.gmra.mxu0 %v440
        %v922 = vpop.f32.mrf.mxu0
        %v923 = vadd.f32 0.0, %v922
        %v924 = vpop.f32.mrf.mxu0
        %v925 = vadd.f32 0.0, %v924
        %926 = vdwg.mxu0
        %v927 = vadd.f32 %v904, %v923
        %v928 = vadd.f32 %v905, %v925
        %s929 = sadd.s32 %s244, 12
        %s930 = smul.addr %s929, 2
        %s931 = scalar_lea.vmem %s207, %s930
        %v932 = vld [vmem:[%s931] sm:$0x3]
        %v934 = vsel %vm261, %v932, 0
        %936 = vmatpush.bf16.msra.mxu0 0
        %937 = vmatpush.bf16.msra.mxu0 0
        %938 = vmatpush.bf16.msra.mxu0 0
        %939 = vmatpush.bf16.msra.mxu0 0
        %940 = vmatpush.bf16.msra.mxu0 0
        %941 = vmatpush.bf16.msra.mxu0 0
        %942 = vmatpush.bf16.msra.mxu0 0
        %943 = vmatpush.bf16.msra.mxu0 %v934
        %944 = vmatmul.bf16.gmra.mxu0 %v471
        %v945 = vpop.f32.mrf.mxu0
        %v946 = vadd.f32 0.0, %v945
        %v947 = vpop.f32.mrf.mxu0
        %v948 = vadd.f32 0.0, %v947
        %949 = vdwg.mxu0
        %v950 = vadd.f32 %v927, %v946
        %v951 = vadd.f32 %v928, %v948
        %952 = vst [vmem:[#allocation1] ss:$4 sm:$0xff] %v909
        %v953 = vld.sshfl [vmem:[#allocation1] sm:$0xff pattern:$0x73625140]
        %955 = vrot.lane.b32.xlu0 %v953, 127
        %v956 = vpop.permute.xlu0 %955
        %v958 = vsel %vm261, %v956, 0
        %960 = vmatpush.bf16.msra.mxu0 0
        %961 = vmatpush.bf16.msra.mxu0 0
        %962 = vmatpush.bf16.msra.mxu0 0
        %963 = vmatpush.bf16.msra.mxu0 0
        %964 = vmatpush.bf16.msra.mxu0 0
        %965 = vmatpush.bf16.msra.mxu0 0
        %966 = vmatpush.bf16.msra.mxu0 0
        %967 = vmatpush.bf16.msra.mxu0 %v958
        %968 = vmatmul.bf16.gmra.mxu0 %v503
        %v969 = vpop.f32.mrf.mxu0
        %v970 = vadd.f32 0.0, %v969
        %v971 = vpop.f32.mrf.mxu0
        %v972 = vadd.f32 0.0, %v971
        %973 = vdwg.mxu0
        %v974 = vadd.f32 %v950, %v970
        %v975 = vadd.f32 %v951, %v972
        %v976 = vsel %vm524, %v974, 0.0
        %977 = vadd.xlane.f32.xlu0 %v976
        %v978 = vpop.xlane.xlu0 %977
        %v979 = vsel %vm524, %v975, 0.0
        %980 = vadd.xlane.f32.xlu0 %v979
        %v981 = vpop.xlane.xlu0 %980
        %v982 = vadd.f32 %v753, %v978
        %v983 = vadd.f32 %v754, %v981
        %v984 = vmul.f32 %v974, %v974
        %v985 = vmul.f32 %v975, %v975
        %v986 = vsel %vm524, %v984, 0.0
        %987 = vadd.xlane.f32.xlu0 %v986
        %v988 = vpop.xlane.xlu0 %987
        %v989 = vsel %vm524, %v985, 0.0
        %990 = vadd.xlane.f32.xlu0 %v989
        %v991 = vpop.xlane.xlu0 %990
        %v992 = vadd.f32 %v763, %v988
        %v993 = vadd.f32 %v764, %v991
        %996 = vrot.lane.b32.xlu0 %v974, 16
        %v997 = vpop.permute.xlu0 %996
        %998 = vrot.lane.b32.xlu0 %v975, 16
        %v999 = vpop.permute.xlu0 %998
        %vm1002 = vcmask 195712
        %1003 = vst.msk [vmem:[%s544] sm:$0xff] %vm1002, %v997
        %1004 = vst.msk [vmem:[%s544 + $0x8] sm:$0xff] %vm1002, %v999
        %v1005 = vld [vmem:[%s908] sm:$0x3]
        %v1006 = vld [vmem:[%s931] sm:$0x3]
        %v1008 = vsel %vm261, %v1006, 0
        %1010 = vmatpush.bf16.msra.mxu0 0
        %1011 = vmatpush.bf16.msra.mxu0 0
        %1012 = vmatpush.bf16.msra.mxu0 0
        %1013 = vmatpush.bf16.msra.mxu0 0
        %1014 = vmatpush.bf16.msra.mxu0 0
        %1015 = vmatpush.bf16.msra.mxu0 0
        %1016 = vmatpush.bf16.msra.mxu0 0
        %1017 = vmatpush.bf16.msra.mxu0 %v1008
        %1018 = vmatmul.bf16.gmra.mxu0 %v259
        %v1019 = vpop.f32.mrf.mxu0
        %v1020 = vadd.f32 0.0, %v1019
        %v1021 = vpop.f32.mrf.mxu0
        %v1022 = vadd.f32 0.0, %v1021
        %1023 = vdwg.mxu0
        %v1025 = vsel %vm261, %v1005, 0
        %1027 = vmatpush.bf16.msra.mxu0 0
        %1028 = vmatpush.bf16.msra.mxu0 0
        %1029 = vmatpush.bf16.msra.mxu0 0
        %1030 = vmatpush.bf16.msra.mxu0 0
        %1031 = vmatpush.bf16.msra.mxu0 0
        %1032 = vmatpush.bf16.msra.mxu0 0
        %1033 = vmatpush.bf16.msra.mxu0 0
        %1034 = vmatpush.bf16.msra.mxu0 %v1025
        %1035 = vmatmul.bf16.gmra.mxu0 %v285
        %v1036 = vpop.f32.mrf.mxu0
        %v1037 = vadd.f32 %v1020, %v1036
        %v1038 = vpop.f32.mrf.mxu0
        %v1039 = vadd.f32 %v1022, %v1038
        %1040 = vdwg.mxu0
        %1041 = vst [vmem:[#allocation1] ss:$4 sm:$0xff] %v1005
        %v1042 = vld.sshfl [vmem:[#allocation1] sm:$0xff pattern:$0x73625140]
        %1044 = vrot.lane.b32.xlu0 %v1042, 127
        %v1045 = vpop.permute.xlu0 %1044
        %v1047 = vsel %vm261, %v1045, 0
        %1049 = vmatpush.bf16.msra.mxu0 0
        %1050 = vmatpush.bf16.msra.mxu0 0
        %1051 = vmatpush.bf16.msra.mxu0 0
        %1052 = vmatpush.bf16.msra.mxu0 0
        %1053 = vmatpush.bf16.msra.mxu0 0
        %1054 = vmatpush.bf16.msra.mxu0 0
        %1055 = vmatpush.bf16.msra.mxu0 0
        %1056 = vmatpush.bf16.msra.mxu0 %v1047
        %1057 = vmatmul.bf16.gmra.mxu0 %v315
        %v1058 = vpop.f32.mrf.mxu0
        %v1059 = vadd.f32 0.0, %v1058
        %v1060 = vpop.f32.mrf.mxu0
        %v1061 = vadd.f32 0.0, %v1060
        %1062 = vdwg.mxu0
        %v1063 = vadd.f32 %v1037, %v1059
        %v1064 = vadd.f32 %v1039, %v1061
        %s1065 = sadd.s32 %s244, 21
        %s1066 = smul.addr %s1065, 2
        %s1067 = scalar_lea.vmem %s207, %s1066
        %v1068 = vld [vmem:[%s1067] sm:$0x3]
        %v1070 = vsel %vm261, %v1068, 0
        %1072 = vmatpush.bf16.msra.mxu0 0
        %1073 = vmatpush.bf16.msra.mxu0 0
        %1074 = vmatpush.bf16.msra.mxu0 0
        %1075 = vmatpush.bf16.msra.mxu0 0
        %1076 = vmatpush.bf16.msra.mxu0 0
        %1077 = vmatpush.bf16.msra.mxu0 0
        %1078 = vmatpush.bf16.msra.mxu0 0
        %1079 = vmatpush.bf16.msra.mxu0 %v1070
        %1080 = vmatmul.bf16.gmra.mxu0 %v346
        %v1081 = vpop.f32.mrf.mxu0
        %v1082 = vadd.f32 0.0, %v1081
        %v1083 = vpop.f32.mrf.mxu0
        %v1084 = vadd.f32 0.0, %v1083
        %1085 = vdwg.mxu0
        %v1086 = vadd.f32 %v1063, %v1082
        %v1087 = vadd.f32 %v1064, %v1084
        %s1088 = sadd.s32 %s244, 30
        %s1089 = smul.addr %s1088, 2
        %s1090 = scalar_lea.vmem %s207, %s1089
        %v1091 = vld [vmem:[%s1090] sm:$0x3]
        %v1093 = vsel %vm261, %v1091, 0
        %1095 = vmatpush.bf16.msra.mxu0 0
        %1096 = vmatpush.bf16.msra.mxu0 0
        %1097 = vmatpush.bf16.msra.mxu0 0
        %1098 = vmatpush.bf16.msra.mxu0 0
        %1099 = vmatpush.bf16.msra.mxu0 0
        %1100 = vmatpush.bf16.msra.mxu0 0
        %1101 = vmatpush.bf16.msra.mxu0 0
        %1102 = vmatpush.bf16.msra.mxu0 %v1093
        %1103 = vmatmul.bf16.gmra.mxu0 %v377
        %v1104 = vpop.f32.mrf.mxu0
        %v1105 = vadd.f32 0.0, %v1104
        %v1106 = vpop.f32.mrf.mxu0
        %v1107 = vadd.f32 0.0, %v1106
        %1108 = vdwg.mxu0
        %v1109 = vadd.f32 %v1086, %v1105
        %v1110 = vadd.f32 %v1087, %v1107
        %1111 = vst [vmem:[#allocation1] ss:$4 sm:$0xff] %v1068
        %v1112 = vld.sshfl [vmem:[#allocation1] sm:$0xff pattern:$0x73625140]
        %1114 = vrot.lane.b32.xlu0 %v1112, 127
        %v1115 = vpop.permute.xlu0 %1114
        %v1117 = vsel %vm261, %v1115, 0
        %1119 = vmatpush.bf16.msra.mxu0 0
        %1120 = vmatpush.bf16.msra.mxu0 0
        %1121 = vmatpush.bf16.msra.mxu0 0
        %1122 = vmatpush.bf16.msra.mxu0 0
        %1123 = vmatpush.bf16.msra.mxu0 0
        %1124 = vmatpush.bf16.msra.mxu0 0
        %1125 = vmatpush.bf16.msra.mxu0 0
        %1126 = vmatpush.bf16.msra.mxu0 %v1117
        %1127 = vmatmul.bf16.gmra.mxu0 %v409
        %v1128 = vpop.f32.mrf.mxu0
        %v1129 = vadd.f32 0.0, %v1128
        %v1130 = vpop.f32.mrf.mxu0
        %v1131 = vadd.f32 0.0, %v1130
        %1132 = vdwg.mxu0
        %v1133 = vadd.f32 %v1109, %v1129
        %v1134 = vadd.f32 %v1110, %v1131
        %s1135 = sadd.s32 %s244, 4
        %s1136 = smul.addr %s1135, 2
        %s1137 = scalar_lea.vmem %s207, %s1136
        %v1138 = vld [vmem:[%s1137] sm:$0x3]
        %v1140 = vsel %vm261, %v1138, 0
        %1142 = vmatpush.bf16.msra.mxu0 0
        %1143 = vmatpush.bf16.msra.mxu0 0
        %1144 = vmatpush.bf16.msra.mxu0 0
        %1145 = vmatpush.bf16.msra.mxu0 0
        %1146 = vmatpush.bf16.msra.mxu0 0
        %1147 = vmatpush.bf16.msra.mxu0 0
        %1148 = vmatpush.bf16.msra.mxu0 0
        %1149 = vmatpush.bf16.msra.mxu0 %v1140
        %1150 = vmatmul.bf16.gmra.mxu0 %v440
        %v1151 = vpop.f32.mrf.mxu0
        %v1152 = vadd.f32 0.0, %v1151
        %v1153 = vpop.f32.mrf.mxu0
        %v1154 = vadd.f32 0.0, %v1153
        %1155 = vdwg.mxu0
        %v1156 = vadd.f32 %v1133, %v1152
        %v1157 = vadd.f32 %v1134, %v1154
        %s1158 = sadd.s32 %s244, 13
        %s1159 = smul.addr %s1158, 2
        %s1160 = scalar_lea.vmem %s207, %s1159
        %v1161 = vld [vmem:[%s1160] sm:$0x3]
        %v1163 = vsel %vm261, %v1161, 0
        %1165 = vmatpush.bf16.msra.mxu0 0
        %1166 = vmatpush.bf16.msra.mxu0 0
        %1167 = vmatpush.bf16.msra.mxu0 0
        %1168 = vmatpush.bf16.msra.mxu0 0
        %1169 = vmatpush.bf16.msra.mxu0 0
        %1170 = vmatpush.bf16.msra.mxu0 0
        %1171 = vmatpush.bf16.msra.mxu0 0
        %1172 = vmatpush.bf16.msra.mxu0 %v1163
        %1173 = vmatmul.bf16.gmra.mxu0 %v471
        %v1174 = vpop.f32.mrf.mxu0
        %v1175 = vadd.f32 0.0, %v1174
        %v1176 = vpop.f32.mrf.mxu0
        %v1177 = vadd.f32 0.0, %v1176
        %1178 = vdwg.mxu0
        %v1179 = vadd.f32 %v1156, %v1175
        %v1180 = vadd.f32 %v1157, %v1177
        %1181 = vst [vmem:[#allocation1] ss:$4 sm:$0xff] %v1138
        %v1182 = vld.sshfl [vmem:[#allocation1] sm:$0xff pattern:$0x73625140]
        %1184 = vrot.lane.b32.xlu0 %v1182, 127
        %v1185 = vpop.permute.xlu0 %1184
        %v1187 = vsel %vm261, %v1185, 0
        %1189 = vmatpush.bf16.msra.mxu0 0
        %1190 = vmatpush.bf16.msra.mxu0 0
        %1191 = vmatpush.bf16.msra.mxu0 0
        %1192 = vmatpush.bf16.msra.mxu0 0
        %1193 = vmatpush.bf16.msra.mxu0 0
        %1194 = vmatpush.bf16.msra.mxu0 0
        %1195 = vmatpush.bf16.msra.mxu0 0
        %1196 = vmatpush.bf16.msra.mxu0 %v1187
        %1197 = vmatmul.bf16.gmra.mxu0 %v503
        %v1198 = vpop.f32.mrf.mxu0
        %v1199 = vadd.f32 0.0, %v1198
        %v1200 = vpop.f32.mrf.mxu0
        %v1201 = vadd.f32 0.0, %v1200
        %1202 = vdwg.mxu0
        %v1203 = vadd.f32 %v1179, %v1199
        %v1204 = vadd.f32 %v1180, %v1201
        %v1205 = vsel %vm524, %v1203, 0.0
        %1206 = vadd.xlane.f32.xlu0 %v1205
        %v1207 = vpop.xlane.xlu0 %1206
        %v1208 = vsel %vm524, %v1204, 0.0
        %1209 = vadd.xlane.f32.xlu0 %v1208
        %v1210 = vpop.xlane.xlu0 %1209
        %v1211 = vadd.f32 %v982, %v1207
        %v1212 = vadd.f32 %v983, %v1210
        %v1213 = vmul.f32 %v1203, %v1203
        %v1214 = vmul.f32 %v1204, %v1204
        %v1215 = vsel %vm524, %v1213, 0.0
        %1216 = vadd.xlane.f32.xlu0 %v1215
        %v1217 = vpop.xlane.xlu0 %1216
        %v1218 = vsel %vm524, %v1214, 0.0
        %1219 = vadd.xlane.f32.xlu0 %v1218
        %v1220 = vpop.xlane.xlu0 %1219
        %v1221 = vadd.f32 %v992, %v1217
        %v1222 = vadd.f32 %v993, %v1220
        %1225 = vrot.lane.b32.xlu0 %v1203, 24
        %v1226 = vpop.permute.xlu0 %1225
        %1227 = vrot.lane.b32.xlu0 %v1204, 24
        %v1228 = vpop.permute.xlu0 %1227
        %vm1231 = vcmask 261312
        %1232 = vst.msk [vmem:[%s544] sm:$0xff] %vm1231, %v1226
        %1233 = vst.msk [vmem:[%s544 + $0x8] sm:$0xff] %vm1231, %v1228
        %v1234 = vld [vmem:[%s1137] sm:$0x3]
        %v1235 = vld [vmem:[%s1160] sm:$0x3]
        %v1237 = vsel %vm261, %v1235, 0
        %1239 = vmatpush.bf16.msra.mxu0 0
        %1240 = vmatpush.bf16.msra.mxu0 0
        %1241 = vmatpush.bf16.msra.mxu0 0
        %1242 = vmatpush.bf16.msra.mxu0 0
        %1243 = vmatpush.bf16.msra.mxu0 0
        %1244 = vmatpush.bf16.msra.mxu0 0
        %1245 = vmatpush.bf16.msra.mxu0 0
        %1246 = vmatpush.bf16.msra.mxu0 %v1237
        %1247 = vmatmul.bf16.gmra.mxu0 %v259
        %v1248 = vpop.f32.mrf.mxu0
        %v1249 = vadd.f32 0.0, %v1248
        %v1250 = vpop.f32.mrf.mxu0
        %v1251 = vadd.f32 0.0, %v1250
        %1252 = vdwg.mxu0
        %v1254 = vsel %vm261, %v1234, 0
        %1256 = vmatpush.bf16.msra.mxu0 0
        %1257 = vmatpush.bf16.msra.mxu0 0
        %1258 = vmatpush.bf16.msra.mxu0 0
        %1259 = vmatpush.bf16.msra.mxu0 0
        %1260 = vmatpush.bf16.msra.mxu0 0
        %1261 = vmatpush.bf16.msra.mxu0 0
        %1262 = vmatpush.bf16.msra.mxu0 0
        %1263 = vmatpush.bf16.msra.mxu0 %v1254
        %1264 = vmatmul.bf16.gmra.mxu0 %v285
        %v1265 = vpop.f32.mrf.mxu0
        %v1266 = vadd.f32 %v1249, %v1265
        %v1267 = vpop.f32.mrf.mxu0
        %v1268 = vadd.f32 %v1251, %v1267
        %1269 = vdwg.mxu0
        %1270 = vst [vmem:[#allocation1] ss:$4 sm:$0xff] %v1234
        %v1271 = vld.sshfl [vmem:[#allocation1] sm:$0xff pattern:$0x73625140]
        %1273 = vrot.lane.b32.xlu0 %v1271, 127
        %v1274 = vpop.permute.xlu0 %1273
        %v1276 = vsel %vm261, %v1274, 0
        %1278 = vmatpush.bf16.msra.mxu0 0
        %1279 = vmatpush.bf16.msra.mxu0 0
        %1280 = vmatpush.bf16.msra.mxu0 0
        %1281 = vmatpush.bf16.msra.mxu0 0
        %1282 = vmatpush.bf16.msra.mxu0 0
        %1283 = vmatpush.bf16.msra.mxu0 0
        %1284 = vmatpush.bf16.msra.mxu0 0
        %1285 = vmatpush.bf16.msra.mxu0 %v1276
        %1286 = vmatmul.bf16.gmra.mxu0 %v315
        %v1287 = vpop.f32.mrf.mxu0
        %v1288 = vadd.f32 0.0, %v1287
        %v1289 = vpop.f32.mrf.mxu0
        %v1290 = vadd.f32 0.0, %v1289
        %1291 = vdwg.mxu0
        %v1292 = vadd.f32 %v1266, %v1288
        %v1293 = vadd.f32 %v1268, %v1290
        %s1294 = sadd.s32 %s244, 22
        %s1295 = smul.addr %s1294, 2
        %s1296 = scalar_lea.vmem %s207, %s1295
        %v1297 = vld [vmem:[%s1296] sm:$0x3]
        %v1299 = vsel %vm261, %v1297, 0
        %1301 = vmatpush.bf16.msra.mxu0 0
        %1302 = vmatpush.bf16.msra.mxu0 0
        %1303 = vmatpush.bf16.msra.mxu0 0
        %1304 = vmatpush.bf16.msra.mxu0 0
        %1305 = vmatpush.bf16.msra.mxu0 0
        %1306 = vmatpush.bf16.msra.mxu0 0
        %1307 = vmatpush.bf16.msra.mxu0 0
        %1308 = vmatpush.bf16.msra.mxu0 %v1299
        %1309 = vmatmul.bf16.gmra.mxu0 %v346
        %v1310 = vpop.f32.mrf.mxu0
        %v1311 = vadd.f32 0.0, %v1310
        %v1312 = vpop.f32.mrf.mxu0
        %v1313 = vadd.f32 0.0, %v1312
        %1314 = vdwg.mxu0
        %v1315 = vadd.f32 %v1292, %v1311
        %v1316 = vadd.f32 %v1293, %v1313
        %s1317 = sadd.s32 %s244, 31
        %s1318 = smul.addr %s1317, 2
        %s1319 = scalar_lea.vmem %s207, %s1318
        %v1320 = vld [vmem:[%s1319] sm:$0x3]
        %v1322 = vsel %vm261, %v1320, 0
        %1324 = vmatpush.bf16.msra.mxu0 0
        %1325 = vmatpush.bf16.msra.mxu0 0
        %1326 = vmatpush.bf16.msra.mxu0 0
        %1327 = vmatpush.bf16.msra.mxu0 0
        %1328 = vmatpush.bf16.msra.mxu0 0
        %1329 = vmatpush.bf16.msra.mxu0 0
        %1330 = vmatpush.bf16.msra.mxu0 0
        %1331 = vmatpush.bf16.msra.mxu0 %v1322
        %1332 = vmatmul.bf16.gmra.mxu0 %v377
        %v1333 = vpop.f32.mrf.mxu0
        %v1334 = vadd.f32 0.0, %v1333
        %v1335 = vpop.f32.mrf.mxu0
        %v1336 = vadd.f32 0.0, %v1335
        %1337 = vdwg.mxu0
        %v1338 = vadd.f32 %v1315, %v1334
        %v1339 = vadd.f32 %v1316, %v1336
        %1340 = vst [vmem:[#allocation1] ss:$4 sm:$0xff] %v1297
        %v1341 = vld.sshfl [vmem:[#allocation1] sm:$0xff pattern:$0x73625140]
        %1343 = vrot.lane.b32.xlu0 %v1341, 127
        %v1344 = vpop.permute.xlu0 %1343
        %v1346 = vsel %vm261, %v1344, 0
        %1348 = vmatpush.bf16.msra.mxu0 0
        %1349 = vmatpush.bf16.msra.mxu0 0
        %1350 = vmatpush.bf16.msra.mxu0 0
        %1351 = vmatpush.bf16.msra.mxu0 0
        %1352 = vmatpush.bf16.msra.mxu0 0
        %1353 = vmatpush.bf16.msra.mxu0 0
        %1354 = vmatpush.bf16.msra.mxu0 0
        %1355 = vmatpush.bf16.msra.mxu0 %v1346
        %1356 = vmatmul.bf16.gmra.mxu0 %v409
        %v1357 = vpop.f32.mrf.mxu0
        %v1358 = vadd.f32 0.0, %v1357
        %v1359 = vpop.f32.mrf.mxu0
        %v1360 = vadd.f32 0.0, %v1359
        %1361 = vdwg.mxu0
        %v1362 = vadd.f32 %v1338, %v1358
        %v1363 = vadd.f32 %v1339, %v1360
        %s1364 = sadd.s32 %s244, 5
        %s1365 = smul.addr %s1364, 2
        %s1366 = scalar_lea.vmem %s207, %s1365
        %v1367 = vld [vmem:[%s1366] sm:$0x3]
        %v1369 = vsel %vm261, %v1367, 0
        %1371 = vmatpush.bf16.msra.mxu0 0
        %1372 = vmatpush.bf16.msra.mxu0 0
        %1373 = vmatpush.bf16.msra.mxu0 0
        %1374 = vmatpush.bf16.msra.mxu0 0
        %1375 = vmatpush.bf16.msra.mxu0 0
        %1376 = vmatpush.bf16.msra.mxu0 0
        %1377 = vmatpush.bf16.msra.mxu0 0
        %1378 = vmatpush.bf16.msra.mxu0 %v1369
        %1379 = vmatmul.bf16.gmra.mxu0 %v440
        %v1380 = vpop.f32.mrf.mxu0
        %v1381 = vadd.f32 0.0, %v1380
        %v1382 = vpop.f32.mrf.mxu0
        %v1383 = vadd.f32 0.0, %v1382
        %1384 = vdwg.mxu0
        %v1385 = vadd.f32 %v1362, %v1381
        %v1386 = vadd.f32 %v1363, %v1383
        %s1387 = sadd.s32 %s244, 14
        %s1388 = smul.addr %s1387, 2
        %s1389 = scalar_lea.vmem %s207, %s1388
        %v1390 = vld [vmem:[%s1389] sm:$0x3]
        %v1392 = vsel %vm261, %v1390, 0
        %1394 = vmatpush.bf16.msra.mxu0 0
        %1395 = vmatpush.bf16.msra.mxu0 0
        %1396 = vmatpush.bf16.msra.mxu0 0
        %1397 = vmatpush.bf16.msra.mxu0 0
        %1398 = vmatpush.bf16.msra.mxu0 0
        %1399 = vmatpush.bf16.msra.mxu0 0
        %1400 = vmatpush.bf16.msra.mxu0 0
        %1401 = vmatpush.bf16.msra.mxu0 %v1392
        %1402 = vmatmul.bf16.gmra.mxu0 %v471
        %v1403 = vpop.f32.mrf.mxu0
        %v1404 = vadd.f32 0.0, %v1403
        %v1405 = vpop.f32.mrf.mxu0
        %v1406 = vadd.f32 0.0, %v1405
        %1407 = vdwg.mxu0
        %v1408 = vadd.f32 %v1385, %v1404
        %v1409 = vadd.f32 %v1386, %v1406
        %1410 = vst [vmem:[#allocation1] ss:$4 sm:$0xff] %v1367
        %v1411 = vld.sshfl [vmem:[#allocation1] sm:$0xff pattern:$0x73625140]
        %1413 = vrot.lane.b32.xlu0 %v1411, 127
        %v1414 = vpop.permute.xlu0 %1413
        %v1416 = vsel %vm261, %v1414, 0
        %1418 = vmatpush.bf16.msra.mxu0 0
        %1419 = vmatpush.bf16.msra.mxu0 0
        %1420 = vmatpush.bf16.msra.mxu0 0
        %1421 = vmatpush.bf16.msra.mxu0 0
        %1422 = vmatpush.bf16.msra.mxu0 0
        %1423 = vmatpush.bf16.msra.mxu0 0
        %1424 = vmatpush.bf16.msra.mxu0 0
        %1425 = vmatpush.bf16.msra.mxu0 %v1416
        %1426 = vmatmul.bf16.gmra.mxu0 %v503
        %v1427 = vpop.f32.mrf.mxu0
        %v1428 = vadd.f32 0.0, %v1427
        %v1429 = vpop.f32.mrf.mxu0
        %v1430 = vadd.f32 0.0, %v1429
        %1431 = vdwg.mxu0
        %v1432 = vadd.f32 %v1408, %v1428
        %v1433 = vadd.f32 %v1409, %v1430
        %v1434 = vsel %vm524, %v1432, 0.0
        %1435 = vadd.xlane.f32.xlu0 %v1434
        %v1436 = vpop.xlane.xlu0 %1435
        %v1437 = vsel %vm524, %v1433, 0.0
        %1438 = vadd.xlane.f32.xlu0 %v1437
        %v1439 = vpop.xlane.xlu0 %1438
        %v1440 = vadd.f32 %v1211, %v1436
        %v1441 = vadd.f32 %v1212, %v1439
        %v1442 = vmul.f32 %v1432, %v1432
        %v1443 = vmul.f32 %v1433, %v1433
        %v1444 = vsel %vm524, %v1442, 0.0
        %1445 = vadd.xlane.f32.xlu0 %v1444
        %v1446 = vpop.xlane.xlu0 %1445
        %v1447 = vsel %vm524, %v1443, 0.0
        %1448 = vadd.xlane.f32.xlu0 %v1447
        %v1449 = vpop.xlane.xlu0 %1448
        %v1450 = vadd.f32 %v1221, %v1446
        %v1451 = vadd.f32 %v1222, %v1449
        %1454 = vrot.lane.b32.xlu0 %v1432, 32
        %v1455 = vpop.permute.xlu0 %1454
        %1456 = vrot.lane.b32.xlu0 %v1433, 32
        %v1457 = vpop.permute.xlu0 %1456
        %vm1460 = vcmask 326912
        %1461 = vst.msk [vmem:[%s544] sm:$0xff] %vm1460, %v1455
        %1462 = vst.msk [vmem:[%s544 + $0x8] sm:$0xff] %vm1460, %v1457
        %v1463 = vld [vmem:[%s1366] sm:$0x3]
        %v1464 = vld [vmem:[%s1389] sm:$0x3]
        %v1466 = vsel %vm261, %v1464, 0
        %1468 = vmatpush.bf16.msra.mxu0 0
        %1469 = vmatpush.bf16.msra.mxu0 0
        %1470 = vmatpush.bf16.msra.mxu0 0
        %1471 = vmatpush.bf16.msra.mxu0 0
        %1472 = vmatpush.bf16.msra.mxu0 0
        %1473 = vmatpush.bf16.msra.mxu0 0
        %1474 = vmatpush.bf16.msra.mxu0 0
        %1475 = vmatpush.bf16.msra.mxu0 %v1466
        %1476 = vmatmul.bf16.gmra.mxu0 %v259
        %v1477 = vpop.f32.mrf.mxu0
        %v1478 = vadd.f32 0.0, %v1477
        %v1479 = vpop.f32.mrf.mxu0
        %v1480 = vadd.f32 0.0, %v1479
        %1481 = vdwg.mxu0
        %v1483 = vsel %vm261, %v1463, 0
        %1485 = vmatpush.bf16.msra.mxu0 0
        %1486 = vmatpush.bf16.msra.mxu0 0
        %1487 = vmatpush.bf16.msra.mxu0 0
        %1488 = vmatpush.bf16.msra.mxu0 0
        %1489 = vmatpush.bf16.msra.mxu0 0
        %1490 = vmatpush.bf16.msra.mxu0 0
        %1491 = vmatpush.bf16.msra.mxu0 0
        %1492 = vmatpush.bf16.msra.mxu0 %v1483
        %1493 = vmatmul.bf16.gmra.mxu0 %v285
        %v1494 = vpop.f32.mrf.mxu0
        %v1495 = vadd.f32 %v1478, %v1494
        %v1496 = vpop.f32.mrf.mxu0
        %v1497 = vadd.f32 %v1480, %v1496
        %1498 = vdwg.mxu0
        %1499 = vst [vmem:[#allocation1] ss:$4 sm:$0xff] %v1463
        %v1500 = vld.sshfl [vmem:[#allocation1] sm:$0xff pattern:$0x73625140]
        %1502 = vrot.lane.b32.xlu0 %v1500, 127
        %v1503 = vpop.permute.xlu0 %1502
        %v1505 = vsel %vm261, %v1503, 0
        %1507 = vmatpush.bf16.msra.mxu0 0
        %1508 = vmatpush.bf16.msra.mxu0 0
        %1509 = vmatpush.bf16.msra.mxu0 0
        %1510 = vmatpush.bf16.msra.mxu0 0
        %1511 = vmatpush.bf16.msra.mxu0 0
        %1512 = vmatpush.bf16.msra.mxu0 0
        %1513 = vmatpush.bf16.msra.mxu0 0
        %1514 = vmatpush.bf16.msra.mxu0 %v1505
        %1515 = vmatmul.bf16.gmra.mxu0 %v315
        %v1516 = vpop.f32.mrf.mxu0
        %v1517 = vadd.f32 0.0, %v1516
        %v1518 = vpop.f32.mrf.mxu0
        %v1519 = vadd.f32 0.0, %v1518
        %1520 = vdwg.mxu0
        %v1521 = vadd.f32 %v1495, %v1517
        %v1522 = vadd.f32 %v1497, %v1519
        %s1523 = sadd.s32 %s244, 23
        %s1524 = smul.addr %s1523, 2
        %s1525 = scalar_lea.vmem %s207, %s1524
        %v1526 = vld [vmem:[%s1525] sm:$0x3]
        %v1528 = vsel %vm261, %v1526, 0
        %1530 = vmatpush.bf16.msra.mxu0 0
        %1531 = vmatpush.bf16.msra.mxu0 0
        %1532 = vmatpush.bf16.msra.mxu0 0
        %1533 = vmatpush.bf16.msra.mxu0 0
        %1534 = vmatpush.bf16.msra.mxu0 0
        %1535 = vmatpush.bf16.msra.mxu0 0
        %1536 = vmatpush.bf16.msra.mxu0 0
        %1537 = vmatpush.bf16.msra.mxu0 %v1528
        %1538 = vmatmul.bf16.gmra.mxu0 %v346
        %v1539 = vpop.f32.mrf.mxu0
        %v1540 = vadd.f32 0.0, %v1539
        %v1541 = vpop.f32.mrf.mxu0
        %v1542 = vadd.f32 0.0, %v1541
        %1543 = vdwg.mxu0
        %v1544 = vadd.f32 %v1521, %v1540
        %v1545 = vadd.f32 %v1522, %v1542
        %s1546 = sadd.s32 %s244, 32
        %s1547 = smul.addr %s1546, 2
        %s1548 = scalar_lea.vmem %s207, %s1547
        %v1549 = vld [vmem:[%s1548] sm:$0x3]
        %v1551 = vsel %vm261, %v1549, 0
        %1553 = vmatpush.bf16.msra.mxu0 0
        %1554 = vmatpush.bf16.msra.mxu0 0
        %1555 = vmatpush.bf16.msra.mxu0 0
        %1556 = vmatpush.bf16.msra.mxu0 0
        %1557 = vmatpush.bf16.msra.mxu0 0
        %1558 = vmatpush.bf16.msra.mxu0 0
        %1559 = vmatpush.bf16.msra.mxu0 0
        %1560 = vmatpush.bf16.msra.mxu0 %v1551
        %1561 = vmatmul.bf16.gmra.mxu0 %v377
        %v1562 = vpop.f32.mrf.mxu0
        %v1563 = vadd.f32 0.0, %v1562
        %v1564 = vpop.f32.mrf.mxu0
        %v1565 = vadd.f32 0.0, %v1564
        %1566 = vdwg.mxu0
        %v1567 = vadd.f32 %v1544, %v1563
        %v1568 = vadd.f32 %v1545, %v1565
        %1569 = vst [vmem:[#allocation1] ss:$4 sm:$0xff] %v1526
        %v1570 = vld.sshfl [vmem:[#allocation1] sm:$0xff pattern:$0x73625140]
        %1572 = vrot.lane.b32.xlu0 %v1570, 127
        %v1573 = vpop.permute.xlu0 %1572
        %v1575 = vsel %vm261, %v1573, 0
        %1577 = vmatpush.bf16.msra.mxu0 0
        %1578 = vmatpush.bf16.msra.mxu0 0
        %1579 = vmatpush.bf16.msra.mxu0 0
        %1580 = vmatpush.bf16.msra.mxu0 0
        %1581 = vmatpush.bf16.msra.mxu0 0
        %1582 = vmatpush.bf16.msra.mxu0 0
        %1583 = vmatpush.bf16.msra.mxu0 0
        %1584 = vmatpush.bf16.msra.mxu0 %v1575
        %1585 = vmatmul.bf16.gmra.mxu0 %v409
        %v1586 = vpop.f32.mrf.mxu0
        %v1587 = vadd.f32 0.0, %v1586
        %v1588 = vpop.f32.mrf.mxu0
        %v1589 = vadd.f32 0.0, %v1588
        %1590 = vdwg.mxu0
        %v1591 = vadd.f32 %v1567, %v1587
        %v1592 = vadd.f32 %v1568, %v1589
        %s1593 = sadd.s32 %s244, 6
        %s1594 = smul.addr %s1593, 2
        %s1595 = scalar_lea.vmem %s207, %s1594
        %v1596 = vld [vmem:[%s1595] sm:$0x3]
        %v1598 = vsel %vm261, %v1596, 0
        %1600 = vmatpush.bf16.msra.mxu0 0
        %1601 = vmatpush.bf16.msra.mxu0 0
        %1602 = vmatpush.bf16.msra.mxu0 0
        %1603 = vmatpush.bf16.msra.mxu0 0
        %1604 = vmatpush.bf16.msra.mxu0 0
        %1605 = vmatpush.bf16.msra.mxu0 0
        %1606 = vmatpush.bf16.msra.mxu0 0
        %1607 = vmatpush.bf16.msra.mxu0 %v1598
        %1608 = vmatmul.bf16.gmra.mxu0 %v440
        %v1609 = vpop.f32.mrf.mxu0
        %v1610 = vadd.f32 0.0, %v1609
        %v1611 = vpop.f32.mrf.mxu0
        %v1612 = vadd.f32 0.0, %v1611
        %1613 = vdwg.mxu0
        %v1614 = vadd.f32 %v1591, %v1610
        %v1615 = vadd.f32 %v1592, %v1612
        %s1616 = sadd.s32 %s244, 15
        %s1617 = smul.addr %s1616, 2
        %s1618 = scalar_lea.vmem %s207, %s1617
        %v1619 = vld [vmem:[%s1618] sm:$0x3]
        %v1621 = vsel %vm261, %v1619, 0
        %1623 = vmatpush.bf16.msra.mxu0 0
        %1624 = vmatpush.bf16.msra.mxu0 0
        %1625 = vmatpush.bf16.msra.mxu0 0
        %1626 = vmatpush.bf16.msra.mxu0 0
        %1627 = vmatpush.bf16.msra.mxu0 0
        %1628 = vmatpush.bf16.msra.mxu0 0
        %1629 = vmatpush.bf16.msra.mxu0 0
        %1630 = vmatpush.bf16.msra.mxu0 %v1621
        %1631 = vmatmul.bf16.gmra.mxu0 %v471
        %v1632 = vpop.f32.mrf.mxu0
        %v1633 = vadd.f32 0.0, %v1632
        %v1634 = vpop.f32.mrf.mxu0
        %v1635 = vadd.f32 0.0, %v1634
        %1636 = vdwg.mxu0
        %v1637 = vadd.f32 %v1614, %v1633
        %v1638 = vadd.f32 %v1615, %v1635
        %1639 = vst [vmem:[#allocation1] ss:$4 sm:$0xff] %v1596
        %v1640 = vld.sshfl [vmem:[#allocation1] sm:$0xff pattern:$0x73625140]
        %1642 = vrot.lane.b32.xlu0 %v1640, 127
        %v1643 = vpop.permute.xlu0 %1642
        %v1645 = vsel %vm261, %v1643, 0
        %1647 = vmatpush.bf16.msra.mxu0 0
        %1648 = vmatpush.bf16.msra.mxu0 0
        %1649 = vmatpush.bf16.msra.mxu0 0
        %1650 = vmatpush.bf16.msra.mxu0 0
        %1651 = vmatpush.bf16.msra.mxu0 0
        %1652 = vmatpush.bf16.msra.mxu0 0
        %1653 = vmatpush.bf16.msra.mxu0 0
        %1654 = vmatpush.bf16.msra.mxu0 %v1645
        %1655 = vmatmul.bf16.gmra.mxu0 %v503
        %v1656 = vpop.f32.mrf.mxu0
        %v1657 = vadd.f32 0.0, %v1656
        %v1658 = vpop.f32.mrf.mxu0
        %v1659 = vadd.f32 0.0, %v1658
        %1660 = vdwg.mxu0
        %v1661 = vadd.f32 %v1637, %v1657
        %v1662 = vadd.f32 %v1638, %v1659
        %v1663 = vsel %vm524, %v1661, 0.0
        %1664 = vadd.xlane.f32.xlu0 %v1663
        %v1665 = vpop.xlane.xlu0 %1664
        %v1666 = vsel %vm524, %v1662, 0.0
        %1667 = vadd.xlane.f32.xlu0 %v1666
        %v1668 = vpop.xlane.xlu0 %1667
        %v1669 = vadd.f32 %v1440, %v1665
        %v1670 = vadd.f32 %v1441, %v1668
        %v1671 = vmul.f32 %v1661, %v1661
        %v1672 = vmul.f32 %v1662, %v1662
        %v1673 = vsel %vm524, %v1671, 0.0
        %1674 = vadd.xlane.f32.xlu0 %v1673
        %v1675 = vpop.xlane.xlu0 %1674
        %v1676 = vsel %vm524, %v1672, 0.0
        %1677 = vadd.xlane.f32.xlu0 %v1676
        %v1678 = vpop.xlane.xlu0 %1677
        %v1679 = vadd.f32 %v1450, %v1675
        %v1680 = vadd.f32 %v1451, %v1678
        %1683 = vrot.lane.b32.xlu0 %v1661, 40
        %v1684 = vpop.permute.xlu0 %1683
        %1685 = vrot.lane.b32.xlu0 %v1662, 40
        %v1686 = vpop.permute.xlu0 %1685
        %vm1689 = vcmask 392512
        %1690 = vst.msk [vmem:[%s544] sm:$0xff] %vm1689, %v1684
        %1691 = vst.msk [vmem:[%s544 + $0x8] sm:$0xff] %vm1689, %v1686
        %v1692 = vld [vmem:[%s1595] sm:$0x3]
        %v1693 = vld [vmem:[%s1618] sm:$0x3]
        %v1695 = vsel %vm261, %v1693, 0
        %1697 = vmatpush.bf16.msra.mxu0 0
        %1698 = vmatpush.bf16.msra.mxu0 0
        %1699 = vmatpush.bf16.msra.mxu0 0
        %1700 = vmatpush.bf16.msra.mxu0 0
        %1701 = vmatpush.bf16.msra.mxu0 0
        %1702 = vmatpush.bf16.msra.mxu0 0
        %1703 = vmatpush.bf16.msra.mxu0 0
        %1704 = vmatpush.bf16.msra.mxu0 %v1695
        %1705 = vmatmul.bf16.gmra.mxu0 %v259
        %v1706 = vpop.f32.mrf.mxu0
        %v1707 = vadd.f32 0.0, %v1706
        %v1708 = vpop.f32.mrf.mxu0
        %v1709 = vadd.f32 0.0, %v1708
        %1710 = vdwg.mxu0
        %v1712 = vsel %vm261, %v1692, 0
        %1714 = vmatpush.bf16.msra.mxu0 0
        %1715 = vmatpush.bf16.msra.mxu0 0
        %1716 = vmatpush.bf16.msra.mxu0 0
        %1717 = vmatpush.bf16.msra.mxu0 0
        %1718 = vmatpush.bf16.msra.mxu0 0
        %1719 = vmatpush.bf16.msra.mxu0 0
        %1720 = vmatpush.bf16.msra.mxu0 0
        %1721 = vmatpush.bf16.msra.mxu0 %v1712
        %1722 = vmatmul.bf16.gmra.mxu0 %v285
        %v1723 = vpop.f32.mrf.mxu0
        %v1724 = vadd.f32 %v1707, %v1723
        %v1725 = vpop.f32.mrf.mxu0
        %v1726 = vadd.f32 %v1709, %v1725
        %1727 = vdwg.mxu0
        %1728 = vst [vmem:[#allocation1] ss:$4 sm:$0xff] %v1692
        %v1729 = vld.sshfl [vmem:[#allocation1] sm:$0xff pattern:$0x73625140]
        %1731 = vrot.lane.b32.xlu0 %v1729, 127
        %v1732 = vpop.permute.xlu0 %1731
        %v1734 = vsel %vm261, %v1732, 0
        %1736 = vmatpush.bf16.msra.mxu0 0
        %1737 = vmatpush.bf16.msra.mxu0 0
        %1738 = vmatpush.bf16.msra.mxu0 0
        %1739 = vmatpush.bf16.msra.mxu0 0
        %1740 = vmatpush.bf16.msra.mxu0 0
        %1741 = vmatpush.bf16.msra.mxu0 0
        %1742 = vmatpush.bf16.msra.mxu0 0
        %1743 = vmatpush.bf16.msra.mxu0 %v1734
        %1744 = vmatmul.bf16.gmra.mxu0 %v315
        %v1745 = vpop.f32.mrf.mxu0
        %v1746 = vadd.f32 0.0, %v1745
        %v1747 = vpop.f32.mrf.mxu0
        %v1748 = vadd.f32 0.0, %v1747
        %1749 = vdwg.mxu0
        %v1750 = vadd.f32 %v1724, %v1746
        %v1751 = vadd.f32 %v1726, %v1748
        %s1752 = sadd.s32 %s244, 24
        %s1753 = smul.addr %s1752, 2
        %s1754 = scalar_lea.vmem %s207, %s1753
        %v1755 = vld [vmem:[%s1754] sm:$0x3]
        %v1757 = vsel %vm261, %v1755, 0
        %1759 = vmatpush.bf16.msra.mxu0 0
        %1760 = vmatpush.bf16.msra.mxu0 0
        %1761 = vmatpush.bf16.msra.mxu0 0
        %1762 = vmatpush.bf16.msra.mxu0 0
        %1763 = vmatpush.bf16.msra.mxu0 0
        %1764 = vmatpush.bf16.msra.mxu0 0
        %1765 = vmatpush.bf16.msra.mxu0 0
        %1766 = vmatpush.bf16.msra.mxu0 %v1757
        %1767 = vmatmul.bf16.gmra.mxu0 %v346
        %v1768 = vpop.f32.mrf.mxu0
        %v1769 = vadd.f32 0.0, %v1768
        %v1770 = vpop.f32.mrf.mxu0
        %v1771 = vadd.f32 0.0, %v1770
        %1772 = vdwg.mxu0
        %v1773 = vadd.f32 %v1750, %v1769
        %v1774 = vadd.f32 %v1751, %v1771
        %s1775 = sadd.s32 %s244, 33
        %s1776 = smul.addr %s1775, 2
        %s1777 = scalar_lea.vmem %s207, %s1776
        %v1778 = vld [vmem:[%s1777] sm:$0x3]
        %v1780 = vsel %vm261, %v1778, 0
        %1782 = vmatpush.bf16.msra.mxu0 0
        %1783 = vmatpush.bf16.msra.mxu0 0
        %1784 = vmatpush.bf16.msra.mxu0 0
        %1785 = vmatpush.bf16.msra.mxu0 0
        %1786 = vmatpush.bf16.msra.mxu0 0
        %1787 = vmatpush.bf16.msra.mxu0 0
        %1788 = vmatpush.bf16.msra.mxu0 0
        %1789 = vmatpush.bf16.msra.mxu0 %v1780
        %1790 = vmatmul.bf16.gmra.mxu0 %v377
        %v1791 = vpop.f32.mrf.mxu0
        %v1792 = vadd.f32 0.0, %v1791
        %v1793 = vpop.f32.mrf.mxu0
        %v1794 = vadd.f32 0.0, %v1793
        %1795 = vdwg.mxu0
        %v1796 = vadd.f32 %v1773, %v1792
        %v1797 = vadd.f32 %v1774, %v1794
        %1798 = vst [vmem:[#allocation1] ss:$4 sm:$0xff] %v1755
        %v1799 = vld.sshfl [vmem:[#allocation1] sm:$0xff pattern:$0x73625140]
        %1801 = vrot.lane.b32.xlu0 %v1799, 127
        %v1802 = vpop.permute.xlu0 %1801
        %v1804 = vsel %vm261, %v1802, 0
        %1806 = vmatpush.bf16.msra.mxu0 0
        %1807 = vmatpush.bf16.msra.mxu0 0
        %1808 = vmatpush.bf16.msra.mxu0 0
        %1809 = vmatpush.bf16.msra.mxu0 0
        %1810 = vmatpush.bf16.msra.mxu0 0
        %1811 = vmatpush.bf16.msra.mxu0 0
        %1812 = vmatpush.bf16.msra.mxu0 0
        %1813 = vmatpush.bf16.msra.mxu0 %v1804
        %1814 = vmatmul.bf16.gmra.mxu0 %v409
        %v1815 = vpop.f32.mrf.mxu0
        %v1816 = vadd.f32 0.0, %v1815
        %v1817 = vpop.f32.mrf.mxu0
        %v1818 = vadd.f32 0.0, %v1817
        %1819 = vdwg.mxu0
        %v1820 = vadd.f32 %v1796, %v1816
        %v1821 = vadd.f32 %v1797, %v1818
        %s1822 = sadd.s32 %s244, 7
        %s1823 = smul.addr %s1822, 2
        %s1824 = scalar_lea.vmem %s207, %s1823
        %v1825 = vld [vmem:[%s1824] sm:$0x3]
        %v1827 = vsel %vm261, %v1825, 0
        %1829 = vmatpush.bf16.msra.mxu0 0
        %1830 = vmatpush.bf16.msra.mxu0 0
        %1831 = vmatpush.bf16.msra.mxu0 0
        %1832 = vmatpush.bf16.msra.mxu0 0
        %1833 = vmatpush.bf16.msra.mxu0 0
        %1834 = vmatpush.bf16.msra.mxu0 0
        %1835 = vmatpush.bf16.msra.mxu0 0
        %1836 = vmatpush.bf16.msra.mxu0 %v1827
        %1837 = vmatmul.bf16.gmra.mxu0 %v440
        %v1838 = vpop.f32.mrf.mxu0
        %v1839 = vadd.f32 0.0, %v1838
        %v1840 = vpop.f32.mrf.mxu0
        %v1841 = vadd.f32 0.0, %v1840
        %1842 = vdwg.mxu0
        %v1843 = vadd.f32 %v1820, %v1839
        %v1844 = vadd.f32 %v1821, %v1841
        %s1845 = sadd.s32 %s244, 16
        %s1846 = smul.addr %s1845, 2
        %s1847 = scalar_lea.vmem %s207, %s1846
        %v1848 = vld [vmem:[%s1847] sm:$0x3]
        %v1850 = vsel %vm261, %v1848, 0
        %1852 = vmatpush.bf16.msra.mxu0 0
        %1853 = vmatpush.bf16.msra.mxu0 0
        %1854 = vmatpush.bf16.msra.mxu0 0
        %1855 = vmatpush.bf16.msra.mxu0 0
        %1856 = vmatpush.bf16.msra.mxu0 0
        %1857 = vmatpush.bf16.msra.mxu0 0
        %1858 = vmatpush.bf16.msra.mxu0 0
        %1859 = vmatpush.bf16.msra.mxu0 %v1850
        %1860 = vmatmul.bf16.gmra.mxu0 %v471
        %v1861 = vpop.f32.mrf.mxu0
        %v1862 = vadd.f32 0.0, %v1861
        %v1863 = vpop.f32.mrf.mxu0
        %v1864 = vadd.f32 0.0, %v1863
        %1865 = vdwg.mxu0
        %v1866 = vadd.f32 %v1843, %v1862
        %v1867 = vadd.f32 %v1844, %v1864
        %1868 = vst [vmem:[#allocation1] ss:$4 sm:$0xff] %v1825
        %v1869 = vld.sshfl [vmem:[#allocation1] sm:$0xff pattern:$0x73625140]
        %1871 = vrot.lane.b32.xlu0 %v1869, 127
        %v1872 = vpop.permute.xlu0 %1871
        %v1874 = vsel %vm261, %v1872, 0
        %1876 = vmatpush.bf16.msra.mxu0 0
        %1877 = vmatpush.bf16.msra.mxu0 0
        %1878 = vmatpush.bf16.msra.mxu0 0
        %1879 = vmatpush.bf16.msra.mxu0 0
        %1880 = vmatpush.bf16.msra.mxu0 0
        %1881 = vmatpush.bf16.msra.mxu0 0
        %1882 = vmatpush.bf16.msra.mxu0 0
        %1883 = vmatpush.bf16.msra.mxu0 %v1874
        %1884 = vmatmul.bf16.gmra.mxu0 %v503
        %v1885 = vpop.f32.mrf.mxu0
        %v1886 = vadd.f32 0.0, %v1885
        %v1887 = vpop.f32.mrf.mxu0
        %v1888 = vadd.f32 0.0, %v1887
        %1889 = vdwg.mxu0
        %v1890 = vadd.f32 %v1866, %v1886
        %v1891 = vadd.f32 %v1867, %v1888
        %v1892 = vsel %vm524, %v1890, 0.0
        %1893 = vadd.xlane.f32.xlu0 %v1892
        %v1894 = vpop.xlane.xlu0 %1893
        %v1895 = vsel %vm524, %v1891, 0.0
        %1896 = vadd.xlane.f32.xlu0 %v1895
        %v1897 = vpop.xlane.xlu0 %1896
        %v1898 = vadd.f32 %v1669, %v1894
        %v1899 = vadd.f32 %v1670, %v1897
        %v1900 = vmul.f32 %v1890, %v1890
        %v1901 = vmul.f32 %v1891, %v1891
        %v1902 = vsel %vm524, %v1900, 0.0
        %1903 = vadd.xlane.f32.xlu0 %v1902
        %v1904 = vpop.xlane.xlu0 %1903
        %v1905 = vsel %vm524, %v1901, 0.0
        %1906 = vadd.xlane.f32.xlu0 %v1905
        %v1907 = vpop.xlane.xlu0 %1906
        %v1908 = vadd.f32 %v1679, %v1904
        %v1909 = vadd.f32 %v1680, %v1907
        %1912 = vrot.lane.b32.xlu0 %v1890, 48
        %v1913 = vpop.permute.xlu0 %1912
        %1914 = vrot.lane.b32.xlu0 %v1891, 48
        %v1915 = vpop.permute.xlu0 %1914
        %vm1918 = vcmask 458112
        %1919 = vst.msk [vmem:[%s544] sm:$0xff] %vm1918, %v1913
        %1920 = vst.msk [vmem:[%s544 + $0x8] sm:$0xff] %vm1918, %v1915
        %v1921 = vld [vmem:[%s1824] sm:$0x3]
        %v1922 = vld [vmem:[%s1847] sm:$0x3]
        %v1924 = vsel %vm261, %v1922, 0
        %1926 = vmatpush.bf16.msra.mxu0 0
        %1927 = vmatpush.bf16.msra.mxu0 0
        %1928 = vmatpush.bf16.msra.mxu0 0
        %1929 = vmatpush.bf16.msra.mxu0 0
        %1930 = vmatpush.bf16.msra.mxu0 0
        %1931 = vmatpush.bf16.msra.mxu0 0
        %1932 = vmatpush.bf16.msra.mxu0 0
        %1933 = vmatpush.bf16.msra.mxu0 %v1924
        %1934 = vmatmul.bf16.gmra.mxu0 %v259
        %v1935 = vpop.f32.mrf.mxu0
        %v1936 = vadd.f32 0.0, %v1935
        %v1937 = vpop.f32.mrf.mxu0
        %v1938 = vadd.f32 0.0, %v1937
        %1939 = vdwg.mxu0
        %v1941 = vsel %vm261, %v1921, 0
        %1943 = vmatpush.bf16.msra.mxu0 0
        %1944 = vmatpush.bf16.msra.mxu0 0
        %1945 = vmatpush.bf16.msra.mxu0 0
        %1946 = vmatpush.bf16.msra.mxu0 0
        %1947 = vmatpush.bf16.msra.mxu0 0
        %1948 = vmatpush.bf16.msra.mxu0 0
        %1949 = vmatpush.bf16.msra.mxu0 0
        %1950 = vmatpush.bf16.msra.mxu0 %v1941
        %1951 = vmatmul.bf16.gmra.mxu0 %v285
        %v1952 = vpop.f32.mrf.mxu0
        %v1953 = vadd.f32 %v1936, %v1952
        %v1954 = vpop.f32.mrf.mxu0
        %v1955 = vadd.f32 %v1938, %v1954
        %1956 = vdwg.mxu0
        %1957 = vst [vmem:[#allocation1] ss:$4 sm:$0xff] %v1921
        %v1958 = vld.sshfl [vmem:[#allocation1] sm:$0xff pattern:$0x73625140]
        %1960 = vrot.lane.b32.xlu0 %v1958, 127
        %v1961 = vpop.permute.xlu0 %1960
        %v1963 = vsel %vm261, %v1961, 0
        %1965 = vmatpush.bf16.msra.mxu0 0
        %1966 = vmatpush.bf16.msra.mxu0 0
        %1967 = vmatpush.bf16.msra.mxu0 0
        %1968 = vmatpush.bf16.msra.mxu0 0
        %1969 = vmatpush.bf16.msra.mxu0 0
        %1970 = vmatpush.bf16.msra.mxu0 0
        %1971 = vmatpush.bf16.msra.mxu0 0
        %1972 = vmatpush.bf16.msra.mxu0 %v1963
        %1973 = vmatmul.bf16.gmra.mxu0 %v315
        %v1974 = vpop.f32.mrf.mxu0
        %v1975 = vadd.f32 0.0, %v1974
        %v1976 = vpop.f32.mrf.mxu0
        %v1977 = vadd.f32 0.0, %v1976
        %1978 = vdwg.mxu0
        %v1979 = vadd.f32 %v1953, %v1975
        %v1980 = vadd.f32 %v1955, %v1977
        %s1981 = sadd.s32 %s244, 25
        %s1982 = smul.addr %s1981, 2
        %s1983 = scalar_lea.vmem %s207, %s1982
        %v1984 = vld [vmem:[%s1983] sm:$0x3]
        %v1986 = vsel %vm261, %v1984, 0
        %1988 = vmatpush.bf16.msra.mxu0 0
        %1989 = vmatpush.bf16.msra.mxu0 0
        %1990 = vmatpush.bf16.msra.mxu0 0
        %1991 = vmatpush.bf16.msra.mxu0 0
        %1992 = vmatpush.bf16.msra.mxu0 0
        %1993 = vmatpush.bf16.msra.mxu0 0
        %1994 = vmatpush.bf16.msra.mxu0 0
        %1995 = vmatpush.bf16.msra.mxu0 %v1986
        %1996 = vmatmul.bf16.gmra.mxu0 %v346
        %v1997 = vpop.f32.mrf.mxu0
        %v1998 = vadd.f32 0.0, %v1997
        %v1999 = vpop.f32.mrf.mxu0
        %v2000 = vadd.f32 0.0, %v1999
        %2001 = vdwg.mxu0
        %v2002 = vadd.f32 %v1979, %v1998
        %v2003 = vadd.f32 %v1980, %v2000
        %s2004 = sadd.s32 %s244, 34
        %s2005 = smul.addr %s2004, 2
        %s2006 = scalar_lea.vmem %s207, %s2005
        %v2007 = vld [vmem:[%s2006] sm:$0x3]
        %v2009 = vsel %vm261, %v2007, 0
        %2011 = vmatpush.bf16.msra.mxu0 0
        %2012 = vmatpush.bf16.msra.mxu0 0
        %2013 = vmatpush.bf16.msra.mxu0 0
        %2014 = vmatpush.bf16.msra.mxu0 0
        %2015 = vmatpush.bf16.msra.mxu0 0
        %2016 = vmatpush.bf16.msra.mxu0 0
        %2017 = vmatpush.bf16.msra.mxu0 0
        %2018 = vmatpush.bf16.msra.mxu0 %v2009
        %2019 = vmatmul.bf16.gmra.mxu0 %v377
        %v2020 = vpop.f32.mrf.mxu0
        %v2021 = vadd.f32 0.0, %v2020
        %v2022 = vpop.f32.mrf.mxu0
        %v2023 = vadd.f32 0.0, %v2022
        %2024 = vdwg.mxu0
        %v2025 = vadd.f32 %v2002, %v2021
        %v2026 = vadd.f32 %v2003, %v2023
        %2027 = vst [vmem:[#allocation1] ss:$4 sm:$0xff] %v1984
        %v2028 = vld.sshfl [vmem:[#allocation1] sm:$0xff pattern:$0x73625140]
        %2030 = vrot.lane.b32.xlu0 %v2028, 127
        %v2031 = vpop.permute.xlu0 %2030
        %v2033 = vsel %vm261, %v2031, 0
        %2035 = vmatpush.bf16.msra.mxu0 0
        %2036 = vmatpush.bf16.msra.mxu0 0
        %2037 = vmatpush.bf16.msra.mxu0 0
        %2038 = vmatpush.bf16.msra.mxu0 0
        %2039 = vmatpush.bf16.msra.mxu0 0
        %2040 = vmatpush.bf16.msra.mxu0 0
        %2041 = vmatpush.bf16.msra.mxu0 0
        %2042 = vmatpush.bf16.msra.mxu0 %v2033
        %2043 = vmatmul.bf16.gmra.mxu0 %v409
        %v2044 = vpop.f32.mrf.mxu0
        %v2045 = vadd.f32 0.0, %v2044
        %v2046 = vpop.f32.mrf.mxu0
        %v2047 = vadd.f32 0.0, %v2046
        %2048 = vdwg.mxu0
        %v2049 = vadd.f32 %v2025, %v2045
        %v2050 = vadd.f32 %v2026, %v2047
        %s2051 = sadd.s32 %s244, 8
        %s2052 = smul.addr %s2051, 2
        %s2053 = scalar_lea.vmem %s207, %s2052
        %v2054 = vld [vmem:[%s2053] sm:$0x3]
        %v2056 = vsel %vm261, %v2054, 0
        %2058 = vmatpush.bf16.msra.mxu0 0
        %2059 = vmatpush.bf16.msra.mxu0 0
        %2060 = vmatpush.bf16.msra.mxu0 0
        %2061 = vmatpush.bf16.msra.mxu0 0
        %2062 = vmatpush.bf16.msra.mxu0 0
        %2063 = vmatpush.bf16.msra.mxu0 0
        %2064 = vmatpush.bf16.msra.mxu0 0
        %2065 = vmatpush.bf16.msra.mxu0 %v2056
        %2066 = vmatmul.bf16.gmra.mxu0 %v440
        %v2067 = vpop.f32.mrf.mxu0
        %v2068 = vadd.f32 0.0, %v2067
        %v2069 = vpop.f32.mrf.mxu0
        %v2070 = vadd.f32 0.0, %v2069
        %2071 = vdwg.mxu0
        %v2072 = vadd.f32 %v2049, %v2068
        %v2073 = vadd.f32 %v2050, %v2070
        %s2074 = sadd.s32 %s244, 17
        %s2075 = smul.addr %s2074, 2
        %s2076 = scalar_lea.vmem %s207, %s2075
        %v2077 = vld [vmem:[%s2076] sm:$0x3]
        %v2079 = vsel %vm261, %v2077, 0
        %2081 = vmatpush.bf16.msra.mxu0 0
        %2082 = vmatpush.bf16.msra.mxu0 0
        %2083 = vmatpush.bf16.msra.mxu0 0
        %2084 = vmatpush.bf16.msra.mxu0 0
        %2085 = vmatpush.bf16.msra.mxu0 0
        %2086 = vmatpush.bf16.msra.mxu0 0
        %2087 = vmatpush.bf16.msra.mxu0 0
        %2088 = vmatpush.bf16.msra.mxu0 %v2079
        %2089 = vmatmul.bf16.gmra.mxu0 %v471
        %v2090 = vpop.f32.mrf.mxu0
        %v2091 = vadd.f32 0.0, %v2090
        %v2092 = vpop.f32.mrf.mxu0
        %v2093 = vadd.f32 0.0, %v2092
        %2094 = vdwg.mxu0
        %v2095 = vadd.f32 %v2072, %v2091
        %v2096 = vadd.f32 %v2073, %v2093
        %2097 = vst [vmem:[#allocation1] ss:$4 sm:$0xff] %v2054
        %v2098 = vld.sshfl [vmem:[#allocation1] sm:$0xff pattern:$0x73625140]
        %2100 = vrot.lane.b32.xlu0 %v2098, 127
        %v2101 = vpop.permute.xlu0 %2100
        %v2103 = vsel %vm261, %v2101, 0
        %2105 = vmatpush.bf16.msra.mxu0 0
        %2106 = vmatpush.bf16.msra.mxu0 0
        %2107 = vmatpush.bf16.msra.mxu0 0
        %2108 = vmatpush.bf16.msra.mxu0 0
        %2109 = vmatpush.bf16.msra.mxu0 0
        %2110 = vmatpush.bf16.msra.mxu0 0
        %2111 = vmatpush.bf16.msra.mxu0 0
        %2112 = vmatpush.bf16.msra.mxu0 %v2103
        %2113 = vmatmul.bf16.gmra.mxu0 %v503
        %v2114 = vpop.f32.mrf.mxu0
        %v2115 = vadd.f32 0.0, %v2114
        %v2116 = vpop.f32.mrf.mxu0
        %v2117 = vadd.f32 0.0, %v2116
        %2118 = vdwg.mxu0
        %v2119 = vadd.f32 %v2095, %v2115
        %v2120 = vadd.f32 %v2096, %v2117
        %v2121 = vsel %vm524, %v2119, 0.0
        %2122 = vadd.xlane.f32.xlu0 %v2121
        %v2123 = vpop.xlane.xlu0 %2122
        %v2124 = vsel %vm524, %v2120, 0.0
        %2125 = vadd.xlane.f32.xlu0 %v2124
        %v2126 = vpop.xlane.xlu0 %2125
        %v2127 = vadd.f32 %v1898, %v2123
        %v2128 = vadd.f32 %v1899, %v2126
        %v2129 = vmul.f32 %v2119, %v2119
        %v2130 = vmul.f32 %v2120, %v2120
        %v2131 = vsel %vm524, %v2129, 0.0
        %2132 = vadd.xlane.f32.xlu0 %v2131
        %v2133 = vpop.xlane.xlu0 %2132
        %v2134 = vsel %vm524, %v2130, 0.0
        %2135 = vadd.xlane.f32.xlu0 %v2134
        %v2136 = vpop.xlane.xlu0 %2135
        %v2137 = vadd.f32 %v1908, %v2133
        %v2138 = vadd.f32 %v1909, %v2136
        %2141 = vrot.lane.b32.xlu0 %v2119, 56
        %v2142 = vpop.permute.xlu0 %2141
        %2143 = vrot.lane.b32.xlu0 %v2120, 56
        %v2144 = vpop.permute.xlu0 %2143
        %vm2147 = vcmask 523712
        %2148 = vst.msk [vmem:[%s544] sm:$0xff] %vm2147, %v2142
        %2149 = vst.msk [vmem:[%s544 + $0x8] sm:$0xff] %vm2147, %v2144
        %v2150 = vld [vmem:[#allocation3] sm:$0xff]
        %v2151 = vld [vmem:[#allocation3 + $0x8] sm:$0xff]
        %v2152 = vadd.f32 %v2150, %v2127
        %v2153 = vadd.f32 %v2151, %v2128
        %vm2154 = vcmask 7168
        %2155 = vst.msk [vmem:[#allocation3] sm:$0xff] %vm2154, %v2152
        %2156 = vst.msk [vmem:[#allocation3 + $0x8] sm:$0xff] %vm2154, %v2153
        %v2157 = vld [vmem:[#allocation4] sm:$0xff]
        %v2158 = vld [vmem:[#allocation4 + $0x8] sm:$0xff]
        %v2159 = vadd.f32 %v2157, %v2137
        %v2160 = vadd.f32 %v2158, %v2138
        %2161 = vst.msk [vmem:[#allocation4] sm:$0xff] %vm2154, %v2159
        %2162 = vst.msk [vmem:[#allocation4 + $0x8] sm:$0xff] %vm2154, %v2160
        // Predicated region
        $region41: #{tpu_custom_call.1} parent=35 // pred_check
          %p2163 = pneg %p209
        $region42: #{tpu_custom_call.1} parent=35 // pred_check_branch
          %2165 = sbr.rel (%p2163) target = $region44
        $region43: #{tpu_custom_call.1} parent=35 // pred_region
          %v2166 = vld [vmem:[#allocation3] sm:$0xff]
          %v2167 = vld [vmem:[#allocation3 + $0x8] sm:$0xff]
          %v2168 = vmul.f32 %v2166, 0.015625
          %v2169 = vmul.f32 %v2167, 0.015625
          %v2170 = vld [vmem:[#allocation4] sm:$0xff]
          %v2171 = vld [vmem:[#allocation4 + $0x8] sm:$0xff]
          %v2172 = vmul.f32 %v2170, 0.015625
          %v2173 = vmul.f32 %v2171, 0.015625
          %v2174 = vmul.f32 %v2168, %v2168
          %v2175 = vmul.f32 %v2169, %v2169
          %v2176 = vsub.f32 %v2172, %v2174
          %v2177 = vsub.f32 %v2173, %v2175
          %v2178 = vld [vmem:[%s2] sm:$0xff]
          %v2179 = vld [vmem:[%s2 + $0x8] sm:$0xff]
          %v2180 = vadd.f32 %v2176, 1e-05
          %v2181 = vadd.f32 %v2177, 1e-05
          %v2182 = vrsqrt.pop %v2180
          %v2183 = vmul.f32 %v2182, %v2180
          %v2184 = vmul.f32 %v2183, %v2182
          %v2185 = vmul.f32 0.5, %v2184
          %v2186 = vsub.f32 1.5, %v2185
          %v2187 = vmul.f32 %v2182, %v2186
          %vm2188 = vweird.f32 %v2180
          %vm2189 = vweird.f32 %v2182
          %vm2190 = vmor %vm2188, %vm2189
          %v2191 = vsel %vm2190, %v2182, %v2187
          %v2192 = vrsqrt.pop %v2181
          %v2193 = vmul.f32 %v2192, %v2181
          %v2194 = vmul.f32 %v2193, %v2192
          %v2195 = vmul.f32 0.5, %v2194
          %v2196 = vsub.f32 1.5, %v2195
          %v2197 = vmul.f32 %v2192, %v2196
          %vm2198 = vweird.f32 %v2181
          %vm2199 = vweird.f32 %v2192
          %vm2200 = vmor %vm2198, %vm2199
          %v2201 = vsel %vm2200, %v2192, %v2197
          %v2202 = vmul.f32 %v2178, %v2191
          %v2203 = vmul.f32 %v2179, %v2201
          %v2204 = vld [vmem:[%s3] sm:$0xff]
          %v2205 = vld [vmem:[%s3 + $0x8] sm:$0xff]
          %v2206 = vmul.f32 %v2168, %v2202
          %v2207 = vmul.f32 %v2169, %v2203
          %v2208 = vsub.f32 %v2204, %v2206
          %v2209 = vsub.f32 %v2205, %v2207
          %v2210 = vld [vmem:[#allocation2] sm:$0xff]
          %v2211 = vld [vmem:[#allocation2 + $0x8] sm:$0xff]
          %2213 = vset.pattern.permute.xlu0 0
          %2214 = vperm.xlu0 %2213, %v2202
          %v2215 = vpop.permute.xlu0 %2214
          %2218 = vset.pattern.permute.xlu0 0
          %2219 = vperm.xlu0 %2218, %v2203
          %v2220 = vpop.permute.xlu0 %2219
          %v2222 = vmul.f32 %v2210, %v2215
          %v2223 = vmul.f32 %v2211, %v2220
          %2225 = vset.pattern.permute.xlu0 0
          %2226 = vperm.xlu0 %2225, %v2208
          %v2227 = vpop.permute.xlu0 %2226
          %2230 = vset.pattern.permute.xlu0 0
          %2231 = vperm.xlu0 %2230, %v2209
          %v2232 = vpop.permute.xlu0 %2231
          %v2234 = vadd.f32 %v2222, %v2227
          %v2235 = vadd.f32 %v2223, %v2232
          %v2236 = vmul.f32 %v2234, 0.2
          %v2237 = vmul.f32 %v2235, 0.2
          %v2238 = vmax.f32 %v2234, %v2236
          %v2239 = vmax.f32 %v2235, %v2237
          %v2240 = vadd.f32 %v2238, %v2239
          %vm2241 = vcmask 523264
          %2242 = vst.msk [vmem:[%s202] sm:$0xff] %vm2241, %v2240
        $region44: #{tpu_custom_call.1} parent=35 // pred_fallthru
          _
        %s2243 = sand.u32 %s127, 1
        %s2244 = scalar_lea.sflag [#allocation6], %s2243
        %s2245 = sand.u32 %s127, 1
        %s2246 = smul.addr %s2245, 8
        %s2247 = scalar_lea.vmem [#allocation5], %s2246
        // Predicated region
        $region45: #{tpu_custom_call.1} parent=35 // pred_check
          %p2248 = pneg %p137
        $region46: #{tpu_custom_call.1} parent=35 // pred_check_branch
          %2250 = sbr.rel (%p2248) target = $region48
        $region47: #{tpu_custom_call.1} parent=35 // pred_region
          %2252 = vsyncadd %s2244, 0
          %s2253 = smul.addr %s22, 8
          %s2254 = scalar_lea.hbm %s4, %s2253
          %s2256 = sshll.u32 %s2247, 4
          %s2257 = int_to_ptr.vmem [resolvable:$true] %s2256
          %s2258 = sshll.u32 %s2254, 4
          %s2259 = int_to_ptr.hbm [resolvable:$true] %s2258
          %2261 = dma.vmem_to_hbm [thread:$0]  %s2257, 128, %s2259, %s2244
        $region48: #{tpu_custom_call.1} parent=35 // pred_fallthru
          _
      $region36: #{tpu_custom_call.1} parent=5 // pred_fallthru
        _
      %p2262 = scmp.le.s32.totalorder 2, %s13
      // Predicated region
      $region49: #{tpu_custom_call.1} parent=5 // pred_check
        %p2263 = pneg %p2262
      $region50: #{tpu_custom_call.1} parent=5 // pred_check_branch
        %2265 = sbr.rel (%p2263) target = $region52
      $region51: #{tpu_custom_call.1} parent=5 // pred_region
        %s2266 = ssub.s32 %s13, 2
        // Predicated region
        $region53: #{tpu_custom_call.1} parent=51 // pred_check
          %p2267 = pneg %p143
        $region54: #{tpu_custom_call.1} parent=51 // pred_check_branch
          %2269 = sbr.rel (%p2267) target = $region56
        $region55: #{tpu_custom_call.1} parent=51 // pred_region
          %s2270 = sand.u32 %s128, 1
          %s2271 = scalar_lea.sflag [#allocation6], %s2270
          %s2272 = sand.u32 %s128, 1
          %s2273 = smul.addr %s2272, 8
          %s2274 = scalar_lea.vmem [#allocation5], %s2273
          %2276 = dma.done %s2271, 128
        $region56: #{tpu_custom_call.1} parent=51 // pred_fallthru
          _
      $region52: #{tpu_custom_call.1} parent=5 // pred_fallthru
        _
    $region6: #{tpu_custom_call.1} parent=1 // loop_footer
      %s17 = sadd.s32 1, %s13
    $region7: #{tpu_custom_call.1} parent=1 // loop_footer_branch
      %12 = sbr.rel target = $region3
    $region8: #{tpu_custom_call.1} parent=1 // loop_exit
      _
    %2277 = vsyncpa [#allocation6], 1
    %s2278 = scalar_lea.sflag [#allocation6], 1
    %2279 = vsyncpa %s2278, 1

</llo_original>
